<compile_context>
chip_gen: v6e
topology: v6e:2x2x1
jax: 0.10.0
libtpu: 0.0.40
codegen_flags: <defaults>
</compile_context>

<pallas_src>
import jax
import jax.numpy as jnp
from jax import lax
from jax.experimental import pallas as pl
from jax.experimental.pallas import tpu as pltpu


def _round_up(x, m):
    return (x + m - 1) // m * m


def _pick_tb(B, tb_max=256):
    """Batch tile: small B -> one 8-multiple block; large B -> >=2 blocks
    (v7x 2-TC sharding of the 'parallel' axis), capped at 256 (v6e/v7x MXU)."""
    Bp8 = _round_up(B, 8)
    if Bp8 <= 16:
        return Bp8
    return min(tb_max, _round_up((Bp8 + 1) // 2, 8))


# ----------------------------------------------------------------------------
# Kernel 1: latent2init + fused input projection + LSTM recurrence.
# grid = (batch_blocks [parallel], time_chunks [arbitrary]).
#   - h/c state carried in VMEM scratch across the (inner, "arbitrary") time
#     axis; re-initialized from latent2init when program_id(1) == 0.
#     Do NOT reorder the grid or mark time "parallel".
#   - chunk entry: one big (tt*tb, E) @ (E, 4H) bf16 MXU matmul -> gx scratch.
#   - per step: only h @ W_hh remains inside the recurrence.
# ----------------------------------------------------------------------------
def _lstm_kernel(yz_ref, wi_ref, bi_ref, x_ref, wih_ref, bl_ref, whh_ref,
                 out_ref, h_s, c_s, gx_s):
    H = h_s.shape[-1]
    TT, TB, E = x_ref.shape

    @pl.when(pl.program_id(1) == 0)
    def _():
        # latent2init: (tb, ysize+zsize) @ (ysize+zsize, 2H) + b -> (h0, c0)
        init = (jnp.dot(yz_ref[...].astype(jnp.bfloat16), wi_ref[...],
                        preferred_element_type=jnp.float32) + bi_ref[...])
        h_s[...] = init[:, :H]
        c_s[...] = init[:, H:]

    # Fused input projection for the whole chunk: M = tt*tb rows for the MXU,
    # no (T, B, 4H) HBM round trip. Accumulate / bias-add in f32.
    x2 = x_ref[...].reshape(TT * TB, E).astype(jnp.bfloat16)
    gx = (jnp.dot(x2, wih_ref[...], preferred_element_type=jnp.float32)
          + bl_ref[...])
    gx_s[...] = gx.reshape(TT, TB, 4 * H)

    # Loop-invariant weight read hoisted out of the time loop (already bf16).
    whh = whh_ref[...]

    def step(s, carry):
        gates = gx_s[s] + jnp.dot(h_s[...].astype(jnp.bfloat16), whh,
                                  preferred_element_type=jnp.float32)
        # PyTorch LSTM gate order: i, f, g, o (lane-aligned slabs when H%128==0)
        i_g = jax.nn.sigmoid(gates[:, 0 * H:1 * H])
        f_g = jax.nn.sigmoid(gates[:, 1 * H:2 * H])
        g_g = jnp.tanh(gates[:, 2 * H:3 * H])
        o_g = jax.nn.sigmoid(gates[:, 3 * H:4 * H])
        c_new = f_g * c_s[...] + i_g * g_g
        h_new = o_g * jnp.tanh(c_new)
        c_s[...] = c_new
        h_s[...] = h_new
        out_ref[s] = h_new
        return carry

    lax.fori_loop(0, TT, step, 0, unroll=True)


def lstm_forward(yz, w_init, b_init, x_tm, w_ih, b_lstm, w_hh, *,
                 tb=None, tt=16):
    """x_tm: (T, B, E) time-major embedded inputs. Returns h: (T, B, H) f32."""
    T, B, E = x_tm.shape
    H = w_hh.shape[0]
    H4 = 4 * H
    YZ = yz.shape[1]

    if tb is None:
        tb = _pick_tb(B)
    tb = min(tb, _round_up(B, 8))
    Bp = _round_up(B, tb)
    tt = min(tt, T)
    Tp = _round_up(T, tt)
    if (Tp, Bp) != (T, B):
        x_tm = jnp.pad(x_tm, ((0, Tp - T), (0, Bp - B), (0, 0)))
    if Bp != B:
        yz = jnp.pad(yz, ((0, Bp - B), (0, 0)))

    # bf16 weights for the MXU; biases, state and accumulators stay f32.
    w_init_b = w_init.astype(jnp.bfloat16)
    w_ih_b = w_ih.astype(jnp.bfloat16)
    w_hh_b = w_hh.astype(jnp.bfloat16)

    out = pl.pallas_call(
        _lstm_kernel,
        out_shape=jax.ShapeDtypeStruct((Tp, Bp, H), jnp.float32),
        grid_spec=pltpu.PrefetchScalarGridSpec(
            num_scalar_prefetch=0,
            grid=(Bp // tb, Tp // tt),
            in_specs=[
                pl.BlockSpec((tb, YZ), lambda b, c: (b, 0)),
                pl.BlockSpec(w_init.shape, lambda b, c: (0, 0)),
                pl.BlockSpec(b_init.shape, lambda b, c: (0, 0)),
                pl.BlockSpec((tt, tb, E), lambda b, c: (c, b, 0)),
                pl.BlockSpec(w_ih.shape, lambda b, c: (0, 0)),
                pl.BlockSpec(b_lstm.shape, lambda b, c: (0, 0)),
                pl.BlockSpec(w_hh.shape, lambda b, c: (0, 0)),
            ],
            out_specs=pl.BlockSpec((tt, tb, H), lambda b, c: (c, b, 0)),
            scratch_shapes=[pltpu.VMEM((tb, H), jnp.float32),
                            pltpu.VMEM((tb, H), jnp.float32),
                            pltpu.VMEM((tt, tb, H4), jnp.float32)],
        ),
        compiler_params=pltpu.CompilerParams(
            dimension_semantics=("parallel", "arbitrary"),
            vmem_limit_bytes=48 * 1024 * 1024),
    )(yz, w_init_b, b_init, x_tm, w_ih_b, b_lstm, w_hh_b)
    return out[:T, :B, :]


# ----------------------------------------------------------------------------
# Kernel 2: hid2vocab + per-row cross-entropy, streamed over vocab blocks with
# an online log-sum-exp (never materializes the full (rows, V) logits tensor).
# grid = (row_blocks [parallel], vocab_blocks [arbitrary]).
# ----------------------------------------------------------------------------
def _ce_kernel(h_ref, w_ref, b_ref, lab_ref, ce_ref, m_s, l_s, p_s):
    j = pl.program_id(1)
    nv = pl.num_programs(1)
    TV = w_ref.shape[1]

    @pl.when(j == 0)
    def _():
        m_s[...] = jnp.full_like(m_s, -jnp.inf)
        l_s[...] = jnp.zeros_like(l_s)
        p_s[...] = jnp.zeros_like(p_s)

    # (tm, H) x (H, tv) bf16 matmul, f32 accumulate; bias stays f32 so the
    # -1e30 padded-vocab bias never becomes -inf/NaN in the LSE.
    logits = (jnp.dot(h_ref[...].astype(jnp.bfloat16), w_ref[...],
                      preferred_element_type=jnp.float32) + b_ref[...])
    row_max = jnp.max(logits, axis=-1, keepdims=True)
    m_new = jnp.maximum(m_s[...], row_max)
    l_s[...] = (l_s[...] * jnp.exp(m_s[...] - m_new)
                + jnp.sum(jnp.exp(logits - m_new), axis=-1, keepdims=True))
    m_s[...] = m_new
    col = lax.broadcasted_iota(jnp.int32, logits.shape, 1) + j * TV
    hit = col == lab_ref[...]
    p_s[...] += jnp.sum(jnp.where(hit, logits, 0.0), axis=-1, keepdims=True)

    @pl.when(j == nv - 1)
    def _():
        ce_ref[...] = m_s[...] + jnp.log(l_s[...]) - p_s[...]


def ce_per_row(h_rows, w_vocab, b_vocab, labels, *, tm=512, tv=512):
    """h_rows: (N, H), labels: (N,) int32. Returns per-row CE (N,) f32."""
    N, H = h_rows.shape
    V = w_vocab.shape[1]

    tm = min(tm, _round_up(N, 8))
    Np = _round_up(N, tm)
    tv = min(tv, _round_up(V, 128))
    Vp = _round_up(V, tv)
    if Np != N:
        h_rows = jnp.pad(h_rows, ((0, Np - N), (0, 0)))
        labels = jnp.pad(labels, ((0, Np - N),))
    if Vp != V:
        w_vocab = jnp.pad(w_vocab, ((0, 0), (0, Vp - V)))
        # Padded vocab columns get a huge negative (f32) bias so they never
        # contribute to the log-sum-exp.
        b_vocab = jnp.pad(b_vocab, ((0, 0), (0, Vp - V)),
                          constant_values=-1e30)
    labels2 = labels.reshape(Np, 1).astype(jnp.int32)
    # bf16 weight halves the re-streamed HBM bytes; bias stays f32.
    w_b = w_vocab.astype(jnp.bfloat16)

    ce = pl.pallas_call(
        _ce_kernel,
        out_shape=jax.ShapeDtypeStruct((Np, 1), jnp.float32),
        grid_spec=pltpu.PrefetchScalarGridSpec(
            num_scalar_prefetch=0,
            grid=(Np // tm, Vp // tv),
            in_specs=[
                pl.BlockSpec((tm, H), lambda i, j: (i, 0)),
                pl.BlockSpec((H, tv), lambda i, j: (0, j)),
                pl.BlockSpec((1, tv), lambda i, j: (0, j)),
                pl.BlockSpec((tm, 1), lambda i, j: (i, 0)),
            ],
            out_specs=pl.BlockSpec((tm, 1), lambda i, j: (i, 0)),
            scratch_shapes=[pltpu.VMEM((tm, 1), jnp.float32)] * 3,
        ),
        compiler_params=pltpu.CompilerParams(
            dimension_semantics=("parallel", "arbitrary"),
            vmem_limit_bytes=48 * 1024 * 1024),
    )(h_rows, w_b, b_vocab, labels2)
    return ce[:N, 0]


# ----------------------------------------------------------------------------
# Parameters + forward (= teacher_force) glue.
# ----------------------------------------------------------------------------
def init_params(key, vocab_size, embed_dim, ysize, zsize, hidden_size):
    ks = jax.random.split(key, 8)
    s = 0.1
    return dict(
        embed=jax.random.normal(ks[0], (vocab_size, embed_dim), jnp.float32) * s,
        w_init=jax.random.normal(ks[1], (ysize + zsize, 2 * hidden_size), jnp.float32) * s,
        b_init=jax.random.normal(ks[2], (1, 2 * hidden_size), jnp.float32) * s,
        w_ih=jax.random.normal(ks[3], (embed_dim, 4 * hidden_size), jnp.float32) * s,
        w_hh=jax.random.normal(ks[4], (hidden_size, 4 * hidden_size), jnp.float32) * s,
        b_lstm=jax.random.normal(ks[5], (1, 4 * hidden_size), jnp.float32) * s,
        w_vocab=jax.random.normal(ks[6], (hidden_size, vocab_size), jnp.float32) * s,
        b_vocab=jax.random.normal(ks[7], (1, vocab_size), jnp.float32) * s,
    )


def yz_lstm_forward(params, yvecs, zvecs, tgts, tgts_mask):
    B, T = tgts_mask.shape
    zsize = zvecs.shape[-1]

    # Embedding lookup (gather glue) -- dropout is identity in eval mode.
    tgts_embed = params['embed'][tgts]                        # (B, T, E)
    # Single small transpose to time-major; everything downstream of the LSTM
    # stays time-major so the (T,B,H) output is never transposed back.
    x_tm = jnp.transpose(tgts_embed, (1, 0, 2))               # (T, B, E)

    # LSTM recurrence with latent-initialized state; input projection is fused
    # into the recurrence kernel (no (T,B,4H) HBM round trip).
    # TODO(synk): get_rnn_vecs uses pack_padded_sequence; padded timesteps
    # differ there but are masked out of the loss, so the loss is identical.
    yz = jnp.concatenate([yvecs, zvecs], axis=-1)
    h_tm = lstm_forward(yz, params['w_init'], params['b_init'], x_tm,
                        params['w_ih'], params['b_lstm'], params['w_hh'])

    # hid2vocab + masked cross-entropy (vocab-streamed online LSE).
    h_rows = h_tm[:T - 1].reshape((T - 1) * B, -1)            # (rows, H), t-major
    labels_tm = jnp.transpose(tgts[:, 1:]).reshape(-1).astype(jnp.int32)
    ce_rows = ce_per_row(h_rows, params['w_vocab'], params['b_vocab'],
                         labels_tm)                           # (rows,)
    ce_tm = ce_rows.reshape(T - 1, B)
    mask_tm = jnp.transpose(tgts_mask[:, 1:]).astype(jnp.float32)
    # Clamp guards all-masked (length-1) rows; reference would divide by zero.
    denom = jnp.maximum(jnp.sum(mask_tm, axis=0), 1.0)
    per_ex = jnp.sum(ce_tm * mask_tm, axis=0) / denom
    logloss = jnp.mean(per_ex)

    # pvecs = cat([tgts_embed, zvecs expanded over seq], -1)
    zexp = jnp.broadcast_to(zvecs[:, None, :], (B, T, zsize))
    pvecs = jnp.concatenate([tgts_embed, zexp], axis=-1)
    return logloss, pvecs


if __name__ == "__main__":
    # Small shapes, lane-friendly H/V; T/B chosen to exercise padding.
    B, T = 6, 13
    VOCAB, E, H = 512, 64, 128
    YSIZE, ZSIZE = 32, 32

    key = jax.random.PRNGKey(0)
    kp, ky, kz, kt = jax.random.split(key, 4)
    params = init_params(kp, VOCAB, E, YSIZE, ZSIZE, H)

    yvecs = jax.random.normal(ky, (B, YSIZE), jnp.float32)
    zvecs = jax.random.normal(kz, (B, ZSIZE), jnp.float32)
    tgts = jax.random.randint(kt, (B, T), 1, VOCAB, dtype=jnp.int32)
    # Valid lengths (at least 2 valid tokens per row).
    lens = jnp.array([13, 10, 8, 6, 4, 2], dtype=jnp.int32)
    tgts_mask = (jnp.arange(T)[None, :] < lens[:, None]).astype(jnp.float32)

    logloss, pvecs = jax.jit(yz_lstm_forward)(params, yvecs, zvecs, tgts, tgts_mask)
    jax.block_until_ready((logloss, pvecs))
    assert pvecs.shape == (B, T, E + ZSIZE)
    assert bool(jnp.isfinite(logloss))
    print("KERNEL_OK")
</pallas_src>

<mosaic_0001>
module attributes {stable_mosaic.version = 11 : i64} {
  func.func @_ce_kernel(%arg0: i32, %arg1: i32, %arg2: memref<72x128xf32, #tpu.memory_space<vmem>>, %arg3: memref<128x512xbf16, #tpu.memory_space<vmem>>, %arg4: memref<1x512xf32, #tpu.memory_space<vmem>>, %arg5: memref<72x1xi32, #tpu.memory_space<vmem>>, %arg6: memref<72x1xf32, #tpu.memory_space<vmem>>, %arg7: memref<72x1xf32, #tpu.memory_space<vmem>>, %arg8: memref<72x1xf32, #tpu.memory_space<vmem>>, %arg9: memref<72x1xf32, #tpu.memory_space<vmem>>) attributes {dimension_semantics = [#tpu.dimension_semantics<parallel>, #tpu.dimension_semantics<arbitrary>], iteration_bounds = array<i64: 1, 1>, scalar_prefetch = 0 : i64, scratch_operands = 3 : i64, tpu.core_type = #tpu.core_type<tc>, window_params = [{transform_indices = @transform_0, window_bounds = array<i64: 72, 128>}, {transform_indices = @transform_1, window_bounds = array<i64: 128, 512>}, {transform_indices = @transform_2, window_bounds = array<i64: 1, 512>}, {transform_indices = @transform_3, window_bounds = array<i64: 72, 1>}, {transform_indices = @transform_4, window_bounds = array<i64: 72, 1>}]} {
    %c0_i32 = arith.constant 0 : i32
    %0 = arith.cmpi eq, %arg1, %c0_i32 : i32
    %1 = arith.extui %0 : i1 to i32
    %c0_i32_0 = arith.constant 0 : i32
    %2 = arith.cmpi ne, %1, %c0_i32_0 : i32
    scf.if %2 {
      %cst_28 = arith.constant 0xFF800000 : f32
      %44 = vector.broadcast %cst_28 : f32 to vector<72x1xf32>
      %c0_29 = arith.constant 0 : index
      %c0_30 = arith.constant 0 : index
      %45 = vector.load %arg7[%c0_29, %c0_30] : memref<72x1xf32, #tpu.memory_space<vmem>>, vector<72x1xf32>
      tpu.vector_store %arg7[%c0_29, %c0_30], %44 {strides = array<i32>} : memref<72x1xf32, #tpu.memory_space<vmem>>, vector<72x1xf32>,
      %cst_31 = arith.constant 0.000000e+00 : f32
      %46 = vector.broadcast %cst_31 : f32 to vector<72x1xf32>
      %c0_32 = arith.constant 0 : index
      %c0_33 = arith.constant 0 : index
      %47 = vector.load %arg8[%c0_32, %c0_33] : memref<72x1xf32, #tpu.memory_space<vmem>>, vector<72x1xf32>
      tpu.vector_store %arg8[%c0_32, %c0_33], %46 {strides = array<i32>} : memref<72x1xf32, #tpu.memory_space<vmem>>, vector<72x1xf32>,
      %cst_34 = arith.constant 0.000000e+00 : f32
      %48 = vector.broadcast %cst_34 : f32 to vector<72x1xf32>
      %c0_35 = arith.constant 0 : index
      %c0_36 = arith.constant 0 : index
      %49 = vector.load %arg9[%c0_35, %c0_36] : memref<72x1xf32, #tpu.memory_space<vmem>>, vector<72x1xf32>
      tpu.vector_store %arg9[%c0_35, %c0_36], %48 {strides = array<i32>} : memref<72x1xf32, #tpu.memory_space<vmem>>, vector<72x1xf32>,
    } else {
    }
    %c0 = arith.constant 0 : index
    %c0_1 = arith.constant 0 : index
    %3 = vector.load %arg2[%c0, %c0_1] : memref<72x128xf32, #tpu.memory_space<vmem>>, vector<72x128xf32>
    %4 = arith.truncf %3 : vector<72x128xf32> to vector<72x128xbf16>
    %c0_2 = arith.constant 0 : index
    %c0_3 = arith.constant 0 : index
    %5 = vector.load %arg3[%c0_2, %c0_3] : memref<128x512xbf16, #tpu.memory_space<vmem>>, vector<128x512xbf16>
    %cst = arith.constant dense<0.000000e+00> : vector<72x512xf32>
    %6 = tpu.matmul %4, %5, %cst {dimension_numbers = #tpu.dot_dimension_numbers<[1], [0], [0], [1], [0, 0, 1, 1], [], []>} : vector<72x128xbf16>, vector<128x512xbf16>, vector<72x512xf32> -> vector<72x512xf32>
    %c0_4 = arith.constant 0 : index
    %c0_5 = arith.constant 0 : index
    %7 = vector.load %arg4[%c0_4, %c0_5] : memref<1x512xf32, #tpu.memory_space<vmem>>, vector<1x512xf32>
    %8 = vector.broadcast %7 : vector<1x512xf32> to vector<72x512xf32>
    %9 = arith.addf %6, %8 : vector<72x512xf32>
    %cst_6 = arith.constant dense<0xFF800000> : vector<72xf32>
    %10 = vector.multi_reduction <maximumf>, %9, %cst_6 [1] : vector<72x512xf32> to vector<72xf32>
    %11 = vector.shape_cast %10 : vector<72xf32> to vector<72x1xf32>
    %c0_7 = arith.constant 0 : index
    %c0_8 = arith.constant 0 : index
    %12 = vector.load %arg7[%c0_7, %c0_8] : memref<72x1xf32, #tpu.memory_space<vmem>>, vector<72x1xf32>
    %13 = arith.maximumf %12, %11 : vector<72x1xf32>
    %c0_9 = arith.constant 0 : index
    %c0_10 = arith.constant 0 : index
    %14 = vector.load %arg8[%c0_9, %c0_10] : memref<72x1xf32, #tpu.memory_space<vmem>>, vector<72x1xf32>
    %c0_11 = arith.constant 0 : index
    %c0_12 = arith.constant 0 : index
    %15 = vector.load %arg7[%c0_11, %c0_12] : memref<72x1xf32, #tpu.memory_space<vmem>>, vector<72x1xf32>
    %16 = arith.subf %15, %13 : vector<72x1xf32>
    %17 = math.exp %16 : vector<72x1xf32>
    %18 = arith.mulf %14, %17 : vector<72x1xf32>
    %19 = vector.broadcast %13 : vector<72x1xf32> to vector<72x512xf32>
    %20 = arith.subf %9, %19 : vector<72x512xf32>
    %21 = math.exp %20 : vector<72x512xf32>
    %cst_13 = arith.constant dense<0.000000e+00> : vector<72xf32>
    %22 = vector.multi_reduction <add>, %21, %cst_13 [1] : vector<72x512xf32> to vector<72xf32>
    %23 = vector.shape_cast %22 : vector<72xf32> to vector<72x1xf32>
    %24 = arith.addf %18, %23 : vector<72x1xf32>
    %c0_14 = arith.constant 0 : index
    %c0_15 = arith.constant 0 : index
    %25 = vector.load %arg8[%c0_14, %c0_15] : memref<72x1xf32, #tpu.memory_space<vmem>>, vector<72x1xf32>
    tpu.vector_store %arg8[%c0_14, %c0_15], %24 {strides = array<i32>} : memref<72x1xf32, #tpu.memory_space<vmem>>, vector<72x1xf32>,
    %c0_16 = arith.constant 0 : index
    %c0_17 = arith.constant 0 : index
    %26 = vector.load %arg7[%c0_16, %c0_17] : memref<72x1xf32, #tpu.memory_space<vmem>>, vector<72x1xf32>
    tpu.vector_store %arg7[%c0_16, %c0_17], %13 {strides = array<i32>} : memref<72x1xf32, #tpu.memory_space<vmem>>, vector<72x1xf32>,
    %27 = tpu.iota {dimensions = array<i32: 1>} : vector<72x512xi32>
    %c512_i32 = arith.constant 512 : i32
    %28 = arith.muli %arg1, %c512_i32 : i32
    %29 = vector.broadcast %28 : i32 to vector<72x512xi32>
    %30 = arith.addi %27, %29 : vector<72x512xi32>
    %c0_18 = arith.constant 0 : index
    %c0_19 = arith.constant 0 : index
    %31 = vector.load %arg5[%c0_18, %c0_19] : memref<72x1xi32, #tpu.memory_space<vmem>>, vector<72x1xi32>
    %32 = vector.broadcast %31 : vector<72x1xi32> to vector<72x512xi32>
    %33 = arith.cmpi eq, %30, %32 : vector<72x512xi32>
    %c0_20 = arith.constant 0 : index
    %c0_21 = arith.constant 0 : index
    %34 = vector.load %arg9[%c0_20, %c0_21] : memref<72x1xf32, #tpu.memory_space<vmem>>, vector<72x1xf32>
    %cst_22 = arith.constant 0.000000e+00 : f32
    %35 = vector.broadcast %cst_22 : f32 to vector<72x512xf32>
    %36 = arith.select %33, %9, %35 : vector<72x512xi1>, vector<72x512xf32>
    %cst_23 = arith.constant dense<0.000000e+00> : vector<72xf32>
    %37 = vector.multi_reduction <add>, %36, %cst_23 [1] : vector<72x512xf32> to vector<72xf32>
    %38 = vector.shape_cast %37 : vector<72xf32> to vector<72x1xf32>
    %39 = arith.addf %34, %38 : vector<72x1xf32>
    %c0_24 = arith.constant 0 : index
    %c0_25 = arith.constant 0 : index
    %40 = vector.load %arg9[%c0_24, %c0_25] : memref<72x1xf32, #tpu.memory_space<vmem>>, vector<72x1xf32>
    tpu.vector_store %arg9[%c0_24, %c0_25], %39 {strides = array<i32>} : memref<72x1xf32, #tpu.memory_space<vmem>>, vector<72x1xf32>,
    %c0_i32_26 = arith.constant 0 : i32
    %41 = arith.cmpi eq, %arg1, %c0_i32_26 : i32
    %42 = arith.extui %41 : i1 to i32
    %c0_i32_27 = arith.constant 0 : i32
    %43 = arith.cmpi ne, %42, %c0_i32_27 : i32
    scf.if %43 {
      %c0_28 = arith.constant 0 : index
      %c0_29 = arith.constant 0 : index
      %44 = vector.load %arg7[%c0_28, %c0_29] : memref<72x1xf32, #tpu.memory_space<vmem>>, vector<72x1xf32>
      %c0_30 = arith.constant 0 : index
      %c0_31 = arith.constant 0 : index
      %45 = vector.load %arg8[%c0_30, %c0_31] : memref<72x1xf32, #tpu.memory_space<vmem>>, vector<72x1xf32>
      %46 = math.log %45 : vector<72x1xf32>
      %47 = arith.addf %44, %46 : vector<72x1xf32>
      %c0_32 = arith.constant 0 : index
      %c0_33 = arith.constant 0 : index
      %48 = vector.load %arg9[%c0_32, %c0_33] : memref<72x1xf32, #tpu.memory_space<vmem>>, vector<72x1xf32>
      %49 = arith.subf %47, %48 : vector<72x1xf32>
      %c0_34 = arith.constant 0 : index
      %c0_35 = arith.constant 0 : index
      %50 = vector.load %arg6[%c0_34, %c0_35] : memref<72x1xf32, #tpu.memory_space<vmem>>, vector<72x1xf32>
      tpu.vector_store %arg6[%c0_34, %c0_35], %49 {strides = array<i32>} : memref<72x1xf32, #tpu.memory_space<vmem>>, vector<72x1xf32>,
    } else {
    }
    return
  }
  func.func @transform_0(%arg0: i32, %arg1: i32) -> (i32, i32) {
    %c0_i32 = arith.constant 0 : i32
    %c0_i32_0 = arith.constant 0 : i32
    return %arg0, %c0_i32 : i32, i32
  }
  func.func @transform_1(%arg0: i32, %arg1: i32) -> (i32, i32) {
    %c0_i32 = arith.constant 0 : i32
    %c0_i32_0 = arith.constant 0 : i32
    return %c0_i32, %arg1 : i32, i32
  }
  func.func @transform_2(%arg0: i32, %arg1: i32) -> (i32, i32) {
    %c0_i32 = arith.constant 0 : i32
    %c0_i32_0 = arith.constant 0 : i32
    return %c0_i32, %arg1 : i32, i32
  }
  func.func @transform_3(%arg0: i32, %arg1: i32) -> (i32, i32) {
    %c0_i32 = arith.constant 0 : i32
    %c0_i32_0 = arith.constant 0 : i32
    return %arg0, %c0_i32 : i32, i32
  }
  func.func @transform_4(%arg0: i32, %arg1: i32) -> (i32, i32) {
    %c0_i32 = arith.constant 0 : i32
    %c0_i32_0 = arith.constant 0 : i32
    return %arg0, %c0_i32 : i32, i32
  }
}

module attributes {stable_mosaic.version = 11 : i64} {
  func.func @_lstm_kernel(%arg0: i32, %arg1: i32, %arg2: memref<8x64xf32, #tpu.memory_space<vmem>>, %arg3: memref<64x256xbf16, #tpu.memory_space<vmem>>, %arg4: memref<1x256xf32, #tpu.memory_space<vmem>>, %arg5: memref<13x8x64xf32, #tpu.memory_space<vmem>>, %arg6: memref<64x512xbf16, #tpu.memory_space<vmem>>, %arg7: memref<1x512xf32, #tpu.memory_space<vmem>>, %arg8: memref<128x512xbf16, #tpu.memory_space<vmem>>, %arg9: memref<13x8x128xf32, #tpu.memory_space<vmem>>, %arg10: memref<8x128xf32, #tpu.memory_space<vmem>>, %arg11: memref<8x128xf32, #tpu.memory_space<vmem>>, %arg12: memref<13x8x512xf32, #tpu.memory_space<vmem>>) attributes {dimension_semantics = [#tpu.dimension_semantics<parallel>, #tpu.dimension_semantics<arbitrary>], iteration_bounds = array<i64: 1, 1>, scalar_prefetch = 0 : i64, scratch_operands = 3 : i64, tpu.core_type = #tpu.core_type<tc>, window_params = [{transform_indices = @transform_0, window_bounds = array<i64: 8, 64>}, {pipeline_mode = #tpu.pipeline_mode<synchronous>, transform_indices = @transform_1, window_bounds = array<i64: 64, 256>}, {pipeline_mode = #tpu.pipeline_mode<synchronous>, transform_indices = @transform_2, window_bounds = array<i64: 1, 256>}, {transform_indices = @transform_3, window_bounds = array<i64: 13, 8, 64>}, {pipeline_mode = #tpu.pipeline_mode<synchronous>, transform_indices = @transform_4, window_bounds = array<i64: 64, 512>}, {pipeline_mode = #tpu.pipeline_mode<synchronous>, transform_indices = @transform_5, window_bounds = array<i64: 1, 512>}, {pipeline_mode = #tpu.pipeline_mode<synchronous>, transform_indices = @transform_6, window_bounds = array<i64: 128, 512>}, {transform_indices = @transform_7, window_bounds = array<i64: 13, 8, 128>}]} {
    %c0_i32 = arith.constant 0 : i32
    %0 = arith.cmpi eq, %arg1, %c0_i32 : i32
    %1 = arith.extui %0 : i1 to i32
    %c0_i32_0 = arith.constant 0 : i32
    %2 = arith.cmpi ne, %1, %c0_i32_0 : i32
    scf.if %2 {
      %c0_221 = arith.constant 0 : index
      %c0_222 = arith.constant 0 : index
      %521 = vector.load %arg2[%c0_221, %c0_222] : memref<8x64xf32, #tpu.memory_space<vmem>>, vector<8x64xf32>
      %522 = arith.truncf %521 : vector<8x64xf32> to vector<8x64xbf16>
      %c0_223 = arith.constant 0 : index
      %c0_224 = arith.constant 0 : index
      %523 = vector.load %arg3[%c0_223, %c0_224] : memref<64x256xbf16, #tpu.memory_space<vmem>>, vector<64x256xbf16>
      %cst_225 = arith.constant dense<0.000000e+00> : vector<8x256xf32>
      %524 = tpu.matmul %522, %523, %cst_225 {dimension_numbers = #tpu.dot_dimension_numbers<[1], [0], [0], [1], [0, 0, 1, 1], [], []>} : vector<8x64xbf16>, vector<64x256xbf16>, vector<8x256xf32> -> vector<8x256xf32>
      %c0_226 = arith.constant 0 : index
      %c0_227 = arith.constant 0 : index
      %525 = vector.load %arg4[%c0_226, %c0_227] : memref<1x256xf32, #tpu.memory_space<vmem>>, vector<1x256xf32>
      %526 = vector.broadcast %525 : vector<1x256xf32> to vector<8x256xf32>
      %527 = arith.addf %524, %526 : vector<8x256xf32>
      %528 = vector.extract_strided_slice %527 {offsets = [0, 0], sizes = [8, 128], strides = [1, 1]} : vector<8x256xf32> to vector<8x128xf32>
      %c0_228 = arith.constant 0 : index
      %c0_229 = arith.constant 0 : index
      %529 = vector.load %arg10[%c0_228, %c0_229] : memref<8x128xf32, #tpu.memory_space<vmem>>, vector<8x128xf32>
      tpu.vector_store %arg10[%c0_228, %c0_229], %528 {strides = array<i32>} : memref<8x128xf32, #tpu.memory_space<vmem>>, vector<8x128xf32>,
      %530 = vector.extract_strided_slice %527 {offsets = [0, 128], sizes = [8, 128], strides = [1, 1]} : vector<8x256xf32> to vector<8x128xf32>
      %c0_230 = arith.constant 0 : index
      %c0_231 = arith.constant 0 : index
      %531 = vector.load %arg11[%c0_230, %c0_231] : memref<8x128xf32, #tpu.memory_space<vmem>>, vector<8x128xf32>
      tpu.vector_store %arg11[%c0_230, %c0_231], %530 {strides = array<i32>} : memref<8x128xf32, #tpu.memory_space<vmem>>, vector<8x128xf32>,
    } else {
    }
    %c0 = arith.constant 0 : index
    %c0_1 = arith.constant 0 : index
    %c0_2 = arith.constant 0 : index
    %3 = vector.load %arg5[%c0, %c0_1, %c0_2] : memref<13x8x64xf32, #tpu.memory_space<vmem>>, vector<13x8x64xf32>
    %4 = vector.shape_cast %3 : vector<13x8x64xf32> to vector<104x64xf32>
    %5 = arith.truncf %4 : vector<104x64xf32> to vector<104x64xbf16>
    %c0_3 = arith.constant 0 : index
    %c0_4 = arith.constant 0 : index
    %6 = vector.load %arg6[%c0_3, %c0_4] : memref<64x512xbf16, #tpu.memory_space<vmem>>, vector<64x512xbf16>
    %cst = arith.constant dense<0.000000e+00> : vector<104x512xf32>
    %7 = tpu.matmul %5, %6, %cst {dimension_numbers = #tpu.dot_dimension_numbers<[1], [0], [0], [1], [0, 0, 1, 1], [], []>} : vector<104x64xbf16>, vector<64x512xbf16>, vector<104x512xf32> -> vector<104x512xf32>
    %c0_5 = arith.constant 0 : index
    %c0_6 = arith.constant 0 : index
    %8 = vector.load %arg7[%c0_5, %c0_6] : memref<1x512xf32, #tpu.memory_space<vmem>>, vector<1x512xf32>
    %9 = vector.broadcast %8 : vector<1x512xf32> to vector<104x512xf32>
    %10 = arith.addf %7, %9 : vector<104x512xf32>
    %11 = vector.shape_cast %10 : vector<104x512xf32> to vector<13x8x512xf32>
    %c0_7 = arith.constant 0 : index
    %c0_8 = arith.constant 0 : index
    %c0_9 = arith.constant 0 : index
    %12 = vector.load %arg12[%c0_7, %c0_8, %c0_9] : memref<13x8x512xf32, #tpu.memory_space<vmem>>, vector<13x8x512xf32>
    tpu.vector_store %arg12[%c0_7, %c0_8, %c0_9], %11 {strides = array<i32>} : memref<13x8x512xf32, #tpu.memory_space<vmem>>, vector<13x8x512xf32>,
    %c0_10 = arith.constant 0 : index
    %c0_11 = arith.constant 0 : index
    %13 = vector.load %arg8[%c0_10, %c0_11] : memref<128x512xbf16, #tpu.memory_space<vmem>>, vector<128x512xbf16>
    %c0_i32_12 = arith.constant 0 : i32
    %14 = arith.index_cast %c0_i32_12 : i32 to index
    %c0_13 = arith.constant 0 : index
    %c0_14 = arith.constant 0 : index
    %15 = vector.load %arg12[%14, %c0_13, %c0_14] : memref<13x8x512xf32, #tpu.memory_space<vmem>>, vector<1x8x512xf32>
    %16 = vector.shape_cast %15 : vector<1x8x512xf32> to vector<8x512xf32>
    %c0_15 = arith.constant 0 : index
    %c0_16 = arith.constant 0 : index
    %17 = vector.load %arg10[%c0_15, %c0_16] : memref<8x128xf32, #tpu.memory_space<vmem>>, vector<8x128xf32>
    %18 = arith.truncf %17 : vector<8x128xf32> to vector<8x128xbf16>
    %cst_17 = arith.constant dense<0.000000e+00> : vector<8x512xf32>
    %19 = tpu.matmul %18, %13, %cst_17 {dimension_numbers = #tpu.dot_dimension_numbers<[1], [0], [0], [1], [0, 0, 1, 1], [], []>} : vector<8x128xbf16>, vector<128x512xbf16>, vector<8x512xf32> -> vector<8x512xf32>
    %20 = arith.addf %16, %19 : vector<8x512xf32>
    %21 = vector.extract_strided_slice %20 {offsets = [0, 0], sizes = [8, 128], strides = [1, 1]} : vector<8x512xf32> to vector<8x128xf32>
    %22 = arith.negf %21 : vector<8x128xf32>
    %23 = math.exp %22 : vector<8x128xf32>
    %cst_18 = arith.constant 1.000000e+00 : f32
    %24 = vector.broadcast %cst_18 : f32 to vector<8x128xf32>
    %25 = arith.addf %24, %23 : vector<8x128xf32>
    %26 = arith.divf %24, %25 : vector<8x128xf32>
    %27 = vector.extract_strided_slice %20 {offsets = [0, 128], sizes = [8, 128], strides = [1, 1]} : vector<8x512xf32> to vector<8x128xf32>
    %28 = arith.negf %27 : vector<8x128xf32>
    %29 = math.exp %28 : vector<8x128xf32>
    %cst_19 = arith.constant 1.000000e+00 : f32
    %30 = vector.broadcast %cst_19 : f32 to vector<8x128xf32>
    %31 = arith.addf %30, %29 : vector<8x128xf32>
    %32 = arith.divf %30, %31 : vector<8x128xf32>
    %33 = vector.extract_strided_slice %20 {offsets = [0, 256], sizes = [8, 128], strides = [1, 1]} : vector<8x512xf32> to vector<8x128xf32>
    %34 = math.tanh %33 : vector<8x128xf32>
    %35 = vector.extract_strided_slice %20 {offsets = [0, 384], sizes = [8, 128], strides = [1, 1]} : vector<8x512xf32> to vector<8x128xf32>
    %36 = arith.negf %35 : vector<8x128xf32>
    %37 = math.exp %36 : vector<8x128xf32>
    %cst_20 = arith.constant 1.000000e+00 : f32
    %38 = vector.broadcast %cst_20 : f32 to vector<8x128xf32>
    %39 = arith.addf %38, %37 : vector<8x128xf32>
    %40 = arith.divf %38, %39 : vector<8x128xf32>
    %c0_21 = arith.constant 0 : index
    %c0_22 = arith.constant 0 : index
    %41 = vector.load %arg11[%c0_21, %c0_22] : memref<8x128xf32, #tpu.memory_space<vmem>>, vector<8x128xf32>
    %42 = arith.mulf %32, %41 : vector<8x128xf32>
    %43 = arith.mulf %26, %34 : vector<8x128xf32>
    %44 = arith.addf %42, %43 : vector<8x128xf32>
    %45 = math.tanh %44 : vector<8x128xf32>
    %46 = arith.mulf %40, %45 : vector<8x128xf32>
    %c0_23 = arith.constant 0 : index
    %c0_24 = arith.constant 0 : index
    %47 = vector.load %arg11[%c0_23, %c0_24] : memref<8x128xf32, #tpu.memory_space<vmem>>, vector<8x128xf32>
    tpu.vector_store %arg11[%c0_23, %c0_24], %44 {strides = array<i32>} : memref<8x128xf32, #tpu.memory_space<vmem>>, vector<8x128xf32>,
    %c0_25 = arith.constant 0 : index
    %c0_26 = arith.constant 0 : index
    %48 = vector.load %arg10[%c0_25, %c0_26] : memref<8x128xf32, #tpu.memory_space<vmem>>, vector<8x128xf32>
    tpu.vector_store %arg10[%c0_25, %c0_26], %46 {strides = array<i32>} : memref<8x128xf32, #tpu.memory_space<vmem>>, vector<8x128xf32>,
    %49 = arith.index_cast %c0_i32_12 : i32 to index
    %c0_27 = arith.constant 0 : index
    %c0_28 = arith.constant 0 : index
    %50 = vector.load %arg9[%49, %c0_27, %c0_28] : memref<13x8x128xf32, #tpu.memory_space<vmem>>, vector<1x8x128xf32>
    %51 = vector.shape_cast %50 : vector<1x8x128xf32> to vector<8x128xf32>
    %52 = vector.shape_cast %46 : vector<8x128xf32> to vector<1x8x128xf32>
    tpu.vector_store %arg9[%49, %c0_27, %c0_28], %52 {strides = array<i32>} : memref<13x8x128xf32, #tpu.memory_space<vmem>>, vector<1x8x128xf32>,
    %c1_i32 = arith.constant 1 : i32
    %53 = arith.index_cast %c1_i32 : i32 to index
    %c0_29 = arith.constant 0 : index
    %c0_30 = arith.constant 0 : index
    %54 = vector.load %arg12[%53, %c0_29, %c0_30] : memref<13x8x512xf32, #tpu.memory_space<vmem>>, vector<1x8x512xf32>
    %55 = vector.shape_cast %54 : vector<1x8x512xf32> to vector<8x512xf32>
    %c0_31 = arith.constant 0 : index
    %c0_32 = arith.constant 0 : index
    %56 = vector.load %arg10[%c0_31, %c0_32] : memref<8x128xf32, #tpu.memory_space<vmem>>, vector<8x128xf32>
    %57 = arith.truncf %56 : vector<8x128xf32> to vector<8x128xbf16>
    %cst_33 = arith.constant dense<0.000000e+00> : vector<8x512xf32>
    %58 = tpu.matmul %57, %13, %cst_33 {dimension_numbers = #tpu.dot_dimension_numbers<[1], [0], [0], [1], [0, 0, 1, 1], [], []>} : vector<8x128xbf16>, vector<128x512xbf16>, vector<8x512xf32> -> vector<8x512xf32>
    %59 = arith.addf %55, %58 : vector<8x512xf32>
    %60 = vector.extract_strided_slice %59 {offsets = [0, 0], sizes = [8, 128], strides = [1, 1]} : vector<8x512xf32> to vector<8x128xf32>
    %61 = arith.negf %60 : vector<8x128xf32>
    %62 = math.exp %61 : vector<8x128xf32>
    %cst_34 = arith.constant 1.000000e+00 : f32
    %63 = vector.broadcast %cst_34 : f32 to vector<8x128xf32>
    %64 = arith.addf %63, %62 : vector<8x128xf32>
    %65 = arith.divf %63, %64 : vector<8x128xf32>
    %66 = vector.extract_strided_slice %59 {offsets = [0, 128], sizes = [8, 128], strides = [1, 1]} : vector<8x512xf32> to vector<8x128xf32>
    %67 = arith.negf %66 : vector<8x128xf32>
    %68 = math.exp %67 : vector<8x128xf32>
    %cst_35 = arith.constant 1.000000e+00 : f32
    %69 = vector.broadcast %cst_35 : f32 to vector<8x128xf32>
    %70 = arith.addf %69, %68 : vector<8x128xf32>
    %71 = arith.divf %69, %70 : vector<8x128xf32>
    %72 = vector.extract_strided_slice %59 {offsets = [0, 256], sizes = [8, 128], strides = [1, 1]} : vector<8x512xf32> to vector<8x128xf32>
    %73 = math.tanh %72 : vector<8x128xf32>
    %74 = vector.extract_strided_slice %59 {offsets = [0, 384], sizes = [8, 128], strides = [1, 1]} : vector<8x512xf32> to vector<8x128xf32>
    %75 = arith.negf %74 : vector<8x128xf32>
    %76 = math.exp %75 : vector<8x128xf32>
    %cst_36 = arith.constant 1.000000e+00 : f32
    %77 = vector.broadcast %cst_36 : f32 to vector<8x128xf32>
    %78 = arith.addf %77, %76 : vector<8x128xf32>
    %79 = arith.divf %77, %78 : vector<8x128xf32>
    %c0_37 = arith.constant 0 : index
    %c0_38 = arith.constant 0 : index
    %80 = vector.load %arg11[%c0_37, %c0_38] : memref<8x128xf32, #tpu.memory_space<vmem>>, vector<8x128xf32>
    %81 = arith.mulf %71, %80 : vector<8x128xf32>
    %82 = arith.mulf %65, %73 : vector<8x128xf32>
    %83 = arith.addf %81, %82 : vector<8x128xf32>
    %84 = math.tanh %83 : vector<8x128xf32>
    %85 = arith.mulf %79, %84 : vector<8x128xf32>
    %c0_39 = arith.constant 0 : index
    %c0_40 = arith.constant 0 : index
    %86 = vector.load %arg11[%c0_39, %c0_40] : memref<8x128xf32, #tpu.memory_space<vmem>>, vector<8x128xf32>
    tpu.vector_store %arg11[%c0_39, %c0_40], %83 {strides = array<i32>} : memref<8x128xf32, #tpu.memory_space<vmem>>, vector<8x128xf32>,
    %c0_41 = arith.constant 0 : index
    %c0_42 = arith.constant 0 : index
    %87 = vector.load %arg10[%c0_41, %c0_42] : memref<8x128xf32, #tpu.memory_space<vmem>>, vector<8x128xf32>
    tpu.vector_store %arg10[%c0_41, %c0_42], %85 {strides = array<i32>} : memref<8x128xf32, #tpu.memory_space<vmem>>, vector<8x128xf32>,
    %88 = arith.index_cast %c1_i32 : i32 to index
    %c0_43 = arith.constant 0 : index
    %c0_44 = arith.constant 0 : index
    %89 = vector.load %arg9[%88, %c0_43, %c0_44] : memref<13x8x128xf32, #tpu.memory_space<vmem>>, vector<1x8x128xf32>
    %90 = vector.shape_cast %89 : vector<1x8x128xf32> to vector<8x128xf32>
    %91 = vector.shape_cast %85 : vector<8x128xf32> to vector<1x8x128xf32>
    tpu.vector_store %arg9[%88, %c0_43, %c0_44], %91 {strides = array<i32>} : memref<13x8x128xf32, #tpu.memory_space<vmem>>, vector<1x8x128xf32>,
    %c2_i32 = arith.constant 2 : i32
    %92 = arith.index_cast %c2_i32 : i32 to index
    %c0_45 = arith.constant 0 : index
    %c0_46 = arith.constant 0 : index
    %93 = vector.load %arg12[%92, %c0_45, %c0_46] : memref<13x8x512xf32, #tpu.memory_space<vmem>>, vector<1x8x512xf32>
    %94 = vector.shape_cast %93 : vector<1x8x512xf32> to vector<8x512xf32>
    %c0_47 = arith.constant 0 : index
    %c0_48 = arith.constant 0 : index
    %95 = vector.load %arg10[%c0_47, %c0_48] : memref<8x128xf32, #tpu.memory_space<vmem>>, vector<8x128xf32>
    %96 = arith.truncf %95 : vector<8x128xf32> to vector<8x128xbf16>
    %cst_49 = arith.constant dense<0.000000e+00> : vector<8x512xf32>
    %97 = tpu.matmul %96, %13, %cst_49 {dimension_numbers = #tpu.dot_dimension_numbers<[1], [0], [0], [1], [0, 0, 1, 1], [], []>} : vector<8x128xbf16>, vector<128x512xbf16>, vector<8x512xf32> -> vector<8x512xf32>
    %98 = arith.addf %94, %97 : vector<8x512xf32>
    %99 = vector.extract_strided_slice %98 {offsets = [0, 0], sizes = [8, 128], strides = [1, 1]} : vector<8x512xf32> to vector<8x128xf32>
    %100 = arith.negf %99 : vector<8x128xf32>
    %101 = math.exp %100 : vector<8x128xf32>
    %cst_50 = arith.constant 1.000000e+00 : f32
    %102 = vector.broadcast %cst_50 : f32 to vector<8x128xf32>
    %103 = arith.addf %102, %101 : vector<8x128xf32>
    %104 = arith.divf %102, %103 : vector<8x128xf32>
    %105 = vector.extract_strided_slice %98 {offsets = [0, 128], sizes = [8, 128], strides = [1, 1]} : vector<8x512xf32> to vector<8x128xf32>
    %106 = arith.negf %105 : vector<8x128xf32>
    %107 = math.exp %106 : vector<8x128xf32>
    %cst_51 = arith.constant 1.000000e+00 : f32
    %108 = vector.broadcast %cst_51 : f32 to vector<8x128xf32>
    %109 = arith.addf %108, %107 : vector<8x128xf32>
    %110 = arith.divf %108, %109 : vector<8x128xf32>
    %111 = vector.extract_strided_slice %98 {offsets = [0, 256], sizes = [8, 128], strides = [1, 1]} : vector<8x512xf32> to vector<8x128xf32>
    %112 = math.tanh %111 : vector<8x128xf32>
    %113 = vector.extract_strided_slice %98 {offsets = [0, 384], sizes = [8, 128], strides = [1, 1]} : vector<8x512xf32> to vector<8x128xf32>
    %114 = arith.negf %113 : vector<8x128xf32>
    %115 = math.exp %114 : vector<8x128xf32>
    %cst_52 = arith.constant 1.000000e+00 : f32
    %116 = vector.broadcast %cst_52 : f32 to vector<8x128xf32>
    %117 = arith.addf %116, %115 : vector<8x128xf32>
    %118 = arith.divf %116, %117 : vector<8x128xf32>
    %c0_53 = arith.constant 0 : index
    %c0_54 = arith.constant 0 : index
    %119 = vector.load %arg11[%c0_53, %c0_54] : memref<8x128xf32, #tpu.memory_space<vmem>>, vector<8x128xf32>
    %120 = arith.mulf %110, %119 : vector<8x128xf32>
    %121 = arith.mulf %104, %112 : vector<8x128xf32>
    %122 = arith.addf %120, %121 : vector<8x128xf32>
    %123 = math.tanh %122 : vector<8x128xf32>
    %124 = arith.mulf %118, %123 : vector<8x128xf32>
    %c0_55 = arith.constant 0 : index
    %c0_56 = arith.constant 0 : index
    %125 = vector.load %arg11[%c0_55, %c0_56] : memref<8x128xf32, #tpu.memory_space<vmem>>, vector<8x128xf32>
    tpu.vector_store %arg11[%c0_55, %c0_56], %122 {strides = array<i32>} : memref<8x128xf32, #tpu.memory_space<vmem>>, vector<8x128xf32>,
    %c0_57 = arith.constant 0 : index
    %c0_58 = arith.constant 0 : index
    %126 = vector.load %arg10[%c0_57, %c0_58] : memref<8x128xf32, #tpu.memory_space<vmem>>, vector<8x128xf32>
    tpu.vector_store %arg10[%c0_57, %c0_58], %124 {strides = array<i32>} : memref<8x128xf32, #tpu.memory_space<vmem>>, vector<8x128xf32>,
    %127 = arith.index_cast %c2_i32 : i32 to index
    %c0_59 = arith.constant 0 : index
    %c0_60 = arith.constant 0 : index
    %128 = vector.load %arg9[%127, %c0_59, %c0_60] : memref<13x8x128xf32, #tpu.memory_space<vmem>>, vector<1x8x128xf32>
    %129 = vector.shape_cast %128 : vector<1x8x128xf32> to vector<8x128xf32>
    %130 = vector.shape_cast %124 : vector<8x128xf32> to vector<1x8x128xf32>
    tpu.vector_store %arg9[%127, %c0_59, %c0_60], %130 {strides = array<i32>} : memref<13x8x128xf32, #tpu.memory_space<vmem>>, vector<1x8x128xf32>,
    %c3_i32 = arith.constant 3 : i32
    %131 = arith.index_cast %c3_i32 : i32 to index
    %c0_61 = arith.constant 0 : index
    %c0_62 = arith.constant 0 : index
    %132 = vector.load %arg12[%131, %c0_61, %c0_62] : memref<13x8x512xf32, #tpu.memory_space<vmem>>, vector<1x8x512xf32>
    %133 = vector.shape_cast %132 : vector<1x8x512xf32> to vector<8x512xf32>
    %c0_63 = arith.constant 0 : index
    %c0_64 = arith.constant 0 : index
    %134 = vector.load %arg10[%c0_63, %c0_64] : memref<8x128xf32, #tpu.memory_space<vmem>>, vector<8x128xf32>
    %135 = arith.truncf %134 : vector<8x128xf32> to vector<8x128xbf16>
    %cst_65 = arith.constant dense<0.000000e+00> : vector<8x512xf32>
    %136 = tpu.matmul %135, %13, %cst_65 {dimension_numbers = #tpu.dot_dimension_numbers<[1], [0], [0], [1], [0, 0, 1, 1], [], []>} : vector<8x128xbf16>, vector<128x512xbf16>, vector<8x512xf32> -> vector<8x512xf32>
    %137 = arith.addf %133, %136 : vector<8x512xf32>
    %138 = vector.extract_strided_slice %137 {offsets = [0, 0], sizes = [8, 128], strides = [1, 1]} : vector<8x512xf32> to vector<8x128xf32>
    %139 = arith.negf %138 : vector<8x128xf32>
    %140 = math.exp %139 : vector<8x128xf32>
    %cst_66 = arith.constant 1.000000e+00 : f32
    %141 = vector.broadcast %cst_66 : f32 to vector<8x128xf32>
    %142 = arith.addf %141, %140 : vector<8x128xf32>
    %143 = arith.divf %141, %142 : vector<8x128xf32>
    %144 = vector.extract_strided_slice %137 {offsets = [0, 128], sizes = [8, 128], strides = [1, 1]} : vector<8x512xf32> to vector<8x128xf32>
    %145 = arith.negf %144 : vector<8x128xf32>
    %146 = math.exp %145 : vector<8x128xf32>
    %cst_67 = arith.constant 1.000000e+00 : f32
    %147 = vector.broadcast %cst_67 : f32 to vector<8x128xf32>
    %148 = arith.addf %147, %146 : vector<8x128xf32>
    %149 = arith.divf %147, %148 : vector<8x128xf32>
    %150 = vector.extract_strided_slice %137 {offsets = [0, 256], sizes = [8, 128], strides = [1, 1]} : vector<8x512xf32> to vector<8x128xf32>
    %151 = math.tanh %150 : vector<8x128xf32>
    %152 = vector.extract_strided_slice %137 {offsets = [0, 384], sizes = [8, 128], strides = [1, 1]} : vector<8x512xf32> to vector<8x128xf32>
    %153 = arith.negf %152 : vector<8x128xf32>
    %154 = math.exp %153 : vector<8x128xf32>
    %cst_68 = arith.constant 1.000000e+00 : f32
    %155 = vector.broadcast %cst_68 : f32 to vector<8x128xf32>
    %156 = arith.addf %155, %154 : vector<8x128xf32>
    %157 = arith.divf %155, %156 : vector<8x128xf32>
    %c0_69 = arith.constant 0 : index
    %c0_70 = arith.constant 0 : index
    %158 = vector.load %arg11[%c0_69, %c0_70] : memref<8x128xf32, #tpu.memory_space<vmem>>, vector<8x128xf32>
    %159 = arith.mulf %149, %158 : vector<8x128xf32>
    %160 = arith.mulf %143, %151 : vector<8x128xf32>
    %161 = arith.addf %159, %160 : vector<8x128xf32>
    %162 = math.tanh %161 : vector<8x128xf32>
    %163 = arith.mulf %157, %162 : vector<8x128xf32>
    %c0_71 = arith.constant 0 : index
    %c0_72 = arith.constant 0 : index
    %164 = vector.load %arg11[%c0_71, %c0_72] : memref<8x128xf32, #tpu.memory_space<vmem>>, vector<8x128xf32>
    tpu.vector_store %arg11[%c0_71, %c0_72], %161 {strides = array<i32>} : memref<8x128xf32, #tpu.memory_space<vmem>>, vector<8x128xf32>,
    %c0_73 = arith.constant 0 : index
    %c0_74 = arith.constant 0 : index
    %165 = vector.load %arg10[%c0_73, %c0_74] : memref<8x128xf32, #tpu.memory_space<vmem>>, vector<8x128xf32>
    tpu.vector_store %arg10[%c0_73, %c0_74], %163 {strides = array<i32>} : memref<8x128xf32, #tpu.memory_space<vmem>>, vector<8x128xf32>,
    %166 = arith.index_cast %c3_i32 : i32 to index
    %c0_75 = arith.constant 0 : index
    %c0_76 = arith.constant 0 : index
    %167 = vector.load %arg9[%166, %c0_75, %c0_76] : memref<13x8x128xf32, #tpu.memory_space<vmem>>, vector<1x8x128xf32>
    %168 = vector.shape_cast %167 : vector<1x8x128xf32> to vector<8x128xf32>
    %169 = vector.shape_cast %163 : vector<8x128xf32> to vector<1x8x128xf32>
    tpu.vector_store %arg9[%166, %c0_75, %c0_76], %169 {strides = array<i32>} : memref<13x8x128xf32, #tpu.memory_space<vmem>>, vector<1x8x128xf32>,
    %c4_i32 = arith.constant 4 : i32
    %170 = arith.index_cast %c4_i32 : i32 to index
    %c0_77 = arith.constant 0 : index
    %c0_78 = arith.constant 0 : index
    %171 = vector.load %arg12[%170, %c0_77, %c0_78] : memref<13x8x512xf32, #tpu.memory_space<vmem>>, vector<1x8x512xf32>
    %172 = vector.shape_cast %171 : vector<1x8x512xf32> to vector<8x512xf32>
    %c0_79 = arith.constant 0 : index
    %c0_80 = arith.constant 0 : index
    %173 = vector.load %arg10[%c0_79, %c0_80] : memref<8x128xf32, #tpu.memory_space<vmem>>, vector<8x128xf32>
    %174 = arith.truncf %173 : vector<8x128xf32> to vector<8x128xbf16>
    %cst_81 = arith.constant dense<0.000000e+00> : vector<8x512xf32>
    %175 = tpu.matmul %174, %13, %cst_81 {dimension_numbers = #tpu.dot_dimension_numbers<[1], [0], [0], [1], [0, 0, 1, 1], [], []>} : vector<8x128xbf16>, vector<128x512xbf16>, vector<8x512xf32> -> vector<8x512xf32>
    %176 = arith.addf %172, %175 : vector<8x512xf32>
    %177 = vector.extract_strided_slice %176 {offsets = [0, 0], sizes = [8, 128], strides = [1, 1]} : vector<8x512xf32> to vector<8x128xf32>
    %178 = arith.negf %177 : vector<8x128xf32>
    %179 = math.exp %178 : vector<8x128xf32>
    %cst_82 = arith.constant 1.000000e+00 : f32
    %180 = vector.broadcast %cst_82 : f32 to vector<8x128xf32>
    %181 = arith.addf %180, %179 : vector<8x128xf32>
    %182 = arith.divf %180, %181 : vector<8x128xf32>
    %183 = vector.extract_strided_slice %176 {offsets = [0, 128], sizes = [8, 128], strides = [1, 1]} : vector<8x512xf32> to vector<8x128xf32>
    %184 = arith.negf %183 : vector<8x128xf32>
    %185 = math.exp %184 : vector<8x128xf32>
    %cst_83 = arith.constant 1.000000e+00 : f32
    %186 = vector.broadcast %cst_83 : f32 to vector<8x128xf32>
    %187 = arith.addf %186, %185 : vector<8x128xf32>
    %188 = arith.divf %186, %187 : vector<8x128xf32>
    %189 = vector.extract_strided_slice %176 {offsets = [0, 256], sizes = [8, 128], strides = [1, 1]} : vector<8x512xf32> to vector<8x128xf32>
    %190 = math.tanh %189 : vector<8x128xf32>
    %191 = vector.extract_strided_slice %176 {offsets = [0, 384], sizes = [8, 128], strides = [1, 1]} : vector<8x512xf32> to vector<8x128xf32>
    %192 = arith.negf %191 : vector<8x128xf32>
    %193 = math.exp %192 : vector<8x128xf32>
    %cst_84 = arith.constant 1.000000e+00 : f32
    %194 = vector.broadcast %cst_84 : f32 to vector<8x128xf32>
    %195 = arith.addf %194, %193 : vector<8x128xf32>
    %196 = arith.divf %194, %195 : vector<8x128xf32>
    %c0_85 = arith.constant 0 : index
    %c0_86 = arith.constant 0 : index
    %197 = vector.load %arg11[%c0_85, %c0_86] : memref<8x128xf32, #tpu.memory_space<vmem>>, vector<8x128xf32>
    %198 = arith.mulf %188, %197 : vector<8x128xf32>
    %199 = arith.mulf %182, %190 : vector<8x128xf32>
    %200 = arith.addf %198, %199 : vector<8x128xf32>
    %201 = math.tanh %200 : vector<8x128xf32>
    %202 = arith.mulf %196, %201 : vector<8x128xf32>
    %c0_87 = arith.constant 0 : index
    %c0_88 = arith.constant 0 : index
    %203 = vector.load %arg11[%c0_87, %c0_88] : memref<8x128xf32, #tpu.memory_space<vmem>>, vector<8x128xf32>
    tpu.vector_store %arg11[%c0_87, %c0_88], %200 {strides = array<i32>} : memref<8x128xf32, #tpu.memory_space<vmem>>, vector<8x128xf32>,
    %c0_89 = arith.constant 0 : index
    %c0_90 = arith.constant 0 : index
    %204 = vector.load %arg10[%c0_89, %c0_90] : memref<8x128xf32, #tpu.memory_space<vmem>>, vector<8x128xf32>
    tpu.vector_store %arg10[%c0_89, %c0_90], %202 {strides = array<i32>} : memref<8x128xf32, #tpu.memory_space<vmem>>, vector<8x128xf32>,
    %205 = arith.index_cast %c4_i32 : i32 to index
    %c0_91 = arith.constant 0 : index
    %c0_92 = arith.constant 0 : index
    %206 = vector.load %arg9[%205, %c0_91, %c0_92] : memref<13x8x128xf32, #tpu.memory_space<vmem>>, vector<1x8x128xf32>
    %207 = vector.shape_cast %206 : vector<1x8x128xf32> to vector<8x128xf32>
    %208 = vector.shape_cast %202 : vector<8x128xf32> to vector<1x8x128xf32>
    tpu.vector_store %arg9[%205, %c0_91, %c0_92], %208 {strides = array<i32>} : memref<13x8x128xf32, #tpu.memory_space<vmem>>, vector<1x8x128xf32>,
    %c5_i32 = arith.constant 5 : i32
    %209 = arith.index_cast %c5_i32 : i32 to index
    %c0_93 = arith.constant 0 : index
    %c0_94 = arith.constant 0 : index
    %210 = vector.load %arg12[%209, %c0_93, %c0_94] : memref<13x8x512xf32, #tpu.memory_space<vmem>>, vector<1x8x512xf32>
    %211 = vector.shape_cast %210 : vector<1x8x512xf32> to vector<8x512xf32>
    %c0_95 = arith.constant 0 : index
    %c0_96 = arith.constant 0 : index
    %212 = vector.load %arg10[%c0_95, %c0_96] : memref<8x128xf32, #tpu.memory_space<vmem>>, vector<8x128xf32>
    %213 = arith.truncf %212 : vector<8x128xf32> to vector<8x128xbf16>
    %cst_97 = arith.constant dense<0.000000e+00> : vector<8x512xf32>
    %214 = tpu.matmul %213, %13, %cst_97 {dimension_numbers = #tpu.dot_dimension_numbers<[1], [0], [0], [1], [0, 0, 1, 1], [], []>} : vector<8x128xbf16>, vector<128x512xbf16>, vector<8x512xf32> -> vector<8x512xf32>
    %215 = arith.addf %211, %214 : vector<8x512xf32>
    %216 = vector.extract_strided_slice %215 {offsets = [0, 0], sizes = [8, 128], strides = [1, 1]} : vector<8x512xf32> to vector<8x128xf32>
    %217 = arith.negf %216 : vector<8x128xf32>
    %218 = math.exp %217 : vector<8x128xf32>
    %cst_98 = arith.constant 1.000000e+00 : f32
    %219 = vector.broadcast %cst_98 : f32 to vector<8x128xf32>
    %220 = arith.addf %219, %218 : vector<8x128xf32>
    %221 = arith.divf %219, %220 : vector<8x128xf32>
    %222 = vector.extract_strided_slice %215 {offsets = [0, 128], sizes = [8, 128], strides = [1, 1]} : vector<8x512xf32> to vector<8x128xf32>
    %223 = arith.negf %222 : vector<8x128xf32>
    %224 = math.exp %223 : vector<8x128xf32>
    %cst_99 = arith.constant 1.000000e+00 : f32
    %225 = vector.broadcast %cst_99 : f32 to vector<8x128xf32>
    %226 = arith.addf %225, %224 : vector<8x128xf32>
    %227 = arith.divf %225, %226 : vector<8x128xf32>
    %228 = vector.extract_strided_slice %215 {offsets = [0, 256], sizes = [8, 128], strides = [1, 1]} : vector<8x512xf32> to vector<8x128xf32>
    %229 = math.tanh %228 : vector<8x128xf32>
    %230 = vector.extract_strided_slice %215 {offsets = [0, 384], sizes = [8, 128], strides = [1, 1]} : vector<8x512xf32> to vector<8x128xf32>
    %231 = arith.negf %230 : vector<8x128xf32>
    %232 = math.exp %231 : vector<8x128xf32>
    %cst_100 = arith.constant 1.000000e+00 : f32
    %233 = vector.broadcast %cst_100 : f32 to vector<8x128xf32>
    %234 = arith.addf %233, %232 : vector<8x128xf32>
    %235 = arith.divf %233, %234 : vector<8x128xf32>
    %c0_101 = arith.constant 0 : index
    %c0_102 = arith.constant 0 : index
    %236 = vector.load %arg11[%c0_101, %c0_102] : memref<8x128xf32, #tpu.memory_space<vmem>>, vector<8x128xf32>
    %237 = arith.mulf %227, %236 : vector<8x128xf32>
    %238 = arith.mulf %221, %229 : vector<8x128xf32>
    %239 = arith.addf %237, %238 : vector<8x128xf32>
    %240 = math.tanh %239 : vector<8x128xf32>
    %241 = arith.mulf %235, %240 : vector<8x128xf32>
    %c0_103 = arith.constant 0 : index
    %c0_104 = arith.constant 0 : index
    %242 = vector.load %arg11[%c0_103, %c0_104] : memref<8x128xf32, #tpu.memory_space<vmem>>, vector<8x128xf32>
    tpu.vector_store %arg11[%c0_103, %c0_104], %239 {strides = array<i32>} : memref<8x128xf32, #tpu.memory_space<vmem>>, vector<8x128xf32>,
    %c0_105 = arith.constant 0 : index
    %c0_106 = arith.constant 0 : index
    %243 = vector.load %arg10[%c0_105, %c0_106] : memref<8x128xf32, #tpu.memory_space<vmem>>, vector<8x128xf32>
    tpu.vector_store %arg10[%c0_105, %c0_106], %241 {strides = array<i32>} : memref<8x128xf32, #tpu.memory_space<vmem>>, vector<8x128xf32>,
    %244 = arith.index_cast %c5_i32 : i32 to index
    %c0_107 = arith.constant 0 : index
    %c0_108 = arith.constant 0 : index
    %245 = vector.load %arg9[%244, %c0_107, %c0_108] : memref<13x8x128xf32, #tpu.memory_space<vmem>>, vector<1x8x128xf32>
    %246 = vector.shape_cast %245 : vector<1x8x128xf32> to vector<8x128xf32>
    %247 = vector.shape_cast %241 : vector<8x128xf32> to vector<1x8x128xf32>
    tpu.vector_store %arg9[%244, %c0_107, %c0_108], %247 {strides = array<i32>} : memref<13x8x128xf32, #tpu.memory_space<vmem>>, vector<1x8x128xf32>,
    %c6_i32 = arith.constant 6 : i32
    %248 = arith.index_cast %c6_i32 : i32 to index
    %c0_109 = arith.constant 0 : index
    %c0_110 = arith.constant 0 : index
    %249 = vector.load %arg12[%248, %c0_109, %c0_110] : memref<13x8x512xf32, #tpu.memory_space<vmem>>, vector<1x8x512xf32>
    %250 = vector.shape_cast %249 : vector<1x8x512xf32> to vector<8x512xf32>
    %c0_111 = arith.constant 0 : index
    %c0_112 = arith.constant 0 : index
    %251 = vector.load %arg10[%c0_111, %c0_112] : memref<8x128xf32, #tpu.memory_space<vmem>>, vector<8x128xf32>
    %252 = arith.truncf %251 : vector<8x128xf32> to vector<8x128xbf16>
    %cst_113 = arith.constant dense<0.000000e+00> : vector<8x512xf32>
    %253 = tpu.matmul %252, %13, %cst_113 {dimension_numbers = #tpu.dot_dimension_numbers<[1], [0], [0], [1], [0, 0, 1, 1], [], []>} : vector<8x128xbf16>, vector<128x512xbf16>, vector<8x512xf32> -> vector<8x512xf32>
    %254 = arith.addf %250, %253 : vector<8x512xf32>
    %255 = vector.extract_strided_slice %254 {offsets = [0, 0], sizes = [8, 128], strides = [1, 1]} : vector<8x512xf32> to vector<8x128xf32>
    %256 = arith.negf %255 : vector<8x128xf32>
    %257 = math.exp %256 : vector<8x128xf32>
    %cst_114 = arith.constant 1.000000e+00 : f32
    %258 = vector.broadcast %cst_114 : f32 to vector<8x128xf32>
    %259 = arith.addf %258, %257 : vector<8x128xf32>
    %260 = arith.divf %258, %259 : vector<8x128xf32>
    %261 = vector.extract_strided_slice %254 {offsets = [0, 128], sizes = [8, 128], strides = [1, 1]} : vector<8x512xf32> to vector<8x128xf32>
    %262 = arith.negf %261 : vector<8x128xf32>
    %263 = math.exp %262 : vector<8x128xf32>
    %cst_115 = arith.constant 1.000000e+00 : f32
    %264 = vector.broadcast %cst_115 : f32 to vector<8x128xf32>
    %265 = arith.addf %264, %263 : vector<8x128xf32>
    %266 = arith.divf %264, %265 : vector<8x128xf32>
    %267 = vector.extract_strided_slice %254 {offsets = [0, 256], sizes = [8, 128], strides = [1, 1]} : vector<8x512xf32> to vector<8x128xf32>
    %268 = math.tanh %267 : vector<8x128xf32>
    %269 = vector.extract_strided_slice %254 {offsets = [0, 384], sizes = [8, 128], strides = [1, 1]} : vector<8x512xf32> to vector<8x128xf32>
    %270 = arith.negf %269 : vector<8x128xf32>
    %271 = math.exp %270 : vector<8x128xf32>
    %cst_116 = arith.constant 1.000000e+00 : f32
    %272 = vector.broadcast %cst_116 : f32 to vector<8x128xf32>
    %273 = arith.addf %272, %271 : vector<8x128xf32>
    %274 = arith.divf %272, %273 : vector<8x128xf32>
    %c0_117 = arith.constant 0 : index
    %c0_118 = arith.constant 0 : index
    %275 = vector.load %arg11[%c0_117, %c0_118] : memref<8x128xf32, #tpu.memory_space<vmem>>, vector<8x128xf32>
    %276 = arith.mulf %266, %275 : vector<8x128xf32>
    %277 = arith.mulf %260, %268 : vector<8x128xf32>
    %278 = arith.addf %276, %277 : vector<8x128xf32>
    %279 = math.tanh %278 : vector<8x128xf32>
    %280 = arith.mulf %274, %279 : vector<8x128xf32>
    %c0_119 = arith.constant 0 : index
    %c0_120 = arith.constant 0 : index
    %281 = vector.load %arg11[%c0_119, %c0_120] : memref<8x128xf32, #tpu.memory_space<vmem>>, vector<8x128xf32>
    tpu.vector_store %arg11[%c0_119, %c0_120], %278 {strides = array<i32>} : memref<8x128xf32, #tpu.memory_space<vmem>>, vector<8x128xf32>,
    %c0_121 = arith.constant 0 : index
    %c0_122 = arith.constant 0 : index
    %282 = vector.load %arg10[%c0_121, %c0_122] : memref<8x128xf32, #tpu.memory_space<vmem>>, vector<8x128xf32>
    tpu.vector_store %arg10[%c0_121, %c0_122], %280 {strides = array<i32>} : memref<8x128xf32, #tpu.memory_space<vmem>>, vector<8x128xf32>,
    %283 = arith.index_cast %c6_i32 : i32 to index
    %c0_123 = arith.constant 0 : index
    %c0_124 = arith.constant 0 : index
    %284 = vector.load %arg9[%283, %c0_123, %c0_124] : memref<13x8x128xf32, #tpu.memory_space<vmem>>, vector<1x8x128xf32>
    %285 = vector.shape_cast %284 : vector<1x8x128xf32> to vector<8x128xf32>
    %286 = vector.shape_cast %280 : vector<8x128xf32> to vector<1x8x128xf32>
    tpu.vector_store %arg9[%283, %c0_123, %c0_124], %286 {strides = array<i32>} : memref<13x8x128xf32, #tpu.memory_space<vmem>>, vector<1x8x128xf32>,
    %c7_i32 = arith.constant 7 : i32
    %287 = arith.index_cast %c7_i32 : i32 to index
    %c0_125 = arith.constant 0 : index
    %c0_126 = arith.constant 0 : index
    %288 = vector.load %arg12[%287, %c0_125, %c0_126] : memref<13x8x512xf32, #tpu.memory_space<vmem>>, vector<1x8x512xf32>
    %289 = vector.shape_cast %288 : vector<1x8x512xf32> to vector<8x512xf32>
    %c0_127 = arith.constant 0 : index
    %c0_128 = arith.constant 0 : index
    %290 = vector.load %arg10[%c0_127, %c0_128] : memref<8x128xf32, #tpu.memory_space<vmem>>, vector<8x128xf32>
    %291 = arith.truncf %290 : vector<8x128xf32> to vector<8x128xbf16>
    %cst_129 = arith.constant dense<0.000000e+00> : vector<8x512xf32>
    %292 = tpu.matmul %291, %13, %cst_129 {dimension_numbers = #tpu.dot_dimension_numbers<[1], [0], [0], [1], [0, 0, 1, 1], [], []>} : vector<8x128xbf16>, vector<128x512xbf16>, vector<8x512xf32> -> vector<8x512xf32>
    %293 = arith.addf %289, %292 : vector<8x512xf32>
    %294 = vector.extract_strided_slice %293 {offsets = [0, 0], sizes = [8, 128], strides = [1, 1]} : vector<8x512xf32> to vector<8x128xf32>
    %295 = arith.negf %294 : vector<8x128xf32>
    %296 = math.exp %295 : vector<8x128xf32>
    %cst_130 = arith.constant 1.000000e+00 : f32
    %297 = vector.broadcast %cst_130 : f32 to vector<8x128xf32>
    %298 = arith.addf %297, %296 : vector<8x128xf32>
    %299 = arith.divf %297, %298 : vector<8x128xf32>
    %300 = vector.extract_strided_slice %293 {offsets = [0, 128], sizes = [8, 128], strides = [1, 1]} : vector<8x512xf32> to vector<8x128xf32>
    %301 = arith.negf %300 : vector<8x128xf32>
    %302 = math.exp %301 : vector<8x128xf32>
    %cst_131 = arith.constant 1.000000e+00 : f32
    %303 = vector.broadcast %cst_131 : f32 to vector<8x128xf32>
    %304 = arith.addf %303, %302 : vector<8x128xf32>
    %305 = arith.divf %303, %304 : vector<8x128xf32>
    %306 = vector.extract_strided_slice %293 {offsets = [0, 256], sizes = [8, 128], strides = [1, 1]} : vector<8x512xf32> to vector<8x128xf32>
    %307 = math.tanh %306 : vector<8x128xf32>
    %308 = vector.extract_strided_slice %293 {offsets = [0, 384], sizes = [8, 128], strides = [1, 1]} : vector<8x512xf32> to vector<8x128xf32>
    %309 = arith.negf %308 : vector<8x128xf32>
    %310 = math.exp %309 : vector<8x128xf32>
    %cst_132 = arith.constant 1.000000e+00 : f32
    %311 = vector.broadcast %cst_132 : f32 to vector<8x128xf32>
    %312 = arith.addf %311, %310 : vector<8x128xf32>
    %313 = arith.divf %311, %312 : vector<8x128xf32>
    %c0_133 = arith.constant 0 : index
    %c0_134 = arith.constant 0 : index
    %314 = vector.load %arg11[%c0_133, %c0_134] : memref<8x128xf32, #tpu.memory_space<vmem>>, vector<8x128xf32>
    %315 = arith.mulf %305, %314 : vector<8x128xf32>
    %316 = arith.mulf %299, %307 : vector<8x128xf32>
    %317 = arith.addf %315, %316 : vector<8x128xf32>
    %318 = math.tanh %317 : vector<8x128xf32>
    %319 = arith.mulf %313, %318 : vector<8x128xf32>
    %c0_135 = arith.constant 0 : index
    %c0_136 = arith.constant 0 : index
    %320 = vector.load %arg11[%c0_135, %c0_136] : memref<8x128xf32, #tpu.memory_space<vmem>>, vector<8x128xf32>
    tpu.vector_store %arg11[%c0_135, %c0_136], %317 {strides = array<i32>} : memref<8x128xf32, #tpu.memory_space<vmem>>, vector<8x128xf32>,
    %c0_137 = arith.constant 0 : index
    %c0_138 = arith.constant 0 : index
    %321 = vector.load %arg10[%c0_137, %c0_138] : memref<8x128xf32, #tpu.memory_space<vmem>>, vector<8x128xf32>
    tpu.vector_store %arg10[%c0_137, %c0_138], %319 {strides = array<i32>} : memref<8x128xf32, #tpu.memory_space<vmem>>, vector<8x128xf32>,
    %322 = arith.index_cast %c7_i32 : i32 to index
    %c0_139 = arith.constant 0 : index
    %c0_140 = arith.constant 0 : index
    %323 = vector.load %arg9[%322, %c0_139, %c0_140] : memref<13x8x128xf32, #tpu.memory_space<vmem>>, vector<1x8x128xf32>
    %324 = vector.shape_cast %323 : vector<1x8x128xf32> to vector<8x128xf32>
    %325 = vector.shape_cast %319 : vector<8x128xf32> to vector<1x8x128xf32>
    tpu.vector_store %arg9[%322, %c0_139, %c0_140], %325 {strides = array<i32>} : memref<13x8x128xf32, #tpu.memory_space<vmem>>, vector<1x8x128xf32>,
    %c8_i32 = arith.constant 8 : i32
    %326 = arith.index_cast %c8_i32 : i32 to index
    %c0_141 = arith.constant 0 : index
    %c0_142 = arith.constant 0 : index
    %327 = vector.load %arg12[%326, %c0_141, %c0_142] : memref<13x8x512xf32, #tpu.memory_space<vmem>>, vector<1x8x512xf32>
    %328 = vector.shape_cast %327 : vector<1x8x512xf32> to vector<8x512xf32>
    %c0_143 = arith.constant 0 : index
    %c0_144 = arith.constant 0 : index
    %329 = vector.load %arg10[%c0_143, %c0_144] : memref<8x128xf32, #tpu.memory_space<vmem>>, vector<8x128xf32>
    %330 = arith.truncf %329 : vector<8x128xf32> to vector<8x128xbf16>
    %cst_145 = arith.constant dense<0.000000e+00> : vector<8x512xf32>
    %331 = tpu.matmul %330, %13, %cst_145 {dimension_numbers = #tpu.dot_dimension_numbers<[1], [0], [0], [1], [0, 0, 1, 1], [], []>} : vector<8x128xbf16>, vector<128x512xbf16>, vector<8x512xf32> -> vector<8x512xf32>
    %332 = arith.addf %328, %331 : vector<8x512xf32>
    %333 = vector.extract_strided_slice %332 {offsets = [0, 0], sizes = [8, 128], strides = [1, 1]} : vector<8x512xf32> to vector<8x128xf32>
    %334 = arith.negf %333 : vector<8x128xf32>
    %335 = math.exp %334 : vector<8x128xf32>
    %cst_146 = arith.constant 1.000000e+00 : f32
    %336 = vector.broadcast %cst_146 : f32 to vector<8x128xf32>
    %337 = arith.addf %336, %335 : vector<8x128xf32>
    %338 = arith.divf %336, %337 : vector<8x128xf32>
    %339 = vector.extract_strided_slice %332 {offsets = [0, 128], sizes = [8, 128], strides = [1, 1]} : vector<8x512xf32> to vector<8x128xf32>
    %340 = arith.negf %339 : vector<8x128xf32>
    %341 = math.exp %340 : vector<8x128xf32>
    %cst_147 = arith.constant 1.000000e+00 : f32
    %342 = vector.broadcast %cst_147 : f32 to vector<8x128xf32>
    %343 = arith.addf %342, %341 : vector<8x128xf32>
    %344 = arith.divf %342, %343 : vector<8x128xf32>
    %345 = vector.extract_strided_slice %332 {offsets = [0, 256], sizes = [8, 128], strides = [1, 1]} : vector<8x512xf32> to vector<8x128xf32>
    %346 = math.tanh %345 : vector<8x128xf32>
    %347 = vector.extract_strided_slice %332 {offsets = [0, 384], sizes = [8, 128], strides = [1, 1]} : vector<8x512xf32> to vector<8x128xf32>
    %348 = arith.negf %347 : vector<8x128xf32>
    %349 = math.exp %348 : vector<8x128xf32>
    %cst_148 = arith.constant 1.000000e+00 : f32
    %350 = vector.broadcast %cst_148 : f32 to vector<8x128xf32>
    %351 = arith.addf %350, %349 : vector<8x128xf32>
    %352 = arith.divf %350, %351 : vector<8x128xf32>
    %c0_149 = arith.constant 0 : index
    %c0_150 = arith.constant 0 : index
    %353 = vector.load %arg11[%c0_149, %c0_150] : memref<8x128xf32, #tpu.memory_space<vmem>>, vector<8x128xf32>
    %354 = arith.mulf %344, %353 : vector<8x128xf32>
    %355 = arith.mulf %338, %346 : vector<8x128xf32>
    %356 = arith.addf %354, %355 : vector<8x128xf32>
    %357 = math.tanh %356 : vector<8x128xf32>
    %358 = arith.mulf %352, %357 : vector<8x128xf32>
    %c0_151 = arith.constant 0 : index
    %c0_152 = arith.constant 0 : index
    %359 = vector.load %arg11[%c0_151, %c0_152] : memref<8x128xf32, #tpu.memory_space<vmem>>, vector<8x128xf32>
    tpu.vector_store %arg11[%c0_151, %c0_152], %356 {strides = array<i32>} : memref<8x128xf32, #tpu.memory_space<vmem>>, vector<8x128xf32>,
    %c0_153 = arith.constant 0 : index
    %c0_154 = arith.constant 0 : index
    %360 = vector.load %arg10[%c0_153, %c0_154] : memref<8x128xf32, #tpu.memory_space<vmem>>, vector<8x128xf32>
    tpu.vector_store %arg10[%c0_153, %c0_154], %358 {strides = array<i32>} : memref<8x128xf32, #tpu.memory_space<vmem>>, vector<8x128xf32>,
    %361 = arith.index_cast %c8_i32 : i32 to index
    %c0_155 = arith.constant 0 : index
    %c0_156 = arith.constant 0 : index
    %362 = vector.load %arg9[%361, %c0_155, %c0_156] : memref<13x8x128xf32, #tpu.memory_space<vmem>>, vector<1x8x128xf32>
    %363 = vector.shape_cast %362 : vector<1x8x128xf32> to vector<8x128xf32>
    %364 = vector.shape_cast %358 : vector<8x128xf32> to vector<1x8x128xf32>
    tpu.vector_store %arg9[%361, %c0_155, %c0_156], %364 {strides = array<i32>} : memref<13x8x128xf32, #tpu.memory_space<vmem>>, vector<1x8x128xf32>,
    %c9_i32 = arith.constant 9 : i32
    %365 = arith.index_cast %c9_i32 : i32 to index
    %c0_157 = arith.constant 0 : index
    %c0_158 = arith.constant 0 : index
    %366 = vector.load %arg12[%365, %c0_157, %c0_158] : memref<13x8x512xf32, #tpu.memory_space<vmem>>, vector<1x8x512xf32>
    %367 = vector.shape_cast %366 : vector<1x8x512xf32> to vector<8x512xf32>
    %c0_159 = arith.constant 0 : index
    %c0_160 = arith.constant 0 : index
    %368 = vector.load %arg10[%c0_159, %c0_160] : memref<8x128xf32, #tpu.memory_space<vmem>>, vector<8x128xf32>
    %369 = arith.truncf %368 : vector<8x128xf32> to vector<8x128xbf16>
    %cst_161 = arith.constant dense<0.000000e+00> : vector<8x512xf32>
    %370 = tpu.matmul %369, %13, %cst_161 {dimension_numbers = #tpu.dot_dimension_numbers<[1], [0], [0], [1], [0, 0, 1, 1], [], []>} : vector<8x128xbf16>, vector<128x512xbf16>, vector<8x512xf32> -> vector<8x512xf32>
    %371 = arith.addf %367, %370 : vector<8x512xf32>
    %372 = vector.extract_strided_slice %371 {offsets = [0, 0], sizes = [8, 128], strides = [1, 1]} : vector<8x512xf32> to vector<8x128xf32>
    %373 = arith.negf %372 : vector<8x128xf32>
    %374 = math.exp %373 : vector<8x128xf32>
    %cst_162 = arith.constant 1.000000e+00 : f32
    %375 = vector.broadcast %cst_162 : f32 to vector<8x128xf32>
    %376 = arith.addf %375, %374 : vector<8x128xf32>
    %377 = arith.divf %375, %376 : vector<8x128xf32>
    %378 = vector.extract_strided_slice %371 {offsets = [0, 128], sizes = [8, 128], strides = [1, 1]} : vector<8x512xf32> to vector<8x128xf32>
    %379 = arith.negf %378 : vector<8x128xf32>
    %380 = math.exp %379 : vector<8x128xf32>
    %cst_163 = arith.constant 1.000000e+00 : f32
    %381 = vector.broadcast %cst_163 : f32 to vector<8x128xf32>
    %382 = arith.addf %381, %380 : vector<8x128xf32>
    %383 = arith.divf %381, %382 : vector<8x128xf32>
    %384 = vector.extract_strided_slice %371 {offsets = [0, 256], sizes = [8, 128], strides = [1, 1]} : vector<8x512xf32> to vector<8x128xf32>
    %385 = math.tanh %384 : vector<8x128xf32>
    %386 = vector.extract_strided_slice %371 {offsets = [0, 384], sizes = [8, 128], strides = [1, 1]} : vector<8x512xf32> to vector<8x128xf32>
    %387 = arith.negf %386 : vector<8x128xf32>
    %388 = math.exp %387 : vector<8x128xf32>
    %cst_164 = arith.constant 1.000000e+00 : f32
    %389 = vector.broadcast %cst_164 : f32 to vector<8x128xf32>
    %390 = arith.addf %389, %388 : vector<8x128xf32>
    %391 = arith.divf %389, %390 : vector<8x128xf32>
    %c0_165 = arith.constant 0 : index
    %c0_166 = arith.constant 0 : index
    %392 = vector.load %arg11[%c0_165, %c0_166] : memref<8x128xf32, #tpu.memory_space<vmem>>, vector<8x128xf32>
    %393 = arith.mulf %383, %392 : vector<8x128xf32>
    %394 = arith.mulf %377, %385 : vector<8x128xf32>
    %395 = arith.addf %393, %394 : vector<8x128xf32>
    %396 = math.tanh %395 : vector<8x128xf32>
    %397 = arith.mulf %391, %396 : vector<8x128xf32>
    %c0_167 = arith.constant 0 : index
    %c0_168 = arith.constant 0 : index
    %398 = vector.load %arg11[%c0_167, %c0_168] : memref<8x128xf32, #tpu.memory_space<vmem>>, vector<8x128xf32>
    tpu.vector_store %arg11[%c0_167, %c0_168], %395 {strides = array<i32>} : memref<8x128xf32, #tpu.memory_space<vmem>>, vector<8x128xf32>,
    %c0_169 = arith.constant 0 : index
    %c0_170 = arith.constant 0 : index
    %399 = vector.load %arg10[%c0_169, %c0_170] : memref<8x128xf32, #tpu.memory_space<vmem>>, vector<8x128xf32>
    tpu.vector_store %arg10[%c0_169, %c0_170], %397 {strides = array<i32>} : memref<8x128xf32, #tpu.memory_space<vmem>>, vector<8x128xf32>,
    %400 = arith.index_cast %c9_i32 : i32 to index
    %c0_171 = arith.constant 0 : index
    %c0_172 = arith.constant 0 : index
    %401 = vector.load %arg9[%400, %c0_171, %c0_172] : memref<13x8x128xf32, #tpu.memory_space<vmem>>, vector<1x8x128xf32>
    %402 = vector.shape_cast %401 : vector<1x8x128xf32> to vector<8x128xf32>
    %403 = vector.shape_cast %397 : vector<8x128xf32> to vector<1x8x128xf32>
    tpu.vector_store %arg9[%400, %c0_171, %c0_172], %403 {strides = array<i32>} : memref<13x8x128xf32, #tpu.memory_space<vmem>>, vector<1x8x128xf32>,
    %c10_i32 = arith.constant 10 : i32
    %404 = arith.index_cast %c10_i32 : i32 to index
    %c0_173 = arith.constant 0 : index
    %c0_174 = arith.constant 0 : index
    %405 = vector.load %arg12[%404, %c0_173, %c0_174] : memref<13x8x512xf32, #tpu.memory_space<vmem>>, vector<1x8x512xf32>
    %406 = vector.shape_cast %405 : vector<1x8x512xf32> to vector<8x512xf32>
    %c0_175 = arith.constant 0 : index
    %c0_176 = arith.constant 0 : index
    %407 = vector.load %arg10[%c0_175, %c0_176] : memref<8x128xf32, #tpu.memory_space<vmem>>, vector<8x128xf32>
    %408 = arith.truncf %407 : vector<8x128xf32> to vector<8x128xbf16>
    %cst_177 = arith.constant dense<0.000000e+00> : vector<8x512xf32>
    %409 = tpu.matmul %408, %13, %cst_177 {dimension_numbers = #tpu.dot_dimension_numbers<[1], [0], [0], [1], [0, 0, 1, 1], [], []>} : vector<8x128xbf16>, vector<128x512xbf16>, vector<8x512xf32> -> vector<8x512xf32>
    %410 = arith.addf %406, %409 : vector<8x512xf32>
    %411 = vector.extract_strided_slice %410 {offsets = [0, 0], sizes = [8, 128], strides = [1, 1]} : vector<8x512xf32> to vector<8x128xf32>
    %412 = arith.negf %411 : vector<8x128xf32>
    %413 = math.exp %412 : vector<8x128xf32>
    %cst_178 = arith.constant 1.000000e+00 : f32
    %414 = vector.broadcast %cst_178 : f32 to vector<8x128xf32>
    %415 = arith.addf %414, %413 : vector<8x128xf32>
    %416 = arith.divf %414, %415 : vector<8x128xf32>
    %417 = vector.extract_strided_slice %410 {offsets = [0, 128], sizes = [8, 128], strides = [1, 1]} : vector<8x512xf32> to vector<8x128xf32>
    %418 = arith.negf %417 : vector<8x128xf32>
    %419 = math.exp %418 : vector<8x128xf32>
    %cst_179 = arith.constant 1.000000e+00 : f32
    %420 = vector.broadcast %cst_179 : f32 to vector<8x128xf32>
    %421 = arith.addf %420, %419 : vector<8x128xf32>
    %422 = arith.divf %420, %421 : vector<8x128xf32>
    %423 = vector.extract_strided_slice %410 {offsets = [0, 256], sizes = [8, 128], strides = [1, 1]} : vector<8x512xf32> to vector<8x128xf32>
    %424 = math.tanh %423 : vector<8x128xf32>
    %425 = vector.extract_strided_slice %410 {offsets = [0, 384], sizes = [8, 128], strides = [1, 1]} : vector<8x512xf32> to vector<8x128xf32>
    %426 = arith.negf %425 : vector<8x128xf32>
    %427 = math.exp %426 : vector<8x128xf32>
    %cst_180 = arith.constant 1.000000e+00 : f32
    %428 = vector.broadcast %cst_180 : f32 to vector<8x128xf32>
    %429 = arith.addf %428, %427 : vector<8x128xf32>
    %430 = arith.divf %428, %429 : vector<8x128xf32>
    %c0_181 = arith.constant 0 : index
    %c0_182 = arith.constant 0 : index
    %431 = vector.load %arg11[%c0_181, %c0_182] : memref<8x128xf32, #tpu.memory_space<vmem>>, vector<8x128xf32>
    %432 = arith.mulf %422, %431 : vector<8x128xf32>
    %433 = arith.mulf %416, %424 : vector<8x128xf32>
    %434 = arith.addf %432, %433 : vector<8x128xf32>
    %435 = math.tanh %434 : vector<8x128xf32>
    %436 = arith.mulf %430, %435 : vector<8x128xf32>
    %c0_183 = arith.constant 0 : index
    %c0_184 = arith.constant 0 : index
    %437 = vector.load %arg11[%c0_183, %c0_184] : memref<8x128xf32, #tpu.memory_space<vmem>>, vector<8x128xf32>
    tpu.vector_store %arg11[%c0_183, %c0_184], %434 {strides = array<i32>} : memref<8x128xf32, #tpu.memory_space<vmem>>, vector<8x128xf32>,
    %c0_185 = arith.constant 0 : index
    %c0_186 = arith.constant 0 : index
    %438 = vector.load %arg10[%c0_185, %c0_186] : memref<8x128xf32, #tpu.memory_space<vmem>>, vector<8x128xf32>
    tpu.vector_store %arg10[%c0_185, %c0_186], %436 {strides = array<i32>} : memref<8x128xf32, #tpu.memory_space<vmem>>, vector<8x128xf32>,
    %439 = arith.index_cast %c10_i32 : i32 to index
    %c0_187 = arith.constant 0 : index
    %c0_188 = arith.constant 0 : index
    %440 = vector.load %arg9[%439, %c0_187, %c0_188] : memref<13x8x128xf32, #tpu.memory_space<vmem>>, vector<1x8x128xf32>
    %441 = vector.shape_cast %440 : vector<1x8x128xf32> to vector<8x128xf32>
    %442 = vector.shape_cast %436 : vector<8x128xf32> to vector<1x8x128xf32>
    tpu.vector_store %arg9[%439, %c0_187, %c0_188], %442 {strides = array<i32>} : memref<13x8x128xf32, #tpu.memory_space<vmem>>, vector<1x8x128xf32>,
    %c11_i32 = arith.constant 11 : i32
    %443 = arith.index_cast %c11_i32 : i32 to index
    %c0_189 = arith.constant 0 : index
    %c0_190 = arith.constant 0 : index
    %444 = vector.load %arg12[%443, %c0_189, %c0_190] : memref<13x8x512xf32, #tpu.memory_space<vmem>>, vector<1x8x512xf32>
    %445 = vector.shape_cast %444 : vector<1x8x512xf32> to vector<8x512xf32>
    %c0_191 = arith.constant 0 : index
    %c0_192 = arith.constant 0 : index
    %446 = vector.load %arg10[%c0_191, %c0_192] : memref<8x128xf32, #tpu.memory_space<vmem>>, vector<8x128xf32>
    %447 = arith.truncf %446 : vector<8x128xf32> to vector<8x128xbf16>
    %cst_193 = arith.constant dense<0.000000e+00> : vector<8x512xf32>
    %448 = tpu.matmul %447, %13, %cst_193 {dimension_numbers = #tpu.dot_dimension_numbers<[1], [0], [0], [1], [0, 0, 1, 1], [], []>} : vector<8x128xbf16>, vector<128x512xbf16>, vector<8x512xf32> -> vector<8x512xf32>
    %449 = arith.addf %445, %448 : vector<8x512xf32>
    %450 = vector.extract_strided_slice %449 {offsets = [0, 0], sizes = [8, 128], strides = [1, 1]} : vector<8x512xf32> to vector<8x128xf32>
    %451 = arith.negf %450 : vector<8x128xf32>
    %452 = math.exp %451 : vector<8x128xf32>
    %cst_194 = arith.constant 1.000000e+00 : f32
    %453 = vector.broadcast %cst_194 : f32 to vector<8x128xf32>
    %454 = arith.addf %453, %452 : vector<8x128xf32>
    %455 = arith.divf %453, %454 : vector<8x128xf32>
    %456 = vector.extract_strided_slice %449 {offsets = [0, 128], sizes = [8, 128], strides = [1, 1]} : vector<8x512xf32> to vector<8x128xf32>
    %457 = arith.negf %456 : vector<8x128xf32>
    %458 = math.exp %457 : vector<8x128xf32>
    %cst_195 = arith.constant 1.000000e+00 : f32
    %459 = vector.broadcast %cst_195 : f32 to vector<8x128xf32>
    %460 = arith.addf %459, %458 : vector<8x128xf32>
    %461 = arith.divf %459, %460 : vector<8x128xf32>
    %462 = vector.extract_strided_slice %449 {offsets = [0, 256], sizes = [8, 128], strides = [1, 1]} : vector<8x512xf32> to vector<8x128xf32>
    %463 = math.tanh %462 : vector<8x128xf32>
    %464 = vector.extract_strided_slice %449 {offsets = [0, 384], sizes = [8, 128], strides = [1, 1]} : vector<8x512xf32> to vector<8x128xf32>
    %465 = arith.negf %464 : vector<8x128xf32>
    %466 = math.exp %465 : vector<8x128xf32>
    %cst_196 = arith.constant 1.000000e+00 : f32
    %467 = vector.broadcast %cst_196 : f32 to vector<8x128xf32>
    %468 = arith.addf %467, %466 : vector<8x128xf32>
    %469 = arith.divf %467, %468 : vector<8x128xf32>
    %c0_197 = arith.constant 0 : index
    %c0_198 = arith.constant 0 : index
    %470 = vector.load %arg11[%c0_197, %c0_198] : memref<8x128xf32, #tpu.memory_space<vmem>>, vector<8x128xf32>
    %471 = arith.mulf %461, %470 : vector<8x128xf32>
    %472 = arith.mulf %455, %463 : vector<8x128xf32>
    %473 = arith.addf %471, %472 : vector<8x128xf32>
    %474 = math.tanh %473 : vector<8x128xf32>
    %475 = arith.mulf %469, %474 : vector<8x128xf32>
    %c0_199 = arith.constant 0 : index
    %c0_200 = arith.constant 0 : index
    %476 = vector.load %arg11[%c0_199, %c0_200] : memref<8x128xf32, #tpu.memory_space<vmem>>, vector<8x128xf32>
    tpu.vector_store %arg11[%c0_199, %c0_200], %473 {strides = array<i32>} : memref<8x128xf32, #tpu.memory_space<vmem>>, vector<8x128xf32>,
    %c0_201 = arith.constant 0 : index
    %c0_202 = arith.constant 0 : index
    %477 = vector.load %arg10[%c0_201, %c0_202] : memref<8x128xf32, #tpu.memory_space<vmem>>, vector<8x128xf32>
    tpu.vector_store %arg10[%c0_201, %c0_202], %475 {strides = array<i32>} : memref<8x128xf32, #tpu.memory_space<vmem>>, vector<8x128xf32>,
    %478 = arith.index_cast %c11_i32 : i32 to index
    %c0_203 = arith.constant 0 : index
    %c0_204 = arith.constant 0 : index
    %479 = vector.load %arg9[%478, %c0_203, %c0_204] : memref<13x8x128xf32, #tpu.memory_space<vmem>>, vector<1x8x128xf32>
    %480 = vector.shape_cast %479 : vector<1x8x128xf32> to vector<8x128xf32>
    %481 = vector.shape_cast %475 : vector<8x128xf32> to vector<1x8x128xf32>
    tpu.vector_store %arg9[%478, %c0_203, %c0_204], %481 {strides = array<i32>} : memref<13x8x128xf32, #tpu.memory_space<vmem>>, vector<1x8x128xf32>,
    %c12_i32 = arith.constant 12 : i32
    %482 = arith.index_cast %c12_i32 : i32 to index
    %c0_205 = arith.constant 0 : index
    %c0_206 = arith.constant 0 : index
    %483 = vector.load %arg12[%482, %c0_205, %c0_206] : memref<13x8x512xf32, #tpu.memory_space<vmem>>, vector<1x8x512xf32>
    %484 = vector.shape_cast %483 : vector<1x8x512xf32> to vector<8x512xf32>
    %c0_207 = arith.constant 0 : index
    %c0_208 = arith.constant 0 : index
    %485 = vector.load %arg10[%c0_207, %c0_208] : memref<8x128xf32, #tpu.memory_space<vmem>>, vector<8x128xf32>
    %486 = arith.truncf %485 : vector<8x128xf32> to vector<8x128xbf16>
    %cst_209 = arith.constant dense<0.000000e+00> : vector<8x512xf32>
    %487 = tpu.matmul %486, %13, %cst_209 {dimension_numbers = #tpu.dot_dimension_numbers<[1], [0], [0], [1], [0, 0, 1, 1], [], []>} : vector<8x128xbf16>, vector<128x512xbf16>, vector<8x512xf32> -> vector<8x512xf32>
    %488 = arith.addf %484, %487 : vector<8x512xf32>
    %489 = vector.extract_strided_slice %488 {offsets = [0, 0], sizes = [8, 128], strides = [1, 1]} : vector<8x512xf32> to vector<8x128xf32>
    %490 = arith.negf %489 : vector<8x128xf32>
    %491 = math.exp %490 : vector<8x128xf32>
    %cst_210 = arith.constant 1.000000e+00 : f32
    %492 = vector.broadcast %cst_210 : f32 to vector<8x128xf32>
    %493 = arith.addf %492, %491 : vector<8x128xf32>
    %494 = arith.divf %492, %493 : vector<8x128xf32>
    %495 = vector.extract_strided_slice %488 {offsets = [0, 128], sizes = [8, 128], strides = [1, 1]} : vector<8x512xf32> to vector<8x128xf32>
    %496 = arith.negf %495 : vector<8x128xf32>
    %497 = math.exp %496 : vector<8x128xf32>
    %cst_211 = arith.constant 1.000000e+00 : f32
    %498 = vector.broadcast %cst_211 : f32 to vector<8x128xf32>
    %499 = arith.addf %498, %497 : vector<8x128xf32>
    %500 = arith.divf %498, %499 : vector<8x128xf32>
    %501 = vector.extract_strided_slice %488 {offsets = [0, 256], sizes = [8, 128], strides = [1, 1]} : vector<8x512xf32> to vector<8x128xf32>
    %502 = math.tanh %501 : vector<8x128xf32>
    %503 = vector.extract_strided_slice %488 {offsets = [0, 384], sizes = [8, 128], strides = [1, 1]} : vector<8x512xf32> to vector<8x128xf32>
    %504 = arith.negf %503 : vector<8x128xf32>
    %505 = math.exp %504 : vector<8x128xf32>
    %cst_212 = arith.constant 1.000000e+00 : f32
    %506 = vector.broadcast %cst_212 : f32 to vector<8x128xf32>
    %507 = arith.addf %506, %505 : vector<8x128xf32>
    %508 = arith.divf %506, %507 : vector<8x128xf32>
    %c0_213 = arith.constant 0 : index
    %c0_214 = arith.constant 0 : index
    %509 = vector.load %arg11[%c0_213, %c0_214] : memref<8x128xf32, #tpu.memory_space<vmem>>, vector<8x128xf32>
    %510 = arith.mulf %500, %509 : vector<8x128xf32>
    %511 = arith.mulf %494, %502 : vector<8x128xf32>
    %512 = arith.addf %510, %511 : vector<8x128xf32>
    %513 = math.tanh %512 : vector<8x128xf32>
    %514 = arith.mulf %508, %513 : vector<8x128xf32>
    %c0_215 = arith.constant 0 : index
    %c0_216 = arith.constant 0 : index
    %515 = vector.load %arg11[%c0_215, %c0_216] : memref<8x128xf32, #tpu.memory_space<vmem>>, vector<8x128xf32>
    tpu.vector_store %arg11[%c0_215, %c0_216], %512 {strides = array<i32>} : memref<8x128xf32, #tpu.memory_space<vmem>>, vector<8x128xf32>,
    %c0_217 = arith.constant 0 : index
    %c0_218 = arith.constant 0 : index
    %516 = vector.load %arg10[%c0_217, %c0_218] : memref<8x128xf32, #tpu.memory_space<vmem>>, vector<8x128xf32>
    tpu.vector_store %arg10[%c0_217, %c0_218], %514 {strides = array<i32>} : memref<8x128xf32, #tpu.memory_space<vmem>>, vector<8x128xf32>,
    %517 = arith.index_cast %c12_i32 : i32 to index
    %c0_219 = arith.constant 0 : index
    %c0_220 = arith.constant 0 : index
    %518 = vector.load %arg9[%517, %c0_219, %c0_220] : memref<13x8x128xf32, #tpu.memory_space<vmem>>, vector<1x8x128xf32>
    %519 = vector.shape_cast %518 : vector<1x8x128xf32> to vector<8x128xf32>
    %520 = vector.shape_cast %514 : vector<8x128xf32> to vector<1x8x128xf32>
    tpu.vector_store %arg9[%517, %c0_219, %c0_220], %520 {strides = array<i32>} : memref<13x8x128xf32, #tpu.memory_space<vmem>>, vector<1x8x128xf32>,
    %c13_i32 = arith.constant 13 : i32
    return
  }
  func.func @transform_0(%arg0: i32, %arg1: i32) -> (i32, i32) {
    %c0_i32 = arith.constant 0 : i32
    %c0_i32_0 = arith.constant 0 : i32
    return %arg0, %c0_i32 : i32, i32
  }
  func.func @transform_1(%arg0: i32, %arg1: i32) -> (i32, i32) {
    %c0_i32 = arith.constant 0 : i32
    %c0_i32_0 = arith.constant 0 : i32
    %c0_i32_1 = arith.constant 0 : i32
    return %c0_i32, %c0_i32_0 : i32, i32
  }
  func.func @transform_2(%arg0: i32, %arg1: i32) -> (i32, i32) {
    %c0_i32 = arith.constant 0 : i32
    %c0_i32_0 = arith.constant 0 : i32
    %c0_i32_1 = arith.constant 0 : i32
    return %c0_i32, %c0_i32_0 : i32, i32
  }
  func.func @transform_3(%arg0: i32, %arg1: i32) -> (i32, i32, i32) {
    %c0_i32 = arith.constant 0 : i32
    %c0_i32_0 = arith.constant 0 : i32
    return %arg1, %arg0, %c0_i32 : i32, i32, i32
  }
  func.func @transform_4(%arg0: i32, %arg1: i32) -> (i32, i32) {
    %c0_i32 = arith.constant 0 : i32
    %c0_i32_0 = arith.constant 0 : i32
    %c0_i32_1 = arith.constant 0 : i32
    return %c0_i32, %c0_i32_0 : i32, i32
  }
  func.func @transform_5(%arg0: i32, %arg1: i32) -> (i32, i32) {
    %c0_i32 = arith.constant 0 : i32
    %c0_i32_0 = arith.constant 0 : i32
    %c0_i32_1 = arith.constant 0 : i32
    return %c0_i32, %c0_i32_0 : i32, i32
  }
  func.func @transform_6(%arg0: i32, %arg1: i32) -> (i32, i32) {
    %c0_i32 = arith.constant 0 : i32
    %c0_i32_0 = arith.constant 0 : i32
    %c0_i32_1 = arith.constant 0 : i32
    return %c0_i32, %c0_i32_0 : i32, i32
  }
  func.func @transform_7(%arg0: i32, %arg1: i32) -> (i32, i32, i32) {
    %c0_i32 = arith.constant 0 : i32
    %c0_i32_0 = arith.constant 0 : i32
    return %arg1, %arg0, %c0_i32 : i32, i32, i32
  }
}

</mosaic_0001>

<llo_original>
// kernel: squeeze.1
$region0: #{squeeze.1}
  %s0 = inlined_call_operand.vmem [shape: f32[72], index: 0, kind: input, shape index: {}]
  %s1 = inlined_call_operand.vmem [shape: f32[12,6], index: 1, kind: output, shape index: {}]
  $region1: #{squeeze.1} parent=0
    #allocation0 [shape = 'u8[4096]{0}', space=vmem, size = 0x1000, scoped, tag = 'scoped mem for input reshape']
    %s3 = sshll.u32 1, 1
    %s4 = ssub.s32 %s3, 1
    %v5 = vld [vmem:[%s0] sm:%s4]
    %6 = vst [vmem:[#allocation0] sm:%s4] %v5
    %v7 = vld [vmem:[#allocation0] sm:$0x1]
    %vm8 = vcmask 48128
    %9 = vst.msk [vmem:[%s1] sm:$0x1] %vm8, %v7
    %v10 = vld [vmem:[#allocation0] sm:$0x1]
    %11 = vrot.lane.b32.xlu0 %v10, 122
    %v12 = vpop.permute.xlu0 %11
    %vm13 = vcmask 48128
    %s14 = scalar_lea.vmem %s1, 1
    %15 = vst.msk [vmem:[%s14] sm:$0x1] %vm13, %v12
    %v16 = vld [vmem:[#allocation0] sm:$0x1]
    %17 = vrot.lane.b32.xlu0 %v16, 116
    %v18 = vpop.permute.xlu0 %17
    %vm19 = vcmask 48128
    %s20 = scalar_lea.vmem %s1, 2
    %21 = vst.msk [vmem:[%s20] sm:$0x1] %vm19, %v18
    %v22 = vld [vmem:[#allocation0] sm:$0x1]
    %23 = vrot.lane.b32.xlu0 %v22, 110
    %v24 = vpop.permute.xlu0 %23
    %vm25 = vcmask 48128
    %s26 = scalar_lea.vmem %s1, 3
    %27 = vst.msk [vmem:[%s26] sm:$0x1] %vm25, %v24
    %v28 = vld [vmem:[#allocation0] sm:$0x1]
    %29 = vrot.lane.b32.xlu0 %v28, 104
    %v30 = vpop.permute.xlu0 %29
    %vm31 = vcmask 48128
    %s32 = scalar_lea.vmem %s1, 4
    %33 = vst.msk [vmem:[%s32] sm:$0x1] %vm31, %v30
    %v34 = vld [vmem:[#allocation0] sm:$0x1]
    %35 = vrot.lane.b32.xlu0 %v34, 98
    %v36 = vpop.permute.xlu0 %35
    %vm37 = vcmask 48128
    %s38 = scalar_lea.vmem %s1, 5
    %39 = vst.msk [vmem:[%s38] sm:$0x1] %vm37, %v36
    %v40 = vld [vmem:[#allocation0] sm:$0x1]
    %41 = vrot.lane.b32.xlu0 %v40, 92
    %v42 = vpop.permute.xlu0 %41
    %vm43 = vcmask 48128
    %s44 = scalar_lea.vmem %s1, 6
    %45 = vst.msk [vmem:[%s44] sm:$0x1] %vm43, %v42
    %v46 = vld [vmem:[#allocation0] sm:$0x1]
    %47 = vrot.lane.b32.xlu0 %v46, 86
    %v48 = vpop.permute.xlu0 %47
    %vm49 = vcmask 48128
    %s50 = scalar_lea.vmem %s1, 7
    %51 = vst.msk [vmem:[%s50] sm:$0x1] %vm49, %v48
    %v52 = vld [vmem:[#allocation0] sm:$0x1]
    %53 = vrot.lane.b32.xlu0 %v52, 80
    %v54 = vpop.permute.xlu0 %53
    %vm55 = vcmask 48128
    %s56 = scalar_lea.vmem %s1, 8
    %57 = vst.msk [vmem:[%s56] sm:$0x1] %vm55, %v54
    %v58 = vld [vmem:[#allocation0] sm:$0x1]
    %59 = vrot.lane.b32.xlu0 %v58, 74
    %v60 = vpop.permute.xlu0 %59
    %vm61 = vcmask 48128
    %s62 = scalar_lea.vmem %s1, 9
    %63 = vst.msk [vmem:[%s62] sm:$0x1] %vm61, %v60
    %v64 = vld [vmem:[#allocation0] sm:$0x1]
    %65 = vrot.lane.b32.xlu0 %v64, 68
    %v66 = vpop.permute.xlu0 %65
    %vm67 = vcmask 48128
    %s68 = scalar_lea.vmem %s1, 10
    %69 = vst.msk [vmem:[%s68] sm:$0x1] %vm67, %v66
    %v70 = vld [vmem:[#allocation0] sm:$0x1]
    %71 = vrot.lane.b32.xlu0 %v70, 62
    %v72 = vpop.permute.xlu0 %71
    %vm73 = vcmask 48128
    %s74 = scalar_lea.vmem %s1, 11
    %75 = vst.msk [vmem:[%s74] sm:$0x1] %vm73, %v72

// kernel: yz_lstm_forward.3
$region0: #{yz_lstm_forward.3}
  #allocation0 [shape = 'u32[]', space=smem, size = 0x4, offset = 0x4, fixed_abs, tag = 'smem constant byte address 0x4 - core index']
  #allocation1 [shape = 'u32[144,128]{1,0:T(1,128)}', space=vmem, size = 0x12000, scoped, tag = 'internal scratch']
  #allocation2 [shape = 'f32[72,1]{1,0:T(8,128)}', space=vmem, size = 0x9000, scoped, tag = 'scratch operand']
  #allocation3 [shape = 'f32[72,1]{1,0:T(8,128)}', space=vmem, size = 0x9000, scoped, tag = 'scratch operand']
  #allocation4 [shape = 'f32[72,1]{1,0:T(8,128)}', space=vmem, size = 0x9000, scoped, tag = 'scratch operand']
  %s0 = inlined_call_operand.vmem [shape: f32[72,128], index: 0, kind: input, shape index: {}]
  %s1 = inlined_call_operand.vmem [shape: bf16[128,512], index: 1, kind: input, shape index: {}]
  %s2 = inlined_call_operand.vmem [shape: f32[1,512], index: 2, kind: input, shape index: {}]
  %s3 = inlined_call_operand.vmem [shape: s32[72,1], index: 3, kind: input, shape index: {}]
  %s4 = inlined_call_operand.vmem [shape: f32[72,1], index: 4, kind: output, shape index: {}]
  %s5 = sld [smem:[#allocation0]]
  $region34: #{yz_lstm_forward.3} parent=0
    _
  %s7 = ssub.s32 1, %s5
  %s8 = scalar_select 0, %s7, %s5
  // Predicated region
  $region2: #{yz_lstm_forward.3} parent=0 // pred_check
    _
  $region3: #{yz_lstm_forward.3} parent=0 // pred_check_branch
    %10 = sbr.rel (0) target = $region5
  $region4: #{yz_lstm_forward.3} parent=0 // pred_region
    _
  $region5: #{yz_lstm_forward.3} parent=0 // pred_fallthru
    _
  // Predicated region
  $region6: #{yz_lstm_forward.3} parent=0 // pred_check
    _
  $region7: #{yz_lstm_forward.3} parent=0 // pred_check_branch
    %12 = sbr.rel (0) target = $region9
  $region8: #{yz_lstm_forward.3} parent=0 // pred_region
    _
  $region9: #{yz_lstm_forward.3} parent=0 // pred_fallthru
    _
  // Predicated region
  $region10: #{yz_lstm_forward.3} parent=0 // pred_check
    _
  $region11: #{yz_lstm_forward.3} parent=0 // pred_check_branch
    %14 = sbr.rel (0) target = $region13
  $region12: #{yz_lstm_forward.3} parent=0 // pred_region
    _
  $region13: #{yz_lstm_forward.3} parent=0 // pred_fallthru
    _
  // Predicated region
  $region14: #{yz_lstm_forward.3} parent=0 // pred_check
    _
  $region15: #{yz_lstm_forward.3} parent=0 // pred_check_branch
    %16 = sbr.rel (0) target = $region17
  $region16: #{yz_lstm_forward.3} parent=0 // pred_region
    _
  $region17: #{yz_lstm_forward.3} parent=0 // pred_fallthru
    _
  %p18 = scmp.eq.s32.totalorder 0, 0
  // Predicated region
  $region18: #{yz_lstm_forward.3} parent=0 // pred_check
    %p19 = pneg %p18
  $region19: #{yz_lstm_forward.3} parent=0 // pred_check_branch
    %21 = sbr.rel (%p19) target = $region21
  $region20: #{yz_lstm_forward.3} parent=0 // pred_region
    %vm22 = vcmask 7168
    %23 = vst.msk [vmem:[#allocation2] sm:$0xff] %vm22, -inf
    %24 = vst.msk [vmem:[#allocation2 + $0x8] sm:$0xff] %vm22, -inf
    %25 = vst.msk [vmem:[#allocation2 + $0x10] sm:$0xff] %vm22, -inf
    %26 = vst.msk [vmem:[#allocation2 + $0x18] sm:$0xff] %vm22, -inf
    %27 = vst.msk [vmem:[#allocation2 + $0x20] sm:$0xff] %vm22, -inf
    %28 = vst.msk [vmem:[#allocation2 + $0x28] sm:$0xff] %vm22, -inf
    %29 = vst.msk [vmem:[#allocation2 + $0x30] sm:$0xff] %vm22, -inf
    %30 = vst.msk [vmem:[#allocation2 + $0x38] sm:$0xff] %vm22, -inf
    %31 = vst.msk [vmem:[#allocation2 + $0x40] sm:$0xff] %vm22, -inf
    %32 = vst.msk [vmem:[#allocation3] sm:$0xff] %vm22, 0.0
    %33 = vst.msk [vmem:[#allocation3 + $0x8] sm:$0xff] %vm22, 0.0
    %34 = vst.msk [vmem:[#allocation3 + $0x10] sm:$0xff] %vm22, 0.0
    %35 = vst.msk [vmem:[#allocation3 + $0x18] sm:$0xff] %vm22, 0.0
    %36 = vst.msk [vmem:[#allocation3 + $0x20] sm:$0xff] %vm22, 0.0
    %37 = vst.msk [vmem:[#allocation3 + $0x28] sm:$0xff] %vm22, 0.0
    %38 = vst.msk [vmem:[#allocation3 + $0x30] sm:$0xff] %vm22, 0.0
    %39 = vst.msk [vmem:[#allocation3 + $0x38] sm:$0xff] %vm22, 0.0
    %40 = vst.msk [vmem:[#allocation3 + $0x40] sm:$0xff] %vm22, 0.0
    %41 = vst.msk [vmem:[#allocation4] sm:$0xff] %vm22, 0.0
    %42 = vst.msk [vmem:[#allocation4 + $0x8] sm:$0xff] %vm22, 0.0
    %43 = vst.msk [vmem:[#allocation4 + $0x10] sm:$0xff] %vm22, 0.0
    %44 = vst.msk [vmem:[#allocation4 + $0x18] sm:$0xff] %vm22, 0.0
    %45 = vst.msk [vmem:[#allocation4 + $0x20] sm:$0xff] %vm22, 0.0
    %46 = vst.msk [vmem:[#allocation4 + $0x28] sm:$0xff] %vm22, 0.0
    %47 = vst.msk [vmem:[#allocation4 + $0x30] sm:$0xff] %vm22, 0.0
    %48 = vst.msk [vmem:[#allocation4 + $0x38] sm:$0xff] %vm22, 0.0
    %49 = vst.msk [vmem:[#allocation4 + $0x40] sm:$0xff] %vm22, 0.0
  $region21: #{yz_lstm_forward.3} parent=0 // pred_fallthru
    _
  %v50 = vld [vmem:[%s0] sm:$0xff]
  %v51 = vld [vmem:[%s0 + $0x8] sm:$0xff]
  %v52 = vld [vmem:[%s0 + $0x10] sm:$0xff]
  %v53 = vld [vmem:[%s0 + $0x18] sm:$0xff]
  %v54 = vld [vmem:[%s0 + $0x20] sm:$0xff]
  %v55 = vld [vmem:[%s0 + $0x28] sm:$0xff]
  %v56 = vld [vmem:[%s0 + $0x30] sm:$0xff]
  %v57 = vld [vmem:[%s0 + $0x38] sm:$0xff]
  %v58 = vld [vmem:[%s0 + $0x40] sm:$0xff]
  %v59 = vpack.c.bf16 %v51, %v50
  %v60 = vpack.c.bf16 %v53, %v52
  %v61 = vpack.c.bf16 %v55, %v54
  %v62 = vpack.c.bf16 %v57, %v56
  %v63 = vpack.c.bf16 %v58, %v58
  %v64 = vld [vmem:[%s1] sm:$0xff]
  %v65 = vld [vmem:[%s1 + $0x8] sm:$0xff]
  %v66 = vld [vmem:[%s1 + $0x10] sm:$0xff]
  %v67 = vld [vmem:[%s1 + $0x18] sm:$0xff]
  %v68 = vld [vmem:[%s1 + $0x20] sm:$0xff]
  %v69 = vld [vmem:[%s1 + $0x28] sm:$0xff]
  %v70 = vld [vmem:[%s1 + $0x30] sm:$0xff]
  %v71 = vld [vmem:[%s1 + $0x38] sm:$0xff]
  %v72 = vld [vmem:[%s1 + $0x40] sm:$0xff]
  %v73 = vld [vmem:[%s1 + $0x48] sm:$0xff]
  %v74 = vld [vmem:[%s1 + $0x50] sm:$0xff]
  %v75 = vld [vmem:[%s1 + $0x58] sm:$0xff]
  %v76 = vld [vmem:[%s1 + $0x60] sm:$0xff]
  %v77 = vld [vmem:[%s1 + $0x68] sm:$0xff]
  %v78 = vld [vmem:[%s1 + $0x70] sm:$0xff]
  %v79 = vld [vmem:[%s1 + $0x78] sm:$0xff]
  %v80 = vld [vmem:[%s1 + $0x80] sm:$0xff]
  %v81 = vld [vmem:[%s1 + $0x88] sm:$0xff]
  %v82 = vld [vmem:[%s1 + $0x90] sm:$0xff]
  %v83 = vld [vmem:[%s1 + $0x98] sm:$0xff]
  %v84 = vld [vmem:[%s1 + $0xa0] sm:$0xff]
  %v85 = vld [vmem:[%s1 + $0xa8] sm:$0xff]
  %v86 = vld [vmem:[%s1 + $0xb0] sm:$0xff]
  %v87 = vld [vmem:[%s1 + $0xb8] sm:$0xff]
  %v88 = vld [vmem:[%s1 + $0xc0] sm:$0xff]
  %v89 = vld [vmem:[%s1 + $0xc8] sm:$0xff]
  %v90 = vld [vmem:[%s1 + $0xd0] sm:$0xff]
  %v91 = vld [vmem:[%s1 + $0xd8] sm:$0xff]
  %v92 = vld [vmem:[%s1 + $0xe0] sm:$0xff]
  %v93 = vld [vmem:[%s1 + $0xe8] sm:$0xff]
  %v94 = vld [vmem:[%s1 + $0xf0] sm:$0xff]
  %v95 = vld [vmem:[%s1 + $0xf8] sm:$0xff]
  %v96 = vld [vmem:[%s2] sm:$0xf]
  %v98 = vlaneseq
  %v99 = vshrl.u32 %v98, 7
  %v100 = vsub.s32 0, %v99
  %v101 = vrot.slane %v96, %v100
  %v102 = vlaneseq
  %v103 = vshrl.u32 %v102, 7
  %v104 = vsub.s32 1, %v103
  %v105 = vrot.slane %v96, %v104
  %v106 = vlaneseq
  %v107 = vshrl.u32 %v106, 7
  %v108 = vsub.s32 2, %v107
  %v109 = vrot.slane %v96, %v108
  %v110 = vlaneseq
  %v111 = vshrl.u32 %v110, 7
  %v112 = vsub.s32 3, %v111
  %v113 = vrot.slane %v96, %v112
  %v150 = vunpack.c.l.b16 %v64
  %v151 = vunpack.c.h.b16 %v64
  %v152 = vunpack.c.l.b16 %v65
  %v153 = vunpack.c.h.b16 %v65
  %v154 = vunpack.c.l.b16 %v66
  %v155 = vunpack.c.h.b16 %v66
  %v156 = vunpack.c.l.b16 %v67
  %v157 = vunpack.c.h.b16 %v67
  %v158 = vunpack.c.l.b16 %v68
  %v159 = vunpack.c.h.b16 %v68
  %v160 = vunpack.c.l.b16 %v69
  %v161 = vunpack.c.h.b16 %v69
  %v162 = vunpack.c.l.b16 %v70
  %v163 = vunpack.c.h.b16 %v70
  %v164 = vunpack.c.l.b16 %v71
  %v165 = vunpack.c.h.b16 %v71
  %v166 = vunpack.c.l.b16 %v72
  %v167 = vunpack.c.h.b16 %v72
  %v168 = vunpack.c.l.b16 %v73
  %v169 = vunpack.c.h.b16 %v73
  %v170 = vunpack.c.l.b16 %v74
  %v171 = vunpack.c.h.b16 %v74
  %v172 = vunpack.c.l.b16 %v75
  %v173 = vunpack.c.h.b16 %v75
  %v174 = vunpack.c.l.b16 %v76
  %v175 = vunpack.c.h.b16 %v76
  %v176 = vunpack.c.l.b16 %v77
  %v177 = vunpack.c.h.b16 %v77
  %v178 = vunpack.c.l.b16 %v78
  %v179 = vunpack.c.h.b16 %v78
  %v180 = vunpack.c.l.b16 %v79
  %v181 = vunpack.c.h.b16 %v79
  %v182 = vunpack.c.l.b16 %v80
  %v183 = vunpack.c.h.b16 %v80
  %v184 = vunpack.c.l.b16 %v81
  %v185 = vunpack.c.h.b16 %v81
  %v186 = vunpack.c.l.b16 %v82
  %v187 = vunpack.c.h.b16 %v82
  %v188 = vunpack.c.l.b16 %v83
  %v189 = vunpack.c.h.b16 %v83
  %v190 = vunpack.c.l.b16 %v84
  %v191 = vunpack.c.h.b16 %v84
  %v192 = vunpack.c.l.b16 %v85
  %v193 = vunpack.c.h.b16 %v85
  %v194 = vunpack.c.l.b16 %v86
  %v195 = vunpack.c.h.b16 %v86
  %v196 = vunpack.c.l.b16 %v87
  %v197 = vunpack.c.h.b16 %v87
  %v198 = vunpack.c.l.b16 %v88
  %v199 = vunpack.c.h.b16 %v88
  %v200 = vunpack.c.l.b16 %v89
  %v201 = vunpack.c.h.b16 %v89
  %v202 = vunpack.c.l.b16 %v90
  %v203 = vunpack.c.h.b16 %v90
  %v204 = vunpack.c.l.b16 %v91
  %v205 = vunpack.c.h.b16 %v91
  %v206 = vunpack.c.l.b16 %v92
  %v207 = vunpack.c.h.b16 %v92
  %v208 = vunpack.c.l.b16 %v93
  %v209 = vunpack.c.h.b16 %v93
  %v210 = vunpack.c.l.b16 %v94
  %v211 = vunpack.c.h.b16 %v94
  %v212 = vunpack.c.l.b16 %v95
  %v213 = vunpack.c.h.b16 %v95
  %v214 = vpack.c.b16 %v154, %v150
  %v215 = vpack.c.b16 %v155, %v151
  %v216 = vpack.c.b16 %v156, %v152
  %v217 = vpack.c.b16 %v157, %v153
  %v218 = vpack.c.b16 %v162, %v158
  %v219 = vpack.c.b16 %v163, %v159
  %v220 = vpack.c.b16 %v164, %v160
  %v221 = vpack.c.b16 %v165, %v161
  %v222 = vpack.c.b16 %v170, %v166
  %v223 = vpack.c.b16 %v171, %v167
  %v224 = vpack.c.b16 %v172, %v168
  %v225 = vpack.c.b16 %v173, %v169
  %v226 = vpack.c.b16 %v178, %v174
  %v227 = vpack.c.b16 %v179, %v175
  %v228 = vpack.c.b16 %v180, %v176
  %v229 = vpack.c.b16 %v181, %v177
  %v230 = vpack.c.b16 %v186, %v182
  %v231 = vpack.c.b16 %v187, %v183
  %v232 = vpack.c.b16 %v188, %v184
  %v233 = vpack.c.b16 %v189, %v185
  %v234 = vpack.c.b16 %v194, %v190
  %v235 = vpack.c.b16 %v195, %v191
  %v236 = vpack.c.b16 %v196, %v192
  %v237 = vpack.c.b16 %v197, %v193
  %v238 = vpack.c.b16 %v202, %v198
  %v239 = vpack.c.b16 %v203, %v199
  %v240 = vpack.c.b16 %v204, %v200
  %v241 = vpack.c.b16 %v205, %v201
  %v242 = vpack.c.b16 %v210, %v206
  %v243 = vpack.c.b16 %v211, %v207
  %v244 = vpack.c.b16 %v212, %v208
  %v245 = vpack.c.b16 %v213, %v209
  %278 = vmatprep.subr.bf16.mxu0 %v243
  %279 = vmatpush1.bf16.msra.mxu0 %v242
  %280 = vmatprep.subr.bf16.mxu0 %v239
  %281 = vmatpush1.bf16.msra.mxu0 %v238
  %282 = vmatprep.subr.bf16.mxu0 %v235
  %283 = vmatpush1.bf16.msra.mxu0 %v234
  %284 = vmatprep.subr.bf16.mxu0 %v231
  %285 = vmatpush1.bf16.msra.mxu0 %v230
  %286 = vmatprep.subr.bf16.mxu0 %v227
  %287 = vmatpush1.bf16.msra.mxu0 %v226
  %288 = vmatprep.subr.bf16.mxu0 %v223
  %289 = vmatpush1.bf16.msra.mxu0 %v222
  %290 = vmatprep.subr.bf16.mxu0 %v219
  %291 = vmatpush1.bf16.msra.mxu0 %v218
  %292 = vmatprep.subr.bf16.mxu0 %v215
  %293 = vmatpush1.bf16.msra.mxu0 %v214
  %294 = vmatprep.subr.bf16.mxu0 0
  %295 = vmatpush2.bf16.msra.mxu0 0
  %296 = vmatprep.subr.bf16.mxu0 0
  %297 = vmatpush2.bf16.msra.mxu0 0
  %298 = vmatprep.subr.bf16.mxu0 0
  %299 = vmatpush2.bf16.msra.mxu0 0
  %300 = vmatprep.subr.bf16.mxu0 0
  %301 = vmatpush2.bf16.msra.mxu0 0
  %302 = vmatprep.subr.bf16.mxu0 0
  %303 = vmatpush2.bf16.msra.mxu0 0
  %304 = vmatprep.subr.bf16.mxu0 0
  %305 = vmatpush2.bf16.msra.mxu0 0
  %306 = vmatprep.subr.bf16.mxu0 0
  %307 = vmatpush2.bf16.msra.mxu0 0
  %308 = vmatprep.subr.bf16.mxu0 0
  %309 = vmatpush2.bf16.msra.mxu0 0
  %310 = vmatprep.mubr.bf16.mxu0 0
  %311 = vmatmul.mubr.bf16.gmra.mxu0 %v59
  %v312 = vpop.f32.mrf.mxu0
  %v313 = vadd.f32 %v101, %v312
  %v314 = vpop.f32.mrf.mxu0
  %v315 = vadd.f32 %v105, %v314
  %v316 = vpop.f32.mrf.mxu0
  %v317 = vadd.f32 %v101, %v316
  %v318 = vpop.f32.mrf.mxu0
  %v319 = vadd.f32 %v105, %v318
  %320 = vmatprep.mubr.bf16.mxu0 0
  %321 = vmatmul.mubr.bf16.gmra.mxu0 %v60
  %v322 = vpop.f32.mrf.mxu0
  %v323 = vadd.f32 %v101, %v322
  %v324 = vpop.f32.mrf.mxu0
  %v325 = vadd.f32 %v105, %v324
  %v326 = vpop.f32.mrf.mxu0
  %v327 = vadd.f32 %v101, %v326
  %v328 = vpop.f32.mrf.mxu0
  %v329 = vadd.f32 %v105, %v328
  %330 = vmatprep.mubr.bf16.mxu0 0
  %331 = vmatmul.mubr.bf16.gmra.mxu0 %v61
  %v332 = vpop.f32.mrf.mxu0
  %v333 = vadd.f32 %v101, %v332
  %v334 = vpop.f32.mrf.mxu0
  %v335 = vadd.f32 %v105, %v334
  %v336 = vpop.f32.mrf.mxu0
  %v337 = vadd.f32 %v101, %v336
  %v338 = vpop.f32.mrf.mxu0
  %v339 = vadd.f32 %v105, %v338
  %340 = vmatprep.mubr.bf16.mxu0 0
  %341 = vmatmul.mubr.bf16.gmra.mxu0 %v62
  %v342 = vpop.f32.mrf.mxu0
  %v343 = vadd.f32 %v101, %v342
  %v344 = vpop.f32.mrf.mxu0
  %v345 = vadd.f32 %v105, %v344
  %v346 = vpop.f32.mrf.mxu0
  %v347 = vadd.f32 %v101, %v346
  %v348 = vpop.f32.mrf.mxu0
  %v349 = vadd.f32 %v105, %v348
  %350 = vmatprep.mubr.bf16.mxu0 0
  %351 = vmatmul.mubr.bf16.gmra.mxu0 %v63
  %v352 = vpop.f32.mrf.mxu0
  %v353 = vadd.f32 %v101, %v352
  %v354 = vpop.f32.mrf.mxu0
  %v355 = vadd.f32 %v105, %v354
  %v356 = vpop.f32.mrf.mxu0
  %v357 = vpop.f32.mrf.mxu0
  %358 = vdwg.mxu0
  %359 = vmatprep.subr.bf16.mxu0 %v245
  %360 = vmatpush1.bf16.msra.mxu0 %v244
  %361 = vmatprep.subr.bf16.mxu0 %v241
  %362 = vmatpush1.bf16.msra.mxu0 %v240
  %363 = vmatprep.subr.bf16.mxu0 %v237
  %364 = vmatpush1.bf16.msra.mxu0 %v236
  %365 = vmatprep.subr.bf16.mxu0 %v233
  %366 = vmatpush1.bf16.msra.mxu0 %v232
  %367 = vmatprep.subr.bf16.mxu0 %v229
  %368 = vmatpush1.bf16.msra.mxu0 %v228
  %369 = vmatprep.subr.bf16.mxu0 %v225
  %370 = vmatpush1.bf16.msra.mxu0 %v224
  %371 = vmatprep.subr.bf16.mxu0 %v221
  %372 = vmatpush1.bf16.msra.mxu0 %v220
  %373 = vmatprep.subr.bf16.mxu0 %v217
  %374 = vmatpush1.bf16.msra.mxu0 %v216
  %375 = vmatprep.subr.bf16.mxu0 0
  %376 = vmatpush2.bf16.msra.mxu0 0
  %377 = vmatprep.subr.bf16.mxu0 0
  %378 = vmatpush2.bf16.msra.mxu0 0
  %379 = vmatprep.subr.bf16.mxu0 0
  %380 = vmatpush2.bf16.msra.mxu0 0
  %381 = vmatprep.subr.bf16.mxu0 0
  %382 = vmatpush2.bf16.msra.mxu0 0
  %383 = vmatprep.subr.bf16.mxu0 0
  %384 = vmatpush2.bf16.msra.mxu0 0
  %385 = vmatprep.subr.bf16.mxu0 0
  %386 = vmatpush2.bf16.msra.mxu0 0
  %387 = vmatprep.subr.bf16.mxu0 0
  %388 = vmatpush2.bf16.msra.mxu0 0
  %389 = vmatprep.subr.bf16.mxu0 0
  %390 = vmatpush2.bf16.msra.mxu0 0
  %391 = vmatprep.mubr.bf16.mxu0 0
  %392 = vmatmul.mubr.bf16.gmra.mxu0 %v59
  %v393 = vpop.f32.mrf.mxu0
  %v394 = vadd.f32 %v109, %v393
  %v395 = vpop.f32.mrf.mxu0
  %v396 = vadd.f32 %v113, %v395
  %v397 = vpop.f32.mrf.mxu0
  %v398 = vadd.f32 %v109, %v397
  %v399 = vpop.f32.mrf.mxu0
  %v400 = vadd.f32 %v113, %v399
  %401 = vmatprep.mubr.bf16.mxu0 0
  %402 = vmatmul.mubr.bf16.gmra.mxu0 %v60
  %v403 = vpop.f32.mrf.mxu0
  %v404 = vadd.f32 %v109, %v403
  %v405 = vpop.f32.mrf.mxu0
  %v406 = vadd.f32 %v113, %v405
  %v407 = vpop.f32.mrf.mxu0
  %v408 = vadd.f32 %v109, %v407
  %v409 = vpop.f32.mrf.mxu0
  %v410 = vadd.f32 %v113, %v409
  %411 = vmatprep.mubr.bf16.mxu0 0
  %412 = vmatmul.mubr.bf16.gmra.mxu0 %v61
  %v413 = vpop.f32.mrf.mxu0
  %v414 = vadd.f32 %v109, %v413
  %v415 = vpop.f32.mrf.mxu0
  %v416 = vadd.f32 %v113, %v415
  %v417 = vpop.f32.mrf.mxu0
  %v418 = vadd.f32 %v109, %v417
  %v419 = vpop.f32.mrf.mxu0
  %v420 = vadd.f32 %v113, %v419
  %421 = vmatprep.mubr.bf16.mxu0 0
  %422 = vmatmul.mubr.bf16.gmra.mxu0 %v62
  %v423 = vpop.f32.mrf.mxu0
  %v424 = vadd.f32 %v109, %v423
  %v425 = vpop.f32.mrf.mxu0
  %v426 = vadd.f32 %v113, %v425
  %v427 = vpop.f32.mrf.mxu0
  %v428 = vadd.f32 %v109, %v427
  %v429 = vpop.f32.mrf.mxu0
  %v430 = vadd.f32 %v113, %v429
  %431 = vmatprep.mubr.bf16.mxu0 0
  %432 = vmatmul.mubr.bf16.gmra.mxu0 %v63
  %v433 = vpop.f32.mrf.mxu0
  %v434 = vadd.f32 %v109, %v433
  %v435 = vpop.f32.mrf.mxu0
  %v436 = vadd.f32 %v113, %v435
  %v437 = vpop.f32.mrf.mxu0
  %v438 = vpop.f32.mrf.mxu0
  %439 = vdwg.mxu0
  %v440 = vmax.f32 %v313, %v315
  %v441 = vmax.f32 %v440, %v394
  %v442 = vmax.f32 %v441, %v396
  %443 = vmax.xlane.f32.xlu0 %v442
  %v444 = vpop.xlane.xlu0 %443
  %v445 = vmax.f32 %v317, %v319
  %v446 = vmax.f32 %v445, %v398
  %v447 = vmax.f32 %v446, %v400
  %448 = vmax.xlane.f32.xlu0 %v447
  %v449 = vpop.xlane.xlu0 %448
  %v450 = vmax.f32 %v323, %v325
  %v451 = vmax.f32 %v450, %v404
  %v452 = vmax.f32 %v451, %v406
  %453 = vmax.xlane.f32.xlu0 %v452
  %v454 = vpop.xlane.xlu0 %453
  %v455 = vmax.f32 %v327, %v329
  %v456 = vmax.f32 %v455, %v408
  %v457 = vmax.f32 %v456, %v410
  %458 = vmax.xlane.f32.xlu0 %v457
  %v459 = vpop.xlane.xlu0 %458
  %v460 = vmax.f32 %v333, %v335
  %v461 = vmax.f32 %v460, %v414
  %v462 = vmax.f32 %v461, %v416
  %463 = vmax.xlane.f32.xlu0 %v462
  %v464 = vpop.xlane.xlu0 %463
  %v465 = vmax.f32 %v337, %v339
  %v466 = vmax.f32 %v465, %v418
  %v467 = vmax.f32 %v466, %v420
  %468 = vmax.xlane.f32.xlu0 %v467
  %v469 = vpop.xlane.xlu0 %468
  %v470 = vmax.f32 %v343, %v345
  %v471 = vmax.f32 %v470, %v424
  %v472 = vmax.f32 %v471, %v426
  %473 = vmax.xlane.f32.xlu0 %v472
  %v474 = vpop.xlane.xlu0 %473
  %v475 = vmax.f32 %v347, %v349
  %v476 = vmax.f32 %v475, %v428
  %v477 = vmax.f32 %v476, %v430
  %478 = vmax.xlane.f32.xlu0 %v477
  %v479 = vpop.xlane.xlu0 %478
  %v480 = vmax.f32 %v353, %v355
  %v481 = vmax.f32 %v480, %v434
  %v482 = vmax.f32 %v481, %v436
  %483 = vmax.xlane.f32.xlu0 %v482
  %v484 = vpop.xlane.xlu0 %483
  %v485 = vld [vmem:[#allocation2] sm:$0xff]
  %v486 = vld [vmem:[#allocation2 + $0x8] sm:$0xff]
  %v487 = vld [vmem:[#allocation2 + $0x10] sm:$0xff]
  %v488 = vld [vmem:[#allocation2 + $0x18] sm:$0xff]
  %v489 = vld [vmem:[#allocation2 + $0x20] sm:$0xff]
  %v490 = vld [vmem:[#allocation2 + $0x28] sm:$0xff]
  %v491 = vld [vmem:[#allocation2 + $0x30] sm:$0xff]
  %v492 = vld [vmem:[#allocation2 + $0x38] sm:$0xff]
  %v493 = vld [vmem:[#allocation2 + $0x40] sm:$0xff]
  %v494 = vmax.f32 %v485, %v444
  %v495 = vmax.f32 %v486, %v449
  %v496 = vmax.f32 %v487, %v454
  %v497 = vmax.f32 %v488, %v459
  %v498 = vmax.f32 %v489, %v464
  %v499 = vmax.f32 %v490, %v469
  %v500 = vmax.f32 %v491, %v474
  %v501 = vmax.f32 %v492, %v479
  %v502 = vmax.f32 %v493, %v484
  %v503 = vld [vmem:[#allocation3] sm:$0xff]
  %v504 = vld [vmem:[#allocation3 + $0x8] sm:$0xff]
  %v505 = vld [vmem:[#allocation3 + $0x10] sm:$0xff]
  %v506 = vld [vmem:[#allocation3 + $0x18] sm:$0xff]
  %v507 = vld [vmem:[#allocation3 + $0x20] sm:$0xff]
  %v508 = vld [vmem:[#allocation3 + $0x28] sm:$0xff]
  %v509 = vld [vmem:[#allocation3 + $0x30] sm:$0xff]
  %v510 = vld [vmem:[#allocation3 + $0x38] sm:$0xff]
  %v511 = vld [vmem:[#allocation3 + $0x40] sm:$0xff]
  %v512 = vsub.f32 %v485, %v494
  %v513 = vsub.f32 %v486, %v495
  %v514 = vsub.f32 %v487, %v496
  %v515 = vsub.f32 %v488, %v497
  %v516 = vsub.f32 %v489, %v498
  %v517 = vsub.f32 %v490, %v499
  %v518 = vsub.f32 %v491, %v500
  %v519 = vsub.f32 %v492, %v501
  %v520 = vsub.f32 %v493, %v502
  %v521 = vmul.f32 %v512, 1.442695
  %v522 = vpow.pop %v521
  %v523 = vmul.f32 %v513, 1.442695
  %v524 = vpow.pop %v523
  %v525 = vmul.f32 %v514, 1.442695
  %v526 = vpow.pop %v525
  %v527 = vmul.f32 %v515, 1.442695
  %v528 = vpow.pop %v527
  %v529 = vmul.f32 %v516, 1.442695
  %v530 = vpow.pop %v529
  %v531 = vmul.f32 %v517, 1.442695
  %v532 = vpow.pop %v531
  %v533 = vmul.f32 %v518, 1.442695
  %v534 = vpow.pop %v533
  %v535 = vmul.f32 %v519, 1.442695
  %v536 = vpow.pop %v535
  %v537 = vmul.f32 %v520, 1.442695
  %v538 = vpow.pop %v537
  %v539 = vmul.f32 %v503, %v522
  %v540 = vmul.f32 %v504, %v524
  %v541 = vmul.f32 %v505, %v526
  %v542 = vmul.f32 %v506, %v528
  %v543 = vmul.f32 %v507, %v530
  %v544 = vmul.f32 %v508, %v532
  %v545 = vmul.f32 %v509, %v534
  %v546 = vmul.f32 %v510, %v536
  %v547 = vmul.f32 %v511, %v538
  %549 = vset.pattern.permute.xlu0 0
  %550 = vperm.xlu0 %549, %v494
  %v551 = vpop.permute.xlu0 %550
  %554 = vset.pattern.permute.xlu0 0
  %555 = vperm.xlu0 %554, %v495
  %v556 = vpop.permute.xlu0 %555
  %559 = vset.pattern.permute.xlu0 0
  %560 = vperm.xlu0 %559, %v496
  %v561 = vpop.permute.xlu0 %560
  %564 = vset.pattern.permute.xlu0 0
  %565 = vperm.xlu0 %564, %v497
  %v566 = vpop.permute.xlu0 %565
  %569 = vset.pattern.permute.xlu0 0
  %570 = vperm.xlu0 %569, %v498
  %v571 = vpop.permute.xlu0 %570
  %574 = vset.pattern.permute.xlu0 0
  %575 = vperm.xlu0 %574, %v499
  %v576 = vpop.permute.xlu0 %575
  %579 = vset.pattern.permute.xlu0 0
  %580 = vperm.xlu0 %579, %v500
  %v581 = vpop.permute.xlu0 %580
  %584 = vset.pattern.permute.xlu0 0
  %585 = vperm.xlu0 %584, %v501
  %v586 = vpop.permute.xlu0 %585
  %589 = vset.pattern.permute.xlu0 0
  %590 = vperm.xlu0 %589, %v502
  %v591 = vpop.permute.xlu0 %590
  %v593 = vsub.f32 %v313, %v551
  %v594 = vsub.f32 %v315, %v551
  %v595 = vsub.f32 %v394, %v551
  %v596 = vsub.f32 %v396, %v551
  %v597 = vsub.f32 %v317, %v556
  %v598 = vsub.f32 %v319, %v556
  %v599 = vsub.f32 %v398, %v556
  %v600 = vsub.f32 %v400, %v556
  %v601 = vsub.f32 %v323, %v561
  %v602 = vsub.f32 %v325, %v561
  %v603 = vsub.f32 %v404, %v561
  %v604 = vsub.f32 %v406, %v561
  %v605 = vsub.f32 %v327, %v566
  %v606 = vsub.f32 %v329, %v566
  %v607 = vsub.f32 %v408, %v566
  %v608 = vsub.f32 %v410, %v566
  %v609 = vsub.f32 %v333, %v571
  %v610 = vsub.f32 %v335, %v571
  %v611 = vsub.f32 %v414, %v571
  %v612 = vsub.f32 %v416, %v571
  %v613 = vsub.f32 %v337, %v576
  %v614 = vsub.f32 %v339, %v576
  %v615 = vsub.f32 %v418, %v576
  %v616 = vsub.f32 %v420, %v576
  %v617 = vsub.f32 %v343, %v581
  %v618 = vsub.f32 %v345, %v581
  %v619 = vsub.f32 %v424, %v581
  %v620 = vsub.f32 %v426, %v581
  %v621 = vsub.f32 %v347, %v586
  %v622 = vsub.f32 %v349, %v586
  %v623 = vsub.f32 %v428, %v586
  %v624 = vsub.f32 %v430, %v586
  %v625 = vsub.f32 %v353, %v591
  %v626 = vsub.f32 %v355, %v591
  %v627 = vsub.f32 %v434, %v591
  %v628 = vsub.f32 %v436, %v591
  %v629 = vmul.f32 %v593, 1.442695
  %v630 = vpow.pop %v629
  %v631 = vmul.f32 %v594, 1.442695
  %v632 = vpow.pop %v631
  %v633 = vmul.f32 %v595, 1.442695
  %v634 = vpow.pop %v633
  %v635 = vmul.f32 %v596, 1.442695
  %v636 = vpow.pop %v635
  %v637 = vmul.f32 %v597, 1.442695
  %v638 = vpow.pop %v637
  %v639 = vmul.f32 %v598, 1.442695
  %v640 = vpow.pop %v639
  %v641 = vmul.f32 %v599, 1.442695
  %v642 = vpow.pop %v641
  %v643 = vmul.f32 %v600, 1.442695
  %v644 = vpow.pop %v643
  %v645 = vmul.f32 %v601, 1.442695
  %v646 = vpow.pop %v645
  %v647 = vmul.f32 %v602, 1.442695
  %v648 = vpow.pop %v647
  %v649 = vmul.f32 %v603, 1.442695
  %v650 = vpow.pop %v649
  %v651 = vmul.f32 %v604, 1.442695
  %v652 = vpow.pop %v651
  %v653 = vmul.f32 %v605, 1.442695
  %v654 = vpow.pop %v653
  %v655 = vmul.f32 %v606, 1.442695
  %v656 = vpow.pop %v655
  %v657 = vmul.f32 %v607, 1.442695
  %v658 = vpow.pop %v657
  %v659 = vmul.f32 %v608, 1.442695
  %v660 = vpow.pop %v659
  %v661 = vmul.f32 %v609, 1.442695
  %v662 = vpow.pop %v661
  %v663 = vmul.f32 %v610, 1.442695
  %v664 = vpow.pop %v663
  %v665 = vmul.f32 %v611, 1.442695
  %v666 = vpow.pop %v665
  %v667 = vmul.f32 %v612, 1.442695
  %v668 = vpow.pop %v667
  %v669 = vmul.f32 %v613, 1.442695
  %v670 = vpow.pop %v669
  %v671 = vmul.f32 %v614, 1.442695
  %v672 = vpow.pop %v671
  %v673 = vmul.f32 %v615, 1.442695
  %v674 = vpow.pop %v673
  %v675 = vmul.f32 %v616, 1.442695
  %v676 = vpow.pop %v675
  %v677 = vmul.f32 %v617, 1.442695
  %v678 = vpow.pop %v677
  %v679 = vmul.f32 %v618, 1.442695
  %v680 = vpow.pop %v679
  %v681 = vmul.f32 %v619, 1.442695
  %v682 = vpow.pop %v681
  %v683 = vmul.f32 %v620, 1.442695
  %v684 = vpow.pop %v683
  %v685 = vmul.f32 %v621, 1.442695
  %v686 = vpow.pop %v685
  %v687 = vmul.f32 %v622, 1.442695
  %v688 = vpow.pop %v687
  %v689 = vmul.f32 %v623, 1.442695
  %v690 = vpow.pop %v689
  %v691 = vmul.f32 %v624, 1.442695
  %v692 = vpow.pop %v691
  %v693 = vmul.f32 %v625, 1.442695
  %v694 = vpow.pop %v693
  %v695 = vmul.f32 %v626, 1.442695
  %v696 = vpow.pop %v695
  %v697 = vmul.f32 %v627, 1.442695
  %v698 = vpow.pop %v697
  %v699 = vmul.f32 %v628, 1.442695
  %v700 = vpow.pop %v699
  %v701 = vadd.f32 %v630, %v632
  %v702 = vadd.f32 %v701, %v634
  %v703 = vadd.f32 %v702, %v636
  %704 = vadd.xlane.f32.xlu0 %v703
  %v705 = vpop.xlane.xlu0 %704
  %v706 = vadd.f32 %v638, %v640
  %v707 = vadd.f32 %v706, %v642
  %v708 = vadd.f32 %v707, %v644
  %709 = vadd.xlane.f32.xlu0 %v708
  %v710 = vpop.xlane.xlu0 %709
  %v711 = vadd.f32 %v646, %v648
  %v712 = vadd.f32 %v711, %v650
  %v713 = vadd.f32 %v712, %v652
  %714 = vadd.xlane.f32.xlu0 %v713
  %v715 = vpop.xlane.xlu0 %714
  %v716 = vadd.f32 %v654, %v656
  %v717 = vadd.f32 %v716, %v658
  %v718 = vadd.f32 %v717, %v660
  %719 = vadd.xlane.f32.xlu0 %v718
  %v720 = vpop.xlane.xlu0 %719
  %v721 = vadd.f32 %v662, %v664
  %v722 = vadd.f32 %v721, %v666
  %v723 = vadd.f32 %v722, %v668
  %724 = vadd.xlane.f32.xlu0 %v723
  %v725 = vpop.xlane.xlu0 %724
  %v726 = vadd.f32 %v670, %v672
  %v727 = vadd.f32 %v726, %v674
  %v728 = vadd.f32 %v727, %v676
  %729 = vadd.xlane.f32.xlu0 %v728
  %v730 = vpop.xlane.xlu0 %729
  %v731 = vadd.f32 %v678, %v680
  %v732 = vadd.f32 %v731, %v682
  %v733 = vadd.f32 %v732, %v684
  %734 = vadd.xlane.f32.xlu0 %v733
  %v735 = vpop.xlane.xlu0 %734
  %v736 = vadd.f32 %v686, %v688
  %v737 = vadd.f32 %v736, %v690
  %v738 = vadd.f32 %v737, %v692
  %739 = vadd.xlane.f32.xlu0 %v738
  %v740 = vpop.xlane.xlu0 %739
  %v741 = vadd.f32 %v694, %v696
  %v742 = vadd.f32 %v741, %v698
  %v743 = vadd.f32 %v742, %v700
  %744 = vadd.xlane.f32.xlu0 %v743
  %v745 = vpop.xlane.xlu0 %744
  %v746 = vadd.f32 %v539, %v705
  %v747 = vadd.f32 %v540, %v710
  %v748 = vadd.f32 %v541, %v715
  %v749 = vadd.f32 %v542, %v720
  %v750 = vadd.f32 %v543, %v725
  %v751 = vadd.f32 %v544, %v730
  %v752 = vadd.f32 %v545, %v735
  %v753 = vadd.f32 %v546, %v740
  %v754 = vadd.f32 %v547, %v745
  %vm755 = vcmask 7168
  %756 = vst.msk [vmem:[#allocation3] sm:$0xff] %vm755, %v746
  %757 = vst.msk [vmem:[#allocation3 + $0x8] sm:$0xff] %vm755, %v747
  %758 = vst.msk [vmem:[#allocation3 + $0x10] sm:$0xff] %vm755, %v748
  %759 = vst.msk [vmem:[#allocation3 + $0x18] sm:$0xff] %vm755, %v749
  %760 = vst.msk [vmem:[#allocation3 + $0x20] sm:$0xff] %vm755, %v750
  %761 = vst.msk [vmem:[#allocation3 + $0x28] sm:$0xff] %vm755, %v751
  %762 = vst.msk [vmem:[#allocation3 + $0x30] sm:$0xff] %vm755, %v752
  %763 = vst.msk [vmem:[#allocation3 + $0x38] sm:$0xff] %vm755, %v753
  %764 = vst.msk [vmem:[#allocation3 + $0x40] sm:$0xff] %vm755, %v754
  %765 = vst.msk [vmem:[#allocation2] sm:$0xff] %vm755, %v494
  %766 = vst.msk [vmem:[#allocation2 + $0x8] sm:$0xff] %vm755, %v495
  %767 = vst.msk [vmem:[#allocation2 + $0x10] sm:$0xff] %vm755, %v496
  %768 = vst.msk [vmem:[#allocation2 + $0x18] sm:$0xff] %vm755, %v497
  %769 = vst.msk [vmem:[#allocation2 + $0x20] sm:$0xff] %vm755, %v498
  %770 = vst.msk [vmem:[#allocation2 + $0x28] sm:$0xff] %vm755, %v499
  %771 = vst.msk [vmem:[#allocation2 + $0x30] sm:$0xff] %vm755, %v500
  %772 = vst.msk [vmem:[#allocation2 + $0x38] sm:$0xff] %vm755, %v501
  %773 = vst.msk [vmem:[#allocation2 + $0x40] sm:$0xff] %vm755, %v502
  %v774 = vlaneseq
  %v775 = vand.u32 %v774, 127
  %v776 = vadd.s32 %v775, 128
  %v777 = vadd.s32 %v775, 256
  %v778 = vadd.s32 %v775, 384
  %s779 = smul.u32 0, 512
  %v780 = vstv %s779
  %v781 = vadd.s32 %v775, %v780
  %v782 = vadd.s32 %v776, %v780
  %v783 = vadd.s32 %v777, %v780
  %v784 = vadd.s32 %v778, %v780
  %v785 = vld [vmem:[%s3] sm:$0xff]
  %v786 = vld [vmem:[%s3 + $0x8] sm:$0xff]
  %v787 = vld [vmem:[%s3 + $0x10] sm:$0xff]
  %v788 = vld [vmem:[%s3 + $0x18] sm:$0xff]
  %v789 = vld [vmem:[%s3 + $0x20] sm:$0xff]
  %v790 = vld [vmem:[%s3 + $0x28] sm:$0xff]
  %v791 = vld [vmem:[%s3 + $0x30] sm:$0xff]
  %v792 = vld [vmem:[%s3 + $0x38] sm:$0xff]
  %v793 = vld [vmem:[%s3 + $0x40] sm:$0xff]
  %794 = vset.pattern.permute.xlu0 0
  %795 = vperm.xlu0 %794, %v785
  %v796 = vpop.permute.xlu0 %795
  %797 = vset.pattern.permute.xlu0 0
  %798 = vperm.xlu0 %797, %v786
  %v799 = vpop.permute.xlu0 %798
  %800 = vset.pattern.permute.xlu0 0
  %801 = vperm.xlu0 %800, %v787
  %v802 = vpop.permute.xlu0 %801
  %803 = vset.pattern.permute.xlu0 0
  %804 = vperm.xlu0 %803, %v788
  %v805 = vpop.permute.xlu0 %804
  %806 = vset.pattern.permute.xlu0 0
  %807 = vperm.xlu0 %806, %v789
  %v808 = vpop.permute.xlu0 %807
  %809 = vset.pattern.permute.xlu0 0
  %810 = vperm.xlu0 %809, %v790
  %v811 = vpop.permute.xlu0 %810
  %812 = vset.pattern.permute.xlu0 0
  %813 = vperm.xlu0 %812, %v791
  %v814 = vpop.permute.xlu0 %813
  %815 = vset.pattern.permute.xlu0 0
  %816 = vperm.xlu0 %815, %v792
  %v817 = vpop.permute.xlu0 %816
  %818 = vset.pattern.permute.xlu0 0
  %819 = vperm.xlu0 %818, %v793
  %v820 = vpop.permute.xlu0 %819
  %vm821 = vcmp.eq.s32.totalorder %v781, %v796
  %vm822 = vcmp.eq.s32.totalorder %v782, %v796
  %vm823 = vcmp.eq.s32.totalorder %v783, %v796
  %vm824 = vcmp.eq.s32.totalorder %v784, %v796
  %vm825 = vcmp.eq.s32.totalorder %v781, %v799
  %vm826 = vcmp.eq.s32.totalorder %v782, %v799
  %vm827 = vcmp.eq.s32.totalorder %v783, %v799
  %vm828 = vcmp.eq.s32.totalorder %v784, %v799
  %vm829 = vcmp.eq.s32.totalorder %v781, %v802
  %vm830 = vcmp.eq.s32.totalorder %v782, %v802
  %vm831 = vcmp.eq.s32.totalorder %v783, %v802
  %vm832 = vcmp.eq.s32.totalorder %v784, %v802
  %vm833 = vcmp.eq.s32.totalorder %v781, %v805
  %vm834 = vcmp.eq.s32.totalorder %v782, %v805
  %vm835 = vcmp.eq.s32.totalorder %v783, %v805
  %vm836 = vcmp.eq.s32.totalorder %v784, %v805
  %vm837 = vcmp.eq.s32.totalorder %v781, %v808
  %vm838 = vcmp.eq.s32.totalorder %v782, %v808
  %vm839 = vcmp.eq.s32.totalorder %v783, %v808
  %vm840 = vcmp.eq.s32.totalorder %v784, %v808
  %vm841 = vcmp.eq.s32.totalorder %v781, %v811
  %vm842 = vcmp.eq.s32.totalorder %v782, %v811
  %vm843 = vcmp.eq.s32.totalorder %v783, %v811
  %vm844 = vcmp.eq.s32.totalorder %v784, %v811
  %vm845 = vcmp.eq.s32.totalorder %v781, %v814
  %vm846 = vcmp.eq.s32.totalorder %v782, %v814
  %vm847 = vcmp.eq.s32.totalorder %v783, %v814
  %vm848 = vcmp.eq.s32.totalorder %v784, %v814
  %vm849 = vcmp.eq.s32.totalorder %v781, %v817
  %vm850 = vcmp.eq.s32.totalorder %v782, %v817
  %vm851 = vcmp.eq.s32.totalorder %v783, %v817
  %vm852 = vcmp.eq.s32.totalorder %v784, %v817
  %vm853 = vcmp.eq.s32.totalorder %v781, %v820
  %vm854 = vcmp.eq.s32.totalorder %v782, %v820
  %vm855 = vcmp.eq.s32.totalorder %v783, %v820
  %vm856 = vcmp.eq.s32.totalorder %v784, %v820
  %v857 = vld [vmem:[#allocation4] sm:$0xff]
  %v858 = vld [vmem:[#allocation4 + $0x8] sm:$0xff]
  %v859 = vld [vmem:[#allocation4 + $0x10] sm:$0xff]
  %v860 = vld [vmem:[#allocation4 + $0x18] sm:$0xff]
  %v861 = vld [vmem:[#allocation4 + $0x20] sm:$0xff]
  %v862 = vld [vmem:[#allocation4 + $0x28] sm:$0xff]
  %v863 = vld [vmem:[#allocation4 + $0x30] sm:$0xff]
  %v864 = vld [vmem:[#allocation4 + $0x38] sm:$0xff]
  %v865 = vld [vmem:[#allocation4 + $0x40] sm:$0xff]
  %v866 = vsel %vm821, %v313, 0.0
  %v867 = vsel %vm822, %v315, 0.0
  %v868 = vsel %vm823, %v394, 0.0
  %v869 = vsel %vm824, %v396, 0.0
  %v870 = vsel %vm825, %v317, 0.0
  %v871 = vsel %vm826, %v319, 0.0
  %v872 = vsel %vm827, %v398, 0.0
  %v873 = vsel %vm828, %v400, 0.0
  %v874 = vsel %vm829, %v323, 0.0
  %v875 = vsel %vm830, %v325, 0.0
  %v876 = vsel %vm831, %v404, 0.0
  %v877 = vsel %vm832, %v406, 0.0
  %v878 = vsel %vm833, %v327, 0.0
  %v879 = vsel %vm834, %v329, 0.0
  %v880 = vsel %vm835, %v408, 0.0
  %v881 = vsel %vm836, %v410, 0.0
  %v882 = vsel %vm837, %v333, 0.0
  %v883 = vsel %vm838, %v335, 0.0
  %v884 = vsel %vm839, %v414, 0.0
  %v885 = vsel %vm840, %v416, 0.0
  %v886 = vsel %vm841, %v337, 0.0
  %v887 = vsel %vm842, %v339, 0.0
  %v888 = vsel %vm843, %v418, 0.0
  %v889 = vsel %vm844, %v420, 0.0
  %v890 = vsel %vm845, %v343, 0.0
  %v891 = vsel %vm846, %v345, 0.0
  %v892 = vsel %vm847, %v424, 0.0
  %v893 = vsel %vm848, %v426, 0.0
  %v894 = vsel %vm849, %v347, 0.0
  %v895 = vsel %vm850, %v349, 0.0
  %v896 = vsel %vm851, %v428, 0.0
  %v897 = vsel %vm852, %v430, 0.0
  %v898 = vsel %vm853, %v353, 0.0
  %v899 = vsel %vm854, %v355, 0.0
  %v900 = vsel %vm855, %v434, 0.0
  %v901 = vsel %vm856, %v436, 0.0
  %v902 = vadd.f32 %v866, %v867
  %v903 = vadd.f32 %v902, %v868
  %v904 = vadd.f32 %v903, %v869
  %905 = vadd.xlane.f32.xlu0 %v904
  %v906 = vpop.xlane.xlu0 %905
  %v907 = vadd.f32 %v870, %v871
  %v908 = vadd.f32 %v907, %v872
  %v909 = vadd.f32 %v908, %v873
  %910 = vadd.xlane.f32.xlu0 %v909
  %v911 = vpop.xlane.xlu0 %910
  %v912 = vadd.f32 %v874, %v875
  %v913 = vadd.f32 %v912, %v876
  %v914 = vadd.f32 %v913, %v877
  %915 = vadd.xlane.f32.xlu0 %v914
  %v916 = vpop.xlane.xlu0 %915
  %v917 = vadd.f32 %v878, %v879
  %v918 = vadd.f32 %v917, %v880
  %v919 = vadd.f32 %v918, %v881
  %920 = vadd.xlane.f32.xlu0 %v919
  %v921 = vpop.xlane.xlu0 %920
  %v922 = vadd.f32 %v882, %v883
  %v923 = vadd.f32 %v922, %v884
  %v924 = vadd.f32 %v923, %v885
  %925 = vadd.xlane.f32.xlu0 %v924
  %v926 = vpop.xlane.xlu0 %925
  %v927 = vadd.f32 %v886, %v887
  %v928 = vadd.f32 %v927, %v888
  %v929 = vadd.f32 %v928, %v889
  %930 = vadd.xlane.f32.xlu0 %v929
  %v931 = vpop.xlane.xlu0 %930
  %v932 = vadd.f32 %v890, %v891
  %v933 = vadd.f32 %v932, %v892
  %v934 = vadd.f32 %v933, %v893
  %935 = vadd.xlane.f32.xlu0 %v934
  %v936 = vpop.xlane.xlu0 %935
  %v937 = vadd.f32 %v894, %v895
  %v938 = vadd.f32 %v937, %v896
  %v939 = vadd.f32 %v938, %v897
  %940 = vadd.xlane.f32.xlu0 %v939
  %v941 = vpop.xlane.xlu0 %940
  %v942 = vadd.f32 %v898, %v899
  %v943 = vadd.f32 %v942, %v900
  %v944 = vadd.f32 %v943, %v901
  %945 = vadd.xlane.f32.xlu0 %v944
  %v946 = vpop.xlane.xlu0 %945
  %v947 = vadd.f32 %v857, %v906
  %v948 = vadd.f32 %v858, %v911
  %v949 = vadd.f32 %v859, %v916
  %v950 = vadd.f32 %v860, %v921
  %v951 = vadd.f32 %v861, %v926
  %v952 = vadd.f32 %v862, %v931
  %v953 = vadd.f32 %v863, %v936
  %v954 = vadd.f32 %v864, %v941
  %v955 = vadd.f32 %v865, %v946
  %956 = vst.msk [vmem:[#allocation4] sm:$0xff] %vm755, %v947
  %957 = vst.msk [vmem:[#allocation4 + $0x8] sm:$0xff] %vm755, %v948
  %958 = vst.msk [vmem:[#allocation4 + $0x10] sm:$0xff] %vm755, %v949
  %959 = vst.msk [vmem:[#allocation4 + $0x18] sm:$0xff] %vm755, %v950
  %960 = vst.msk [vmem:[#allocation4 + $0x20] sm:$0xff] %vm755, %v951
  %961 = vst.msk [vmem:[#allocation4 + $0x28] sm:$0xff] %vm755, %v952
  %962 = vst.msk [vmem:[#allocation4 + $0x30] sm:$0xff] %vm755, %v953
  %963 = vst.msk [vmem:[#allocation4 + $0x38] sm:$0xff] %vm755, %v954
  %964 = vst.msk [vmem:[#allocation4 + $0x40] sm:$0xff] %vm755, %v955
  // Predicated region
  $region22: #{yz_lstm_forward.3} parent=0 // pred_check
    %p965 = pneg %p18
  $region23: #{yz_lstm_forward.3} parent=0 // pred_check_branch
    %967 = sbr.rel (%p965) target = $region25
  $region24: #{yz_lstm_forward.3} parent=0 // pred_region
    %v968 = vld [vmem:[#allocation2] sm:$0xff]
    %v969 = vld [vmem:[#allocation2 + $0x8] sm:$0xff]
    %v970 = vld [vmem:[#allocation2 + $0x10] sm:$0xff]
    %v971 = vld [vmem:[#allocation2 + $0x18] sm:$0xff]
    %v972 = vld [vmem:[#allocation2 + $0x20] sm:$0xff]
    %v973 = vld [vmem:[#allocation2 + $0x28] sm:$0xff]
    %v974 = vld [vmem:[#allocation2 + $0x30] sm:$0xff]
    %v975 = vld [vmem:[#allocation2 + $0x38] sm:$0xff]
    %v976 = vld [vmem:[#allocation2 + $0x40] sm:$0xff]
    %v977 = vld [vmem:[#allocation3] sm:$0xff]
    %v978 = vld [vmem:[#allocation3 + $0x8] sm:$0xff]
    %v979 = vld [vmem:[#allocation3 + $0x10] sm:$0xff]
    %v980 = vld [vmem:[#allocation3 + $0x18] sm:$0xff]
    %v981 = vld [vmem:[#allocation3 + $0x20] sm:$0xff]
    %v982 = vld [vmem:[#allocation3 + $0x28] sm:$0xff]
    %v983 = vld [vmem:[#allocation3 + $0x30] sm:$0xff]
    %v984 = vld [vmem:[#allocation3 + $0x38] sm:$0xff]
    %v985 = vld [vmem:[#allocation3 + $0x40] sm:$0xff]
    %v986 = vlog2.pop %v977
    %v987 = vmul.f32 %v986, 0.6931472
    %v988 = vlog2.pop %v978
    %v989 = vmul.f32 %v988, 0.6931472
    %v990 = vlog2.pop %v979
    %v991 = vmul.f32 %v990, 0.6931472
    %v992 = vlog2.pop %v980
    %v993 = vmul.f32 %v992, 0.6931472
    %v994 = vlog2.pop %v981
    %v995 = vmul.f32 %v994, 0.6931472
    %v996 = vlog2.pop %v982
    %v997 = vmul.f32 %v996, 0.6931472
    %v998 = vlog2.pop %v983
    %v999 = vmul.f32 %v998, 0.6931472
    %v1000 = vlog2.pop %v984
    %v1001 = vmul.f32 %v1000, 0.6931472
    %v1002 = vlog2.pop %v985
    %v1003 = vmul.f32 %v1002, 0.6931472
    %v1004 = vadd.f32 %v968, %v987
    %v1005 = vadd.f32 %v969, %v989
    %v1006 = vadd.f32 %v970, %v991
    %v1007 = vadd.f32 %v971, %v993
    %v1008 = vadd.f32 %v972, %v995
    %v1009 = vadd.f32 %v973, %v997
    %v1010 = vadd.f32 %v974, %v999
    %v1011 = vadd.f32 %v975, %v1001
    %v1012 = vadd.f32 %v976, %v1003
    %v1013 = vld [vmem:[#allocation4] sm:$0xff]
    %v1014 = vld [vmem:[#allocation4 + $0x8] sm:$0xff]
    %v1015 = vld [vmem:[#allocation4 + $0x10] sm:$0xff]
    %v1016 = vld [vmem:[#allocation4 + $0x18] sm:$0xff]
    %v1017 = vld [vmem:[#allocation4 + $0x20] sm:$0xff]
    %v1018 = vld [vmem:[#allocation4 + $0x28] sm:$0xff]
    %v1019 = vld [vmem:[#allocation4 + $0x30] sm:$0xff]
    %v1020 = vld [vmem:[#allocation4 + $0x38] sm:$0xff]
    %v1021 = vld [vmem:[#allocation4 + $0x40] sm:$0xff]
    %v1022 = vsub.f32 %v1004, %v1013
    %v1023 = vsub.f32 %v1005, %v1014
    %v1024 = vsub.f32 %v1006, %v1015
    %v1025 = vsub.f32 %v1007, %v1016
    %v1026 = vsub.f32 %v1008, %v1017
    %v1027 = vsub.f32 %v1009, %v1018
    %v1028 = vsub.f32 %v1010, %v1019
    %v1029 = vsub.f32 %v1011, %v1020
    %v1030 = vsub.f32 %v1012, %v1021
    %1031 = vst.msk [vmem:[%s4] sm:$0xff] %vm755, %v1022
    %1032 = vst.msk [vmem:[%s4 + $0x8] sm:$0xff] %vm755, %v1023
    %1033 = vst.msk [vmem:[%s4 + $0x10] sm:$0xff] %vm755, %v1024
    %1034 = vst.msk [vmem:[%s4 + $0x18] sm:$0xff] %vm755, %v1025
    %1035 = vst.msk [vmem:[%s4 + $0x20] sm:$0xff] %vm755, %v1026
    %1036 = vst.msk [vmem:[%s4 + $0x28] sm:$0xff] %vm755, %v1027
    %1037 = vst.msk [vmem:[%s4 + $0x30] sm:$0xff] %vm755, %v1028
    %1038 = vst.msk [vmem:[%s4 + $0x38] sm:$0xff] %vm755, %v1029
    %1039 = vst.msk [vmem:[%s4 + $0x40] sm:$0xff] %vm755, %v1030
  $region25: #{yz_lstm_forward.3} parent=0 // pred_fallthru
    _
  // Predicated region
  $region26: #{yz_lstm_forward.3} parent=0 // pred_check
    _
  $region27: #{yz_lstm_forward.3} parent=0 // pred_check_branch
    %1041 = sbr.rel (0) target = $region29
  $region28: #{yz_lstm_forward.3} parent=0 // pred_region
    _
  $region29: #{yz_lstm_forward.3} parent=0 // pred_fallthru
    _
  // Predicated region
  $region30: #{yz_lstm_forward.3} parent=0 // pred_check
    _
  $region31: #{yz_lstm_forward.3} parent=0 // pred_check_branch
    %1043 = sbr.rel (0) target = $region33
  $region32: #{yz_lstm_forward.3} parent=0 // pred_region
    _
  $region33: #{yz_lstm_forward.3} parent=0 // pred_fallthru
    _

// kernel: yz_lstm_forward.2
$region0: #{yz_lstm_forward.2}
  #allocation0 [shape = 'u32[]', space=smem, size = 0x4, offset = 0x4, fixed_abs, tag = 'smem constant byte address 0x4 - core index']
  #allocation1 [shape = 'u32[144,128]{1,0:T(1,128)}', space=vmem, size = 0x12000, scoped, tag = 'internal scratch']
  #allocation2 [shape = 'f32[8,128]{1,0:T(8,128)}', space=vmem, size = 0x1000, scoped, tag = 'scratch operand']
  #allocation3 [shape = 'f32[8,128]{1,0:T(8,128)}', space=vmem, size = 0x1000, scoped, tag = 'scratch operand']
  #allocation4 [shape = 'f32[13,8,512]{2,1,0:T(8,128)}', space=vmem, size = 0x34000, scoped, tag = 'scratch operand']
  %s0 = inlined_call_operand.vmem [shape: f32[8,64], index: 0, kind: input, shape index: {}]
  %s1 = inlined_call_operand.vmem [shape: bf16[64,256], index: 1, kind: input, shape index: {}]
  %s2 = inlined_call_operand.vmem [shape: f32[1,256], index: 2, kind: input, shape index: {}]
  %s3 = inlined_call_operand.vmem [shape: f32[13,8,64], index: 3, kind: input, shape index: {}]
  %s4 = inlined_call_operand.vmem [shape: bf16[64,512], index: 4, kind: input, shape index: {}]
  %s5 = inlined_call_operand.vmem [shape: f32[1,512], index: 5, kind: input, shape index: {}]
  %s6 = inlined_call_operand.vmem [shape: bf16[128,512], index: 6, kind: input, shape index: {}]
  %s7 = inlined_call_operand.vmem [shape: f32[13,8,128], index: 7, kind: output, shape index: {}]
  %s8 = sld [smem:[#allocation0]]
  $region42: #{yz_lstm_forward.2} parent=0
    _
  %s10 = ssub.s32 1, %s8
  %s11 = scalar_select 0, %s10, %s8
  // Predicated region
  $region2: #{yz_lstm_forward.2} parent=0 // pred_check
    _
  $region3: #{yz_lstm_forward.2} parent=0 // pred_check_branch
    %13 = sbr.rel (0) target = $region5
  $region4: #{yz_lstm_forward.2} parent=0 // pred_region
    _
  $region5: #{yz_lstm_forward.2} parent=0 // pred_fallthru
    _
  // Predicated region
  $region6: #{yz_lstm_forward.2} parent=0 // pred_check
    _
  $region7: #{yz_lstm_forward.2} parent=0 // pred_check_branch
    %15 = sbr.rel (0) target = $region9
  $region8: #{yz_lstm_forward.2} parent=0 // pred_region
    _
  $region9: #{yz_lstm_forward.2} parent=0 // pred_fallthru
    _
  // Predicated region
  $region10: #{yz_lstm_forward.2} parent=0 // pred_check
    _
  $region11: #{yz_lstm_forward.2} parent=0 // pred_check_branch
    %17 = sbr.rel (0) target = $region13
  $region12: #{yz_lstm_forward.2} parent=0 // pred_region
    _
  $region13: #{yz_lstm_forward.2} parent=0 // pred_fallthru
    _
  // Predicated region
  $region14: #{yz_lstm_forward.2} parent=0 // pred_check
    _
  $region15: #{yz_lstm_forward.2} parent=0 // pred_check_branch
    %19 = sbr.rel (0) target = $region17
  $region16: #{yz_lstm_forward.2} parent=0 // pred_region
    _
  $region17: #{yz_lstm_forward.2} parent=0 // pred_fallthru
    _
  // Predicated region
  $region18: #{yz_lstm_forward.2} parent=0 // pred_check
    _
  $region19: #{yz_lstm_forward.2} parent=0 // pred_check_branch
    %21 = sbr.rel (0) target = $region21
  $region20: #{yz_lstm_forward.2} parent=0 // pred_region
    _
  $region21: #{yz_lstm_forward.2} parent=0 // pred_fallthru
    _
  // Predicated region
  $region22: #{yz_lstm_forward.2} parent=0 // pred_check
    _
  $region23: #{yz_lstm_forward.2} parent=0 // pred_check_branch
    %23 = sbr.rel (0) target = $region25
  $region24: #{yz_lstm_forward.2} parent=0 // pred_region
    _
  $region25: #{yz_lstm_forward.2} parent=0 // pred_fallthru
    _
  // Predicated region
  $region26: #{yz_lstm_forward.2} parent=0 // pred_check
    _
  $region27: #{yz_lstm_forward.2} parent=0 // pred_check_branch
    %25 = sbr.rel (0) target = $region29
  $region28: #{yz_lstm_forward.2} parent=0 // pred_region
    _
  $region29: #{yz_lstm_forward.2} parent=0 // pred_fallthru
    _
  %p27 = scmp.eq.s32.totalorder 0, 0
  // Predicated region
  $region30: #{yz_lstm_forward.2} parent=0 // pred_check
    %p28 = pneg %p27
  $region31: #{yz_lstm_forward.2} parent=0 // pred_check_branch
    %30 = sbr.rel (%p28) target = $region33
  $region32: #{yz_lstm_forward.2} parent=0 // pred_region
    %v31 = vld [vmem:[%s0] sm:$0xff]
    %v32 = vpack.c.bf16 %v31, %v31
    %v33 = vld [vmem:[%s1] sm:$0xff]
    %v34 = vld [vmem:[%s1 + $0x8] sm:$0xff]
    %v35 = vld [vmem:[%s1 + $0x10] sm:$0xff]
    %v36 = vld [vmem:[%s1 + $0x18] sm:$0xff]
    %v37 = vld [vmem:[%s1 + $0x20] sm:$0xff]
    %v38 = vld [vmem:[%s1 + $0x28] sm:$0xff]
    %v39 = vld [vmem:[%s1 + $0x30] sm:$0xff]
    %v40 = vld [vmem:[%s1 + $0x38] sm:$0xff]
    %v41 = vld [vmem:[%s2] sm:$0x3]
    %v43 = vlaneseq
    %v44 = vshrl.u32 %v43, 7
    %v45 = vsub.s32 0, %v44
    %v46 = vrot.slane %v41, %v45
    %v47 = vlaneseq
    %v48 = vshrl.u32 %v47, 7
    %v49 = vsub.s32 1, %v48
    %v50 = vrot.slane %v41, %v49
    %v61 = vunpack.c.l.b16 %v33
    %v62 = vunpack.c.h.b16 %v33
    %v63 = vunpack.c.l.b16 %v34
    %v64 = vunpack.c.h.b16 %v34
    %v65 = vunpack.c.l.b16 %v35
    %v66 = vunpack.c.h.b16 %v35
    %v67 = vunpack.c.l.b16 %v36
    %v68 = vunpack.c.h.b16 %v36
    %v69 = vunpack.c.l.b16 %v37
    %v70 = vunpack.c.h.b16 %v37
    %v71 = vunpack.c.l.b16 %v38
    %v72 = vunpack.c.h.b16 %v38
    %v73 = vunpack.c.l.b16 %v39
    %v74 = vunpack.c.h.b16 %v39
    %v75 = vunpack.c.l.b16 %v40
    %v76 = vunpack.c.h.b16 %v40
    %v77 = vpack.c.b16 %v63, %v61
    %v78 = vpack.c.b16 %v64, %v62
    %v79 = vpack.c.b16 %v67, %v65
    %v80 = vpack.c.b16 %v68, %v66
    %v81 = vpack.c.b16 %v71, %v69
    %v82 = vpack.c.b16 %v72, %v70
    %v83 = vpack.c.b16 %v75, %v73
    %v84 = vpack.c.b16 %v76, %v74
    %vm93 = vcmask 523264
    %v95 = vsel %vm93, %v32, 0
    %97 = vmatprep.subr.bf16.mxu0 0
    %98 = vmatpush1.bf16.msra.mxu0 0
    %99 = vmatprep.subr.bf16.mxu0 0
    %100 = vmatpush1.bf16.msra.mxu0 0
    %101 = vmatprep.subr.bf16.mxu0 0
    %102 = vmatpush1.bf16.msra.mxu0 0
    %103 = vmatprep.subr.bf16.mxu0 0
    %104 = vmatpush1.bf16.msra.mxu0 0
    %105 = vmatprep.subr.bf16.mxu0 %v84
    %106 = vmatpush1.bf16.msra.mxu0 %v83
    %107 = vmatprep.subr.bf16.mxu0 %v82
    %108 = vmatpush1.bf16.msra.mxu0 %v81
    %109 = vmatprep.subr.bf16.mxu0 %v80
    %110 = vmatpush1.bf16.msra.mxu0 %v79
    %111 = vmatprep.subr.bf16.mxu0 %v78
    %112 = vmatpush1.bf16.msra.mxu0 %v77
    %113 = vmatprep.subr.bf16.mxu0 0
    %114 = vmatpush2.bf16.msra.mxu0 0
    %115 = vmatprep.subr.bf16.mxu0 0
    %116 = vmatpush2.bf16.msra.mxu0 0
    %117 = vmatprep.subr.bf16.mxu0 0
    %118 = vmatpush2.bf16.msra.mxu0 0
    %119 = vmatprep.subr.bf16.mxu0 0
    %120 = vmatpush2.bf16.msra.mxu0 0
    %121 = vmatprep.subr.bf16.mxu0 0
    %122 = vmatpush2.bf16.msra.mxu0 0
    %123 = vmatprep.subr.bf16.mxu0 0
    %124 = vmatpush2.bf16.msra.mxu0 0
    %125 = vmatprep.subr.bf16.mxu0 0
    %126 = vmatpush2.bf16.msra.mxu0 0
    %127 = vmatprep.subr.bf16.mxu0 0
    %128 = vmatpush2.bf16.msra.mxu0 0
    %129 = vmatprep.mubr.bf16.mxu0 0
    %130 = vmatmul.mubr.bf16.gmra.mxu0 %v95
    %v131 = vpop.f32.mrf.mxu0
    %v132 = vadd.f32 %v46, %v131
    %v133 = vpop.f32.mrf.mxu0
    %v134 = vadd.f32 %v50, %v133
    %v135 = vpop.f32.mrf.mxu0
    %v136 = vpop.f32.mrf.mxu0
    %137 = vdwg.mxu0
    %138 = vst [vmem:[#allocation2] sm:$0xff] %v132
    %139 = vst [vmem:[#allocation3] sm:$0xff] %v134
  $region33: #{yz_lstm_forward.2} parent=0 // pred_fallthru
    _
  %v140 = vld [vmem:[%s3] sm:$0xff]
  %v141 = vld [vmem:[%s3 + $0x8] sm:$0xff]
  %v142 = vld [vmem:[%s3 + $0x10] sm:$0xff]
  %v143 = vld [vmem:[%s3 + $0x18] sm:$0xff]
  %v144 = vld [vmem:[%s3 + $0x20] sm:$0xff]
  %v145 = vld [vmem:[%s3 + $0x28] sm:$0xff]
  %v146 = vld [vmem:[%s3 + $0x30] sm:$0xff]
  %v147 = vld [vmem:[%s3 + $0x38] sm:$0xff]
  %v148 = vld [vmem:[%s3 + $0x40] sm:$0xff]
  %v149 = vld [vmem:[%s3 + $0x48] sm:$0xff]
  %v150 = vld [vmem:[%s3 + $0x50] sm:$0xff]
  %v151 = vld [vmem:[%s3 + $0x58] sm:$0xff]
  %v152 = vld [vmem:[%s3 + $0x60] sm:$0xff]
  %v153 = vpack.c.bf16 %v141, %v140
  %v154 = vpack.c.bf16 %v143, %v142
  %v155 = vpack.c.bf16 %v145, %v144
  %v156 = vpack.c.bf16 %v147, %v146
  %v157 = vpack.c.bf16 %v149, %v148
  %v158 = vpack.c.bf16 %v151, %v150
  %v159 = vpack.c.bf16 %v152, %v152
  %v160 = vld [vmem:[%s4] sm:$0xff]
  %v161 = vld [vmem:[%s4 + $0x8] sm:$0xff]
  %v162 = vld [vmem:[%s4 + $0x10] sm:$0xff]
  %v163 = vld [vmem:[%s4 + $0x18] sm:$0xff]
  %v164 = vld [vmem:[%s4 + $0x20] sm:$0xff]
  %v165 = vld [vmem:[%s4 + $0x28] sm:$0xff]
  %v166 = vld [vmem:[%s4 + $0x30] sm:$0xff]
  %v167 = vld [vmem:[%s4 + $0x38] sm:$0xff]
  %v168 = vld [vmem:[%s4 + $0x40] sm:$0xff]
  %v169 = vld [vmem:[%s4 + $0x48] sm:$0xff]
  %v170 = vld [vmem:[%s4 + $0x50] sm:$0xff]
  %v171 = vld [vmem:[%s4 + $0x58] sm:$0xff]
  %v172 = vld [vmem:[%s4 + $0x60] sm:$0xff]
  %v173 = vld [vmem:[%s4 + $0x68] sm:$0xff]
  %v174 = vld [vmem:[%s4 + $0x70] sm:$0xff]
  %v175 = vld [vmem:[%s4 + $0x78] sm:$0xff]
  %v176 = vld [vmem:[%s5] sm:$0xf]
  %v178 = vlaneseq
  %v179 = vshrl.u32 %v178, 7
  %v180 = vsub.s32 0, %v179
  %v181 = vrot.slane %v176, %v180
  %v182 = vlaneseq
  %v183 = vshrl.u32 %v182, 7
  %v184 = vsub.s32 1, %v183
  %v185 = vrot.slane %v176, %v184
  %v186 = vlaneseq
  %v187 = vshrl.u32 %v186, 7
  %v188 = vsub.s32 2, %v187
  %v189 = vrot.slane %v176, %v188
  %v190 = vlaneseq
  %v191 = vshrl.u32 %v190, 7
  %v192 = vsub.s32 3, %v191
  %v193 = vrot.slane %v176, %v192
  %v214 = vunpack.c.l.b16 %v160
  %v215 = vunpack.c.h.b16 %v160
  %v216 = vunpack.c.l.b16 %v161
  %v217 = vunpack.c.h.b16 %v161
  %v218 = vunpack.c.l.b16 %v162
  %v219 = vunpack.c.h.b16 %v162
  %v220 = vunpack.c.l.b16 %v163
  %v221 = vunpack.c.h.b16 %v163
  %v222 = vunpack.c.l.b16 %v164
  %v223 = vunpack.c.h.b16 %v164
  %v224 = vunpack.c.l.b16 %v165
  %v225 = vunpack.c.h.b16 %v165
  %v226 = vunpack.c.l.b16 %v166
  %v227 = vunpack.c.h.b16 %v166
  %v228 = vunpack.c.l.b16 %v167
  %v229 = vunpack.c.h.b16 %v167
  %v230 = vunpack.c.l.b16 %v168
  %v231 = vunpack.c.h.b16 %v168
  %v232 = vunpack.c.l.b16 %v169
  %v233 = vunpack.c.h.b16 %v169
  %v234 = vunpack.c.l.b16 %v170
  %v235 = vunpack.c.h.b16 %v170
  %v236 = vunpack.c.l.b16 %v171
  %v237 = vunpack.c.h.b16 %v171
  %v238 = vunpack.c.l.b16 %v172
  %v239 = vunpack.c.h.b16 %v172
  %v240 = vunpack.c.l.b16 %v173
  %v241 = vunpack.c.h.b16 %v173
  %v242 = vunpack.c.l.b16 %v174
  %v243 = vunpack.c.h.b16 %v174
  %v244 = vunpack.c.l.b16 %v175
  %v245 = vunpack.c.h.b16 %v175
  %v246 = vpack.c.b16 %v218, %v214
  %v247 = vpack.c.b16 %v219, %v215
  %v248 = vpack.c.b16 %v220, %v216
  %v249 = vpack.c.b16 %v221, %v217
  %v250 = vpack.c.b16 %v226, %v222
  %v251 = vpack.c.b16 %v227, %v223
  %v252 = vpack.c.b16 %v228, %v224
  %v253 = vpack.c.b16 %v229, %v225
  %v254 = vpack.c.b16 %v234, %v230
  %v255 = vpack.c.b16 %v235, %v231
  %v256 = vpack.c.b16 %v236, %v232
  %v257 = vpack.c.b16 %v237, %v233
  %v258 = vpack.c.b16 %v242, %v238
  %v259 = vpack.c.b16 %v243, %v239
  %v260 = vpack.c.b16 %v244, %v240
  %v261 = vpack.c.b16 %v245, %v241
  %vm278 = vcmask 523264
  %v280 = vsel %vm278, %v153, 0
  %v283 = vsel %vm278, %v154, 0
  %v286 = vsel %vm278, %v155, 0
  %v289 = vsel %vm278, %v156, 0
  %v292 = vsel %vm278, %v157, 0
  %v295 = vsel %vm278, %v158, 0
  %v298 = vsel %vm278, %v159, 0
  %300 = vmatprep.subr.bf16.mxu0 0
  %301 = vmatpush1.bf16.msra.mxu0 0
  %302 = vmatprep.subr.bf16.mxu0 0
  %303 = vmatpush1.bf16.msra.mxu0 0
  %304 = vmatprep.subr.bf16.mxu0 0
  %305 = vmatpush1.bf16.msra.mxu0 0
  %306 = vmatprep.subr.bf16.mxu0 0
  %307 = vmatpush1.bf16.msra.mxu0 0
  %308 = vmatprep.subr.bf16.mxu0 %v259
  %309 = vmatpush1.bf16.msra.mxu0 %v258
  %310 = vmatprep.subr.bf16.mxu0 %v255
  %311 = vmatpush1.bf16.msra.mxu0 %v254
  %312 = vmatprep.subr.bf16.mxu0 %v251
  %313 = vmatpush1.bf16.msra.mxu0 %v250
  %314 = vmatprep.subr.bf16.mxu0 %v247
  %315 = vmatpush1.bf16.msra.mxu0 %v246
  %316 = vmatprep.subr.bf16.mxu0 0
  %317 = vmatpush2.bf16.msra.mxu0 0
  %318 = vmatprep.subr.bf16.mxu0 0
  %319 = vmatpush2.bf16.msra.mxu0 0
  %320 = vmatprep.subr.bf16.mxu0 0
  %321 = vmatpush2.bf16.msra.mxu0 0
  %322 = vmatprep.subr.bf16.mxu0 0
  %323 = vmatpush2.bf16.msra.mxu0 0
  %324 = vmatprep.subr.bf16.mxu0 0
  %325 = vmatpush2.bf16.msra.mxu0 0
  %326 = vmatprep.subr.bf16.mxu0 0
  %327 = vmatpush2.bf16.msra.mxu0 0
  %328 = vmatprep.subr.bf16.mxu0 0
  %329 = vmatpush2.bf16.msra.mxu0 0
  %330 = vmatprep.subr.bf16.mxu0 0
  %331 = vmatpush2.bf16.msra.mxu0 0
  %332 = vmatprep.mubr.bf16.mxu0 0
  %333 = vmatmul.mubr.bf16.gmra.mxu0 %v280
  %v334 = vpop.f32.mrf.mxu0
  %v335 = vadd.f32 %v181, %v334
  %v336 = vpop.f32.mrf.mxu0
  %v337 = vadd.f32 %v185, %v336
  %v338 = vpop.f32.mrf.mxu0
  %v339 = vadd.f32 %v181, %v338
  %v340 = vpop.f32.mrf.mxu0
  %v341 = vadd.f32 %v185, %v340
  %342 = vmatprep.mubr.bf16.mxu0 0
  %343 = vmatmul.mubr.bf16.gmra.mxu0 %v283
  %v344 = vpop.f32.mrf.mxu0
  %v345 = vadd.f32 %v181, %v344
  %v346 = vpop.f32.mrf.mxu0
  %v347 = vadd.f32 %v185, %v346
  %v348 = vpop.f32.mrf.mxu0
  %v349 = vadd.f32 %v181, %v348
  %v350 = vpop.f32.mrf.mxu0
  %v351 = vadd.f32 %v185, %v350
  %352 = vmatprep.mubr.bf16.mxu0 0
  %353 = vmatmul.mubr.bf16.gmra.mxu0 %v286
  %v354 = vpop.f32.mrf.mxu0
  %v355 = vadd.f32 %v181, %v354
  %v356 = vpop.f32.mrf.mxu0
  %v357 = vadd.f32 %v185, %v356
  %v358 = vpop.f32.mrf.mxu0
  %v359 = vadd.f32 %v181, %v358
  %v360 = vpop.f32.mrf.mxu0
  %v361 = vadd.f32 %v185, %v360
  %362 = vmatprep.mubr.bf16.mxu0 0
  %363 = vmatmul.mubr.bf16.gmra.mxu0 %v289
  %v364 = vpop.f32.mrf.mxu0
  %v365 = vadd.f32 %v181, %v364
  %v366 = vpop.f32.mrf.mxu0
  %v367 = vadd.f32 %v185, %v366
  %v368 = vpop.f32.mrf.mxu0
  %v369 = vadd.f32 %v181, %v368
  %v370 = vpop.f32.mrf.mxu0
  %v371 = vadd.f32 %v185, %v370
  %372 = vmatprep.mubr.bf16.mxu0 0
  %373 = vmatmul.mubr.bf16.gmra.mxu0 %v292
  %v374 = vpop.f32.mrf.mxu0
  %v375 = vadd.f32 %v181, %v374
  %v376 = vpop.f32.mrf.mxu0
  %v377 = vadd.f32 %v185, %v376
  %v378 = vpop.f32.mrf.mxu0
  %v379 = vadd.f32 %v181, %v378
  %v380 = vpop.f32.mrf.mxu0
  %v381 = vadd.f32 %v185, %v380
  %382 = vmatprep.mubr.bf16.mxu0 0
  %383 = vmatmul.mubr.bf16.gmra.mxu0 %v295
  %v384 = vpop.f32.mrf.mxu0
  %v385 = vadd.f32 %v181, %v384
  %v386 = vpop.f32.mrf.mxu0
  %v387 = vadd.f32 %v185, %v386
  %v388 = vpop.f32.mrf.mxu0
  %v389 = vadd.f32 %v181, %v388
  %v390 = vpop.f32.mrf.mxu0
  %v391 = vadd.f32 %v185, %v390
  %392 = vmatprep.mubr.bf16.mxu0 0
  %393 = vmatmul.mubr.bf16.gmra.mxu0 %v298
  %v394 = vpop.f32.mrf.mxu0
  %v395 = vadd.f32 %v181, %v394
  %v396 = vpop.f32.mrf.mxu0
  %v397 = vadd.f32 %v185, %v396
  %v398 = vpop.f32.mrf.mxu0
  %v399 = vpop.f32.mrf.mxu0
  %400 = vdwg.mxu0
  %401 = vmatprep.subr.bf16.mxu0 0
  %402 = vmatpush1.bf16.msra.mxu0 0
  %403 = vmatprep.subr.bf16.mxu0 0
  %404 = vmatpush1.bf16.msra.mxu0 0
  %405 = vmatprep.subr.bf16.mxu0 0
  %406 = vmatpush1.bf16.msra.mxu0 0
  %407 = vmatprep.subr.bf16.mxu0 0
  %408 = vmatpush1.bf16.msra.mxu0 0
  %409 = vmatprep.subr.bf16.mxu0 %v261
  %410 = vmatpush1.bf16.msra.mxu0 %v260
  %411 = vmatprep.subr.bf16.mxu0 %v257
  %412 = vmatpush1.bf16.msra.mxu0 %v256
  %413 = vmatprep.subr.bf16.mxu0 %v253
  %414 = vmatpush1.bf16.msra.mxu0 %v252
  %415 = vmatprep.subr.bf16.mxu0 %v249
  %416 = vmatpush1.bf16.msra.mxu0 %v248
  %417 = vmatprep.subr.bf16.mxu0 0
  %418 = vmatpush2.bf16.msra.mxu0 0
  %419 = vmatprep.subr.bf16.mxu0 0
  %420 = vmatpush2.bf16.msra.mxu0 0
  %421 = vmatprep.subr.bf16.mxu0 0
  %422 = vmatpush2.bf16.msra.mxu0 0
  %423 = vmatprep.subr.bf16.mxu0 0
  %424 = vmatpush2.bf16.msra.mxu0 0
  %425 = vmatprep.subr.bf16.mxu0 0
  %426 = vmatpush2.bf16.msra.mxu0 0
  %427 = vmatprep.subr.bf16.mxu0 0
  %428 = vmatpush2.bf16.msra.mxu0 0
  %429 = vmatprep.subr.bf16.mxu0 0
  %430 = vmatpush2.bf16.msra.mxu0 0
  %431 = vmatprep.subr.bf16.mxu0 0
  %432 = vmatpush2.bf16.msra.mxu0 0
  %433 = vmatprep.mubr.bf16.mxu0 0
  %434 = vmatmul.mubr.bf16.gmra.mxu0 %v280
  %v435 = vpop.f32.mrf.mxu0
  %v436 = vadd.f32 %v189, %v435
  %v437 = vpop.f32.mrf.mxu0
  %v438 = vadd.f32 %v193, %v437
  %v439 = vpop.f32.mrf.mxu0
  %v440 = vadd.f32 %v189, %v439
  %v441 = vpop.f32.mrf.mxu0
  %v442 = vadd.f32 %v193, %v441
  %443 = vmatprep.mubr.bf16.mxu0 0
  %444 = vmatmul.mubr.bf16.gmra.mxu0 %v283
  %v445 = vpop.f32.mrf.mxu0
  %v446 = vadd.f32 %v189, %v445
  %v447 = vpop.f32.mrf.mxu0
  %v448 = vadd.f32 %v193, %v447
  %v449 = vpop.f32.mrf.mxu0
  %v450 = vadd.f32 %v189, %v449
  %v451 = vpop.f32.mrf.mxu0
  %v452 = vadd.f32 %v193, %v451
  %453 = vmatprep.mubr.bf16.mxu0 0
  %454 = vmatmul.mubr.bf16.gmra.mxu0 %v286
  %v455 = vpop.f32.mrf.mxu0
  %v456 = vadd.f32 %v189, %v455
  %v457 = vpop.f32.mrf.mxu0
  %v458 = vadd.f32 %v193, %v457
  %v459 = vpop.f32.mrf.mxu0
  %v460 = vadd.f32 %v189, %v459
  %v461 = vpop.f32.mrf.mxu0
  %v462 = vadd.f32 %v193, %v461
  %463 = vmatprep.mubr.bf16.mxu0 0
  %464 = vmatmul.mubr.bf16.gmra.mxu0 %v289
  %v465 = vpop.f32.mrf.mxu0
  %v466 = vadd.f32 %v189, %v465
  %v467 = vpop.f32.mrf.mxu0
  %v468 = vadd.f32 %v193, %v467
  %v469 = vpop.f32.mrf.mxu0
  %v470 = vadd.f32 %v189, %v469
  %v471 = vpop.f32.mrf.mxu0
  %v472 = vadd.f32 %v193, %v471
  %473 = vmatprep.mubr.bf16.mxu0 0
  %474 = vmatmul.mubr.bf16.gmra.mxu0 %v292
  %v475 = vpop.f32.mrf.mxu0
  %v476 = vadd.f32 %v189, %v475
  %v477 = vpop.f32.mrf.mxu0
  %v478 = vadd.f32 %v193, %v477
  %v479 = vpop.f32.mrf.mxu0
  %v480 = vadd.f32 %v189, %v479
  %v481 = vpop.f32.mrf.mxu0
  %v482 = vadd.f32 %v193, %v481
  %483 = vmatprep.mubr.bf16.mxu0 0
  %484 = vmatmul.mubr.bf16.gmra.mxu0 %v295
  %v485 = vpop.f32.mrf.mxu0
  %v486 = vadd.f32 %v189, %v485
  %v487 = vpop.f32.mrf.mxu0
  %v488 = vadd.f32 %v193, %v487
  %v489 = vpop.f32.mrf.mxu0
  %v490 = vadd.f32 %v189, %v489
  %v491 = vpop.f32.mrf.mxu0
  %v492 = vadd.f32 %v193, %v491
  %493 = vmatprep.mubr.bf16.mxu0 0
  %494 = vmatmul.mubr.bf16.gmra.mxu0 %v298
  %v495 = vpop.f32.mrf.mxu0
  %v496 = vadd.f32 %v189, %v495
  %v497 = vpop.f32.mrf.mxu0
  %v498 = vadd.f32 %v193, %v497
  %v499 = vpop.f32.mrf.mxu0
  %v500 = vpop.f32.mrf.mxu0
  %501 = vdwg.mxu0
  %502 = vst [vmem:[#allocation4] sm:$0xff] %v335
  %503 = vst [vmem:[#allocation4 + $0x8] sm:$0xff] %v337
  %504 = vst [vmem:[#allocation4 + $0x10] sm:$0xff] %v436
  %505 = vst [vmem:[#allocation4 + $0x18] sm:$0xff] %v438
  %506 = vst [vmem:[#allocation4 + $0x20] sm:$0xff] %v339
  %507 = vst [vmem:[#allocation4 + $0x28] sm:$0xff] %v341
  %508 = vst [vmem:[#allocation4 + $0x30] sm:$0xff] %v440
  %509 = vst [vmem:[#allocation4 + $0x38] sm:$0xff] %v442
  %510 = vst [vmem:[#allocation4 + $0x40] sm:$0xff] %v345
  %511 = vst [vmem:[#allocation4 + $0x48] sm:$0xff] %v347
  %512 = vst [vmem:[#allocation4 + $0x50] sm:$0xff] %v446
  %513 = vst [vmem:[#allocation4 + $0x58] sm:$0xff] %v448
  %514 = vst [vmem:[#allocation4 + $0x60] sm:$0xff] %v349
  %515 = vst [vmem:[#allocation4 + $0x68] sm:$0xff] %v351
  %516 = vst [vmem:[#allocation4 + $0x70] sm:$0xff] %v450
  %517 = vst [vmem:[#allocation4 + $0x78] sm:$0xff] %v452
  %518 = vst [vmem:[#allocation4 + $0x80] sm:$0xff] %v355
  %519 = vst [vmem:[#allocation4 + $0x88] sm:$0xff] %v357
  %520 = vst [vmem:[#allocation4 + $0x90] sm:$0xff] %v456
  %521 = vst [vmem:[#allocation4 + $0x98] sm:$0xff] %v458
  %522 = vst [vmem:[#allocation4 + $0xa0] sm:$0xff] %v359
  %523 = vst [vmem:[#allocation4 + $0xa8] sm:$0xff] %v361
  %524 = vst [vmem:[#allocation4 + $0xb0] sm:$0xff] %v460
  %525 = vst [vmem:[#allocation4 + $0xb8] sm:$0xff] %v462
  %526 = vst [vmem:[#allocation4 + $0xc0] sm:$0xff] %v365
  %527 = vst [vmem:[#allocation4 + $0xc8] sm:$0xff] %v367
  %528 = vst [vmem:[#allocation4 + $0xd0] sm:$0xff] %v466
  %529 = vst [vmem:[#allocation4 + $0xd8] sm:$0xff] %v468
  %530 = vst [vmem:[#allocation4 + $0xe0] sm:$0xff] %v369
  %531 = vst [vmem:[#allocation4 + $0xe8] sm:$0xff] %v371
  %532 = vst [vmem:[#allocation4 + $0xf0] sm:$0xff] %v470
  %533 = vst [vmem:[#allocation4 + $0xf8] sm:$0xff] %v472
  %534 = vst [vmem:[#allocation4 + $0x100] sm:$0xff] %v375
  %535 = vst [vmem:[#allocation4 + $0x108] sm:$0xff] %v377
  %536 = vst [vmem:[#allocation4 + $0x110] sm:$0xff] %v476
  %537 = vst [vmem:[#allocation4 + $0x118] sm:$0xff] %v478
  %538 = vst [vmem:[#allocation4 + $0x120] sm:$0xff] %v379
  %539 = vst [vmem:[#allocation4 + $0x128] sm:$0xff] %v381
  %540 = vst [vmem:[#allocation4 + $0x130] sm:$0xff] %v480
  %541 = vst [vmem:[#allocation4 + $0x138] sm:$0xff] %v482
  %542 = vst [vmem:[#allocation4 + $0x140] sm:$0xff] %v385
  %543 = vst [vmem:[#allocation4 + $0x148] sm:$0xff] %v387
  %544 = vst [vmem:[#allocation4 + $0x150] sm:$0xff] %v486
  %545 = vst [vmem:[#allocation4 + $0x158] sm:$0xff] %v488
  %546 = vst [vmem:[#allocation4 + $0x160] sm:$0xff] %v389
  %547 = vst [vmem:[#allocation4 + $0x168] sm:$0xff] %v391
  %548 = vst [vmem:[#allocation4 + $0x170] sm:$0xff] %v490
  %549 = vst [vmem:[#allocation4 + $0x178] sm:$0xff] %v492
  %550 = vst [vmem:[#allocation4 + $0x180] sm:$0xff] %v395
  %551 = vst [vmem:[#allocation4 + $0x188] sm:$0xff] %v397
  %552 = vst [vmem:[#allocation4 + $0x190] sm:$0xff] %v496
  %553 = vst [vmem:[#allocation4 + $0x198] sm:$0xff] %v498
  %v554 = vld [vmem:[%s6] sm:$0xff]
  %v555 = vld [vmem:[%s6 + $0x8] sm:$0xff]
  %v556 = vld [vmem:[%s6 + $0x10] sm:$0xff]
  %v557 = vld [vmem:[%s6 + $0x18] sm:$0xff]
  %v558 = vld [vmem:[%s6 + $0x20] sm:$0xff]
  %v559 = vld [vmem:[%s6 + $0x28] sm:$0xff]
  %v560 = vld [vmem:[%s6 + $0x30] sm:$0xff]
  %v561 = vld [vmem:[%s6 + $0x38] sm:$0xff]
  %v562 = vld [vmem:[%s6 + $0x40] sm:$0xff]
  %v563 = vld [vmem:[%s6 + $0x48] sm:$0xff]
  %v564 = vld [vmem:[%s6 + $0x50] sm:$0xff]
  %v565 = vld [vmem:[%s6 + $0x58] sm:$0xff]
  %v566 = vld [vmem:[%s6 + $0x60] sm:$0xff]
  %v567 = vld [vmem:[%s6 + $0x68] sm:$0xff]
  %v568 = vld [vmem:[%s6 + $0x70] sm:$0xff]
  %v569 = vld [vmem:[%s6 + $0x78] sm:$0xff]
  %v570 = vld [vmem:[%s6 + $0x80] sm:$0xff]
  %v571 = vld [vmem:[%s6 + $0x88] sm:$0xff]
  %v572 = vld [vmem:[%s6 + $0x90] sm:$0xff]
  %v573 = vld [vmem:[%s6 + $0x98] sm:$0xff]
  %v574 = vld [vmem:[%s6 + $0xa0] sm:$0xff]
  %v575 = vld [vmem:[%s6 + $0xa8] sm:$0xff]
  %v576 = vld [vmem:[%s6 + $0xb0] sm:$0xff]
  %v577 = vld [vmem:[%s6 + $0xb8] sm:$0xff]
  %v578 = vld [vmem:[%s6 + $0xc0] sm:$0xff]
  %v579 = vld [vmem:[%s6 + $0xc8] sm:$0xff]
  %v580 = vld [vmem:[%s6 + $0xd0] sm:$0xff]
  %v581 = vld [vmem:[%s6 + $0xd8] sm:$0xff]
  %v582 = vld [vmem:[%s6 + $0xe0] sm:$0xff]
  %v583 = vld [vmem:[%s6 + $0xe8] sm:$0xff]
  %v584 = vld [vmem:[%s6 + $0xf0] sm:$0xff]
  %v585 = vld [vmem:[%s6 + $0xf8] sm:$0xff]
  %v586 = vld [vmem:[#allocation4] sm:$0xff]
  %v587 = vld [vmem:[#allocation4 + $0x8] sm:$0xff]
  %v588 = vld [vmem:[#allocation4 + $0x10] sm:$0xff]
  %v589 = vld [vmem:[#allocation4 + $0x18] sm:$0xff]
  %v590 = vld [vmem:[#allocation2] sm:$0xff]
  %v591 = vpack.c.bf16 %v590, %v590
  %v624 = vunpack.c.l.b16 %v554
  %v625 = vunpack.c.h.b16 %v554
  %v626 = vunpack.c.l.b16 %v555
  %v627 = vunpack.c.h.b16 %v555
  %v628 = vunpack.c.l.b16 %v556
  %v629 = vunpack.c.h.b16 %v556
  %v630 = vunpack.c.l.b16 %v557
  %v631 = vunpack.c.h.b16 %v557
  %v632 = vunpack.c.l.b16 %v558
  %v633 = vunpack.c.h.b16 %v558
  %v634 = vunpack.c.l.b16 %v559
  %v635 = vunpack.c.h.b16 %v559
  %v636 = vunpack.c.l.b16 %v560
  %v637 = vunpack.c.h.b16 %v560
  %v638 = vunpack.c.l.b16 %v561
  %v639 = vunpack.c.h.b16 %v561
  %v640 = vunpack.c.l.b16 %v562
  %v641 = vunpack.c.h.b16 %v562
  %v642 = vunpack.c.l.b16 %v563
  %v643 = vunpack.c.h.b16 %v563
  %v644 = vunpack.c.l.b16 %v564
  %v645 = vunpack.c.h.b16 %v564
  %v646 = vunpack.c.l.b16 %v565
  %v647 = vunpack.c.h.b16 %v565
  %v648 = vunpack.c.l.b16 %v566
  %v649 = vunpack.c.h.b16 %v566
  %v650 = vunpack.c.l.b16 %v567
  %v651 = vunpack.c.h.b16 %v567
  %v652 = vunpack.c.l.b16 %v568
  %v653 = vunpack.c.h.b16 %v568
  %v654 = vunpack.c.l.b16 %v569
  %v655 = vunpack.c.h.b16 %v569
  %v656 = vunpack.c.l.b16 %v570
  %v657 = vunpack.c.h.b16 %v570
  %v658 = vunpack.c.l.b16 %v571
  %v659 = vunpack.c.h.b16 %v571
  %v660 = vunpack.c.l.b16 %v572
  %v661 = vunpack.c.h.b16 %v572
  %v662 = vunpack.c.l.b16 %v573
  %v663 = vunpack.c.h.b16 %v573
  %v664 = vunpack.c.l.b16 %v574
  %v665 = vunpack.c.h.b16 %v574
  %v666 = vunpack.c.l.b16 %v575
  %v667 = vunpack.c.h.b16 %v575
  %v668 = vunpack.c.l.b16 %v576
  %v669 = vunpack.c.h.b16 %v576
  %v670 = vunpack.c.l.b16 %v577
  %v671 = vunpack.c.h.b16 %v577
  %v672 = vunpack.c.l.b16 %v578
  %v673 = vunpack.c.h.b16 %v578
  %v674 = vunpack.c.l.b16 %v579
  %v675 = vunpack.c.h.b16 %v579
  %v676 = vunpack.c.l.b16 %v580
  %v677 = vunpack.c.h.b16 %v580
  %v678 = vunpack.c.l.b16 %v581
  %v679 = vunpack.c.h.b16 %v581
  %v680 = vunpack.c.l.b16 %v582
  %v681 = vunpack.c.h.b16 %v582
  %v682 = vunpack.c.l.b16 %v583
  %v683 = vunpack.c.h.b16 %v583
  %v684 = vunpack.c.l.b16 %v584
  %v685 = vunpack.c.h.b16 %v584
  %v686 = vunpack.c.l.b16 %v585
  %v687 = vunpack.c.h.b16 %v585
  %v688 = vpack.c.b16 %v628, %v624
  %v689 = vpack.c.b16 %v629, %v625
  %v690 = vpack.c.b16 %v630, %v626
  %v691 = vpack.c.b16 %v631, %v627
  %v692 = vpack.c.b16 %v636, %v632
  %v693 = vpack.c.b16 %v637, %v633
  %v694 = vpack.c.b16 %v638, %v634
  %v695 = vpack.c.b16 %v639, %v635
  %v696 = vpack.c.b16 %v644, %v640
  %v697 = vpack.c.b16 %v645, %v641
  %v698 = vpack.c.b16 %v646, %v642
  %v699 = vpack.c.b16 %v647, %v643
  %v700 = vpack.c.b16 %v652, %v648
  %v701 = vpack.c.b16 %v653, %v649
  %v702 = vpack.c.b16 %v654, %v650
  %v703 = vpack.c.b16 %v655, %v651
  %v704 = vpack.c.b16 %v660, %v656
  %v705 = vpack.c.b16 %v661, %v657
  %v706 = vpack.c.b16 %v662, %v658
  %v707 = vpack.c.b16 %v663, %v659
  %v708 = vpack.c.b16 %v668, %v664
  %v709 = vpack.c.b16 %v669, %v665
  %v710 = vpack.c.b16 %v670, %v666
  %v711 = vpack.c.b16 %v671, %v667
  %v712 = vpack.c.b16 %v676, %v672
  %v713 = vpack.c.b16 %v677, %v673
  %v714 = vpack.c.b16 %v678, %v674
  %v715 = vpack.c.b16 %v679, %v675
  %v716 = vpack.c.b16 %v684, %v680
  %v717 = vpack.c.b16 %v685, %v681
  %v718 = vpack.c.b16 %v686, %v682
  %v719 = vpack.c.b16 %v687, %v683
  %752 = vmatprep.subr.bf16.mxu0 %v717
  %753 = vmatpush1.bf16.msra.mxu0 %v716
  %754 = vmatprep.subr.bf16.mxu0 %v713
  %755 = vmatpush1.bf16.msra.mxu0 %v712
  %756 = vmatprep.subr.bf16.mxu0 %v709
  %757 = vmatpush1.bf16.msra.mxu0 %v708
  %758 = vmatprep.subr.bf16.mxu0 %v705
  %759 = vmatpush1.bf16.msra.mxu0 %v704
  %760 = vmatprep.subr.bf16.mxu0 %v701
  %761 = vmatpush1.bf16.msra.mxu0 %v700
  %762 = vmatprep.subr.bf16.mxu0 %v697
  %763 = vmatpush1.bf16.msra.mxu0 %v696
  %764 = vmatprep.subr.bf16.mxu0 %v693
  %765 = vmatpush1.bf16.msra.mxu0 %v692
  %766 = vmatprep.subr.bf16.mxu0 %v689
  %767 = vmatpush1.bf16.msra.mxu0 %v688
  %768 = vmatprep.subr.bf16.mxu0 0
  %769 = vmatpush2.bf16.msra.mxu0 0
  %770 = vmatprep.subr.bf16.mxu0 0
  %771 = vmatpush2.bf16.msra.mxu0 0
  %772 = vmatprep.subr.bf16.mxu0 0
  %773 = vmatpush2.bf16.msra.mxu0 0
  %774 = vmatprep.subr.bf16.mxu0 0
  %775 = vmatpush2.bf16.msra.mxu0 0
  %776 = vmatprep.subr.bf16.mxu0 0
  %777 = vmatpush2.bf16.msra.mxu0 0
  %778 = vmatprep.subr.bf16.mxu0 0
  %779 = vmatpush2.bf16.msra.mxu0 0
  %780 = vmatprep.subr.bf16.mxu0 0
  %781 = vmatpush2.bf16.msra.mxu0 0
  %782 = vmatprep.subr.bf16.mxu0 0
  %783 = vmatpush2.bf16.msra.mxu0 0
  %784 = vmatprep.mubr.bf16.mxu0 0
  %785 = vmatmul.mubr.bf16.gmra.mxu0 %v591
  %v786 = vpop.f32.mrf.mxu0
  %v787 = vadd.f32 0.0, %v786
  %v788 = vpop.f32.mrf.mxu0
  %v789 = vadd.f32 0.0, %v788
  %v790 = vpop.f32.mrf.mxu0
  %v791 = vpop.f32.mrf.mxu0
  %792 = vdwg.mxu0
  %793 = vmatprep.subr.bf16.mxu0 %v719
  %794 = vmatpush1.bf16.msra.mxu0 %v718
  %795 = vmatprep.subr.bf16.mxu0 %v715
  %796 = vmatpush1.bf16.msra.mxu0 %v714
  %797 = vmatprep.subr.bf16.mxu0 %v711
  %798 = vmatpush1.bf16.msra.mxu0 %v710
  %799 = vmatprep.subr.bf16.mxu0 %v707
  %800 = vmatpush1.bf16.msra.mxu0 %v706
  %801 = vmatprep.subr.bf16.mxu0 %v703
  %802 = vmatpush1.bf16.msra.mxu0 %v702
  %803 = vmatprep.subr.bf16.mxu0 %v699
  %804 = vmatpush1.bf16.msra.mxu0 %v698
  %805 = vmatprep.subr.bf16.mxu0 %v695
  %806 = vmatpush1.bf16.msra.mxu0 %v694
  %807 = vmatprep.subr.bf16.mxu0 %v691
  %808 = vmatpush1.bf16.msra.mxu0 %v690
  %809 = vmatprep.subr.bf16.mxu0 0
  %810 = vmatpush2.bf16.msra.mxu0 0
  %811 = vmatprep.subr.bf16.mxu0 0
  %812 = vmatpush2.bf16.msra.mxu0 0
  %813 = vmatprep.subr.bf16.mxu0 0
  %814 = vmatpush2.bf16.msra.mxu0 0
  %815 = vmatprep.subr.bf16.mxu0 0
  %816 = vmatpush2.bf16.msra.mxu0 0
  %817 = vmatprep.subr.bf16.mxu0 0
  %818 = vmatpush2.bf16.msra.mxu0 0
  %819 = vmatprep.subr.bf16.mxu0 0
  %820 = vmatpush2.bf16.msra.mxu0 0
  %821 = vmatprep.subr.bf16.mxu0 0
  %822 = vmatpush2.bf16.msra.mxu0 0
  %823 = vmatprep.subr.bf16.mxu0 0
  %824 = vmatpush2.bf16.msra.mxu0 0
  %825 = vmatprep.mubr.bf16.mxu0 0
  %826 = vmatmul.mubr.bf16.gmra.mxu0 %v591
  %v827 = vpop.f32.mrf.mxu0
  %v828 = vadd.f32 0.0, %v827
  %v829 = vpop.f32.mrf.mxu0
  %v830 = vadd.f32 0.0, %v829
  %v831 = vpop.f32.mrf.mxu0
  %v832 = vpop.f32.mrf.mxu0
  %833 = vdwg.mxu0
  %v834 = vadd.f32 %v586, %v787
  %v835 = vadd.f32 %v587, %v789
  %v836 = vadd.f32 %v588, %v828
  %v837 = vadd.f32 %v589, %v830
  %v838 = vxor.u32 %v834, 2147483648
  %v839 = vmul.f32 %v838, 1.442695
  %v840 = vpow.pop %v839
  %v841 = vadd.f32 %v840, 1.0
  %v842 = vrcp.pop %v841
  %v843 = vmul.f32 1.0, %v842
  %v844 = vxor.u32 %v835, 2147483648
  %v845 = vmul.f32 %v844, 1.442695
  %v846 = vpow.pop %v845
  %v847 = vadd.f32 %v846, 1.0
  %v848 = vrcp.pop %v847
  %v849 = vmul.f32 1.0, %v848
  %v850 = vtanh.pop %v836
  %v851 = vxor.u32 %v837, 2147483648
  %v852 = vmul.f32 %v851, 1.442695
  %v853 = vpow.pop %v852
  %v854 = vadd.f32 %v853, 1.0
  %v855 = vrcp.pop %v854
  %v856 = vmul.f32 1.0, %v855
  %v857 = vld [vmem:[#allocation3] sm:$0xff]
  %v858 = vmul.f32 %v849, %v857
  %v859 = vmul.f32 %v843, %v850
  %v860 = vadd.f32 %v858, %v859
  %v861 = vtanh.pop %v860
  %v862 = vmul.f32 %v856, %v861
  %863 = vst [vmem:[#allocation3] sm:$0xff] %v860
  %864 = vst [vmem:[#allocation2] sm:$0xff] %v862
  %865 = vst [vmem:[%s7] sm:$0xff] %v862
  %s866 = scalar_lea.vmem [#allocation4], 32
  %v867 = vld [vmem:[%s866] sm:$0xff]
  %v868 = vld [vmem:[%s866 + $0x8] sm:$0xff]
  %v869 = vld [vmem:[%s866 + $0x10] sm:$0xff]
  %v870 = vld [vmem:[%s866 + $0x18] sm:$0xff]
  %v871 = vld [vmem:[#allocation2] sm:$0xff]
  %v872 = vpack.c.bf16 %v871, %v871
  %873 = vmatprep.subr.bf16.mxu0 %v717
  %874 = vmatpush1.bf16.msra.mxu0 %v716
  %875 = vmatprep.subr.bf16.mxu0 %v713
  %876 = vmatpush1.bf16.msra.mxu0 %v712
  %877 = vmatprep.subr.bf16.mxu0 %v709
  %878 = vmatpush1.bf16.msra.mxu0 %v708
  %879 = vmatprep.subr.bf16.mxu0 %v705
  %880 = vmatpush1.bf16.msra.mxu0 %v704
  %881 = vmatprep.subr.bf16.mxu0 %v701
  %882 = vmatpush1.bf16.msra.mxu0 %v700
  %883 = vmatprep.subr.bf16.mxu0 %v697
  %884 = vmatpush1.bf16.msra.mxu0 %v696
  %885 = vmatprep.subr.bf16.mxu0 %v693
  %886 = vmatpush1.bf16.msra.mxu0 %v692
  %887 = vmatprep.subr.bf16.mxu0 %v689
  %888 = vmatpush1.bf16.msra.mxu0 %v688
  %889 = vmatprep.subr.bf16.mxu0 0
  %890 = vmatpush2.bf16.msra.mxu0 0
  %891 = vmatprep.subr.bf16.mxu0 0
  %892 = vmatpush2.bf16.msra.mxu0 0
  %893 = vmatprep.subr.bf16.mxu0 0
  %894 = vmatpush2.bf16.msra.mxu0 0
  %895 = vmatprep.subr.bf16.mxu0 0
  %896 = vmatpush2.bf16.msra.mxu0 0
  %897 = vmatprep.subr.bf16.mxu0 0
  %898 = vmatpush2.bf16.msra.mxu0 0
  %899 = vmatprep.subr.bf16.mxu0 0
  %900 = vmatpush2.bf16.msra.mxu0 0
  %901 = vmatprep.subr.bf16.mxu0 0
  %902 = vmatpush2.bf16.msra.mxu0 0
  %903 = vmatprep.subr.bf16.mxu0 0
  %904 = vmatpush2.bf16.msra.mxu0 0
  %905 = vmatprep.mubr.bf16.mxu0 0
  %906 = vmatmul.mubr.bf16.gmra.mxu0 %v872
  %v907 = vpop.f32.mrf.mxu0
  %v908 = vadd.f32 0.0, %v907
  %v909 = vpop.f32.mrf.mxu0
  %v910 = vadd.f32 0.0, %v909
  %v911 = vpop.f32.mrf.mxu0
  %v912 = vpop.f32.mrf.mxu0
  %913 = vdwg.mxu0
  %914 = vmatprep.subr.bf16.mxu0 %v719
  %915 = vmatpush1.bf16.msra.mxu0 %v718
  %916 = vmatprep.subr.bf16.mxu0 %v715
  %917 = vmatpush1.bf16.msra.mxu0 %v714
  %918 = vmatprep.subr.bf16.mxu0 %v711
  %919 = vmatpush1.bf16.msra.mxu0 %v710
  %920 = vmatprep.subr.bf16.mxu0 %v707
  %921 = vmatpush1.bf16.msra.mxu0 %v706
  %922 = vmatprep.subr.bf16.mxu0 %v703
  %923 = vmatpush1.bf16.msra.mxu0 %v702
  %924 = vmatprep.subr.bf16.mxu0 %v699
  %925 = vmatpush1.bf16.msra.mxu0 %v698
  %926 = vmatprep.subr.bf16.mxu0 %v695
  %927 = vmatpush1.bf16.msra.mxu0 %v694
  %928 = vmatprep.subr.bf16.mxu0 %v691
  %929 = vmatpush1.bf16.msra.mxu0 %v690
  %930 = vmatprep.subr.bf16.mxu0 0
  %931 = vmatpush2.bf16.msra.mxu0 0
  %932 = vmatprep.subr.bf16.mxu0 0
  %933 = vmatpush2.bf16.msra.mxu0 0
  %934 = vmatprep.subr.bf16.mxu0 0
  %935 = vmatpush2.bf16.msra.mxu0 0
  %936 = vmatprep.subr.bf16.mxu0 0
  %937 = vmatpush2.bf16.msra.mxu0 0
  %938 = vmatprep.subr.bf16.mxu0 0
  %939 = vmatpush2.bf16.msra.mxu0 0
  %940 = vmatprep.subr.bf16.mxu0 0
  %941 = vmatpush2.bf16.msra.mxu0 0
  %942 = vmatprep.subr.bf16.mxu0 0
  %943 = vmatpush2.bf16.msra.mxu0 0
  %944 = vmatprep.subr.bf16.mxu0 0
  %945 = vmatpush2.bf16.msra.mxu0 0
  %946 = vmatprep.mubr.bf16.mxu0 0
  %947 = vmatmul.mubr.bf16.gmra.mxu0 %v872
  %v948 = vpop.f32.mrf.mxu0
  %v949 = vadd.f32 0.0, %v948
  %v950 = vpop.f32.mrf.mxu0
  %v951 = vadd.f32 0.0, %v950
  %v952 = vpop.f32.mrf.mxu0
  %v953 = vpop.f32.mrf.mxu0
  %954 = vdwg.mxu0
  %v955 = vadd.f32 %v867, %v908
  %v956 = vadd.f32 %v868, %v910
  %v957 = vadd.f32 %v869, %v949
  %v958 = vadd.f32 %v870, %v951
  %v959 = vxor.u32 %v955, 2147483648
  %v960 = vmul.f32 %v959, 1.442695
  %v961 = vpow.pop %v960
  %v962 = vadd.f32 %v961, 1.0
  %v963 = vrcp.pop %v962
  %v964 = vmul.f32 1.0, %v963
  %v965 = vxor.u32 %v956, 2147483648
  %v966 = vmul.f32 %v965, 1.442695
  %v967 = vpow.pop %v966
  %v968 = vadd.f32 %v967, 1.0
  %v969 = vrcp.pop %v968
  %v970 = vmul.f32 1.0, %v969
  %v971 = vtanh.pop %v957
  %v972 = vxor.u32 %v958, 2147483648
  %v973 = vmul.f32 %v972, 1.442695
  %v974 = vpow.pop %v973
  %v975 = vadd.f32 %v974, 1.0
  %v976 = vrcp.pop %v975
  %v977 = vmul.f32 1.0, %v976
  %v978 = vld [vmem:[#allocation3] sm:$0xff]
  %v979 = vmul.f32 %v970, %v978
  %v980 = vmul.f32 %v964, %v971
  %v981 = vadd.f32 %v979, %v980
  %v982 = vtanh.pop %v981
  %v983 = vmul.f32 %v977, %v982
  %984 = vst [vmem:[#allocation3] sm:$0xff] %v981
  %985 = vst [vmem:[#allocation2] sm:$0xff] %v983
  %s986 = scalar_lea.vmem %s7, 8
  %987 = vst [vmem:[%s986] sm:$0xff] %v983
  %s988 = scalar_lea.vmem [#allocation4], 64
  %v989 = vld [vmem:[%s988] sm:$0xff]
  %v990 = vld [vmem:[%s988 + $0x8] sm:$0xff]
  %v991 = vld [vmem:[%s988 + $0x10] sm:$0xff]
  %v992 = vld [vmem:[%s988 + $0x18] sm:$0xff]
  %v993 = vld [vmem:[#allocation2] sm:$0xff]
  %v994 = vpack.c.bf16 %v993, %v993
  %995 = vmatprep.subr.bf16.mxu0 %v717
  %996 = vmatpush1.bf16.msra.mxu0 %v716
  %997 = vmatprep.subr.bf16.mxu0 %v713
  %998 = vmatpush1.bf16.msra.mxu0 %v712
  %999 = vmatprep.subr.bf16.mxu0 %v709
  %1000 = vmatpush1.bf16.msra.mxu0 %v708
  %1001 = vmatprep.subr.bf16.mxu0 %v705
  %1002 = vmatpush1.bf16.msra.mxu0 %v704
  %1003 = vmatprep.subr.bf16.mxu0 %v701
  %1004 = vmatpush1.bf16.msra.mxu0 %v700
  %1005 = vmatprep.subr.bf16.mxu0 %v697
  %1006 = vmatpush1.bf16.msra.mxu0 %v696
  %1007 = vmatprep.subr.bf16.mxu0 %v693
  %1008 = vmatpush1.bf16.msra.mxu0 %v692
  %1009 = vmatprep.subr.bf16.mxu0 %v689
  %1010 = vmatpush1.bf16.msra.mxu0 %v688
  %1011 = vmatprep.subr.bf16.mxu0 0
  %1012 = vmatpush2.bf16.msra.mxu0 0
  %1013 = vmatprep.subr.bf16.mxu0 0
  %1014 = vmatpush2.bf16.msra.mxu0 0
  %1015 = vmatprep.subr.bf16.mxu0 0
  %1016 = vmatpush2.bf16.msra.mxu0 0
  %1017 = vmatprep.subr.bf16.mxu0 0
  %1018 = vmatpush2.bf16.msra.mxu0 0
  %1019 = vmatprep.subr.bf16.mxu0 0
  %1020 = vmatpush2.bf16.msra.mxu0 0
  %1021 = vmatprep.subr.bf16.mxu0 0
  %1022 = vmatpush2.bf16.msra.mxu0 0
  %1023 = vmatprep.subr.bf16.mxu0 0
  %1024 = vmatpush2.bf16.msra.mxu0 0
  %1025 = vmatprep.subr.bf16.mxu0 0
  %1026 = vmatpush2.bf16.msra.mxu0 0
  %1027 = vmatprep.mubr.bf16.mxu0 0
  %1028 = vmatmul.mubr.bf16.gmra.mxu0 %v994
  %v1029 = vpop.f32.mrf.mxu0
  %v1030 = vadd.f32 0.0, %v1029
  %v1031 = vpop.f32.mrf.mxu0
  %v1032 = vadd.f32 0.0, %v1031
  %v1033 = vpop.f32.mrf.mxu0
  %v1034 = vpop.f32.mrf.mxu0
  %1035 = vdwg.mxu0
  %1036 = vmatprep.subr.bf16.mxu0 %v719
  %1037 = vmatpush1.bf16.msra.mxu0 %v718
  %1038 = vmatprep.subr.bf16.mxu0 %v715
  %1039 = vmatpush1.bf16.msra.mxu0 %v714
  %1040 = vmatprep.subr.bf16.mxu0 %v711
  %1041 = vmatpush1.bf16.msra.mxu0 %v710
  %1042 = vmatprep.subr.bf16.mxu0 %v707
  %1043 = vmatpush1.bf16.msra.mxu0 %v706
  %1044 = vmatprep.subr.bf16.mxu0 %v703
  %1045 = vmatpush1.bf16.msra.mxu0 %v702
  %1046 = vmatprep.subr.bf16.mxu0 %v699
  %1047 = vmatpush1.bf16.msra.mxu0 %v698
  %1048 = vmatprep.subr.bf16.mxu0 %v695
  %1049 = vmatpush1.bf16.msra.mxu0 %v694
  %1050 = vmatprep.subr.bf16.mxu0 %v691
  %1051 = vmatpush1.bf16.msra.mxu0 %v690
  %1052 = vmatprep.subr.bf16.mxu0 0
  %1053 = vmatpush2.bf16.msra.mxu0 0
  %1054 = vmatprep.subr.bf16.mxu0 0
  %1055 = vmatpush2.bf16.msra.mxu0 0
  %1056 = vmatprep.subr.bf16.mxu0 0
  %1057 = vmatpush2.bf16.msra.mxu0 0
  %1058 = vmatprep.subr.bf16.mxu0 0
  %1059 = vmatpush2.bf16.msra.mxu0 0
  %1060 = vmatprep.subr.bf16.mxu0 0
  %1061 = vmatpush2.bf16.msra.mxu0 0
  %1062 = vmatprep.subr.bf16.mxu0 0
  %1063 = vmatpush2.bf16.msra.mxu0 0
  %1064 = vmatprep.subr.bf16.mxu0 0
  %1065 = vmatpush2.bf16.msra.mxu0 0
  %1066 = vmatprep.subr.bf16.mxu0 0
  %1067 = vmatpush2.bf16.msra.mxu0 0
  %1068 = vmatprep.mubr.bf16.mxu0 0
  %1069 = vmatmul.mubr.bf16.gmra.mxu0 %v994
  %v1070 = vpop.f32.mrf.mxu0
  %v1071 = vadd.f32 0.0, %v1070
  %v1072 = vpop.f32.mrf.mxu0
  %v1073 = vadd.f32 0.0, %v1072
  %v1074 = vpop.f32.mrf.mxu0
  %v1075 = vpop.f32.mrf.mxu0
  %1076 = vdwg.mxu0
  %v1077 = vadd.f32 %v989, %v1030
  %v1078 = vadd.f32 %v990, %v1032
  %v1079 = vadd.f32 %v991, %v1071
  %v1080 = vadd.f32 %v992, %v1073
  %v1081 = vxor.u32 %v1077, 2147483648
  %v1082 = vmul.f32 %v1081, 1.442695
  %v1083 = vpow.pop %v1082
  %v1084 = vadd.f32 %v1083, 1.0
  %v1085 = vrcp.pop %v1084
  %v1086 = vmul.f32 1.0, %v1085
  %v1087 = vxor.u32 %v1078, 2147483648
  %v1088 = vmul.f32 %v1087, 1.442695
  %v1089 = vpow.pop %v1088
  %v1090 = vadd.f32 %v1089, 1.0
  %v1091 = vrcp.pop %v1090
  %v1092 = vmul.f32 1.0, %v1091
  %v1093 = vtanh.pop %v1079
  %v1094 = vxor.u32 %v1080, 2147483648
  %v1095 = vmul.f32 %v1094, 1.442695
  %v1096 = vpow.pop %v1095
  %v1097 = vadd.f32 %v1096, 1.0
  %v1098 = vrcp.pop %v1097
  %v1099 = vmul.f32 1.0, %v1098
  %v1100 = vld [vmem:[#allocation3] sm:$0xff]
  %v1101 = vmul.f32 %v1092, %v1100
  %v1102 = vmul.f32 %v1086, %v1093
  %v1103 = vadd.f32 %v1101, %v1102
  %v1104 = vtanh.pop %v1103
  %v1105 = vmul.f32 %v1099, %v1104
  %1106 = vst [vmem:[#allocation3] sm:$0xff] %v1103
  %1107 = vst [vmem:[#allocation2] sm:$0xff] %v1105
  %s1108 = scalar_lea.vmem %s7, 16
  %1109 = vst [vmem:[%s1108] sm:$0xff] %v1105
  %s1110 = scalar_lea.vmem [#allocation4], 96
  %v1111 = vld [vmem:[%s1110] sm:$0xff]
  %v1112 = vld [vmem:[%s1110 + $0x8] sm:$0xff]
  %v1113 = vld [vmem:[%s1110 + $0x10] sm:$0xff]
  %v1114 = vld [vmem:[%s1110 + $0x18] sm:$0xff]
  %v1115 = vld [vmem:[#allocation2] sm:$0xff]
  %v1116 = vpack.c.bf16 %v1115, %v1115
  %1117 = vmatprep.subr.bf16.mxu0 %v717
  %1118 = vmatpush1.bf16.msra.mxu0 %v716
  %1119 = vmatprep.subr.bf16.mxu0 %v713
  %1120 = vmatpush1.bf16.msra.mxu0 %v712
  %1121 = vmatprep.subr.bf16.mxu0 %v709
  %1122 = vmatpush1.bf16.msra.mxu0 %v708
  %1123 = vmatprep.subr.bf16.mxu0 %v705
  %1124 = vmatpush1.bf16.msra.mxu0 %v704
  %1125 = vmatprep.subr.bf16.mxu0 %v701
  %1126 = vmatpush1.bf16.msra.mxu0 %v700
  %1127 = vmatprep.subr.bf16.mxu0 %v697
  %1128 = vmatpush1.bf16.msra.mxu0 %v696
  %1129 = vmatprep.subr.bf16.mxu0 %v693
  %1130 = vmatpush1.bf16.msra.mxu0 %v692
  %1131 = vmatprep.subr.bf16.mxu0 %v689
  %1132 = vmatpush1.bf16.msra.mxu0 %v688
  %1133 = vmatprep.subr.bf16.mxu0 0
  %1134 = vmatpush2.bf16.msra.mxu0 0
  %1135 = vmatprep.subr.bf16.mxu0 0
  %1136 = vmatpush2.bf16.msra.mxu0 0
  %1137 = vmatprep.subr.bf16.mxu0 0
  %1138 = vmatpush2.bf16.msra.mxu0 0
  %1139 = vmatprep.subr.bf16.mxu0 0
  %1140 = vmatpush2.bf16.msra.mxu0 0
  %1141 = vmatprep.subr.bf16.mxu0 0
  %1142 = vmatpush2.bf16.msra.mxu0 0
  %1143 = vmatprep.subr.bf16.mxu0 0
  %1144 = vmatpush2.bf16.msra.mxu0 0
  %1145 = vmatprep.subr.bf16.mxu0 0
  %1146 = vmatpush2.bf16.msra.mxu0 0
  %1147 = vmatprep.subr.bf16.mxu0 0
  %1148 = vmatpush2.bf16.msra.mxu0 0
  %1149 = vmatprep.mubr.bf16.mxu0 0
  %1150 = vmatmul.mubr.bf16.gmra.mxu0 %v1116
  %v1151 = vpop.f32.mrf.mxu0
  %v1152 = vadd.f32 0.0, %v1151
  %v1153 = vpop.f32.mrf.mxu0
  %v1154 = vadd.f32 0.0, %v1153
  %v1155 = vpop.f32.mrf.mxu0
  %v1156 = vpop.f32.mrf.mxu0
  %1157 = vdwg.mxu0
  %1158 = vmatprep.subr.bf16.mxu0 %v719
  %1159 = vmatpush1.bf16.msra.mxu0 %v718
  %1160 = vmatprep.subr.bf16.mxu0 %v715
  %1161 = vmatpush1.bf16.msra.mxu0 %v714
  %1162 = vmatprep.subr.bf16.mxu0 %v711
  %1163 = vmatpush1.bf16.msra.mxu0 %v710
  %1164 = vmatprep.subr.bf16.mxu0 %v707
  %1165 = vmatpush1.bf16.msra.mxu0 %v706
  %1166 = vmatprep.subr.bf16.mxu0 %v703
  %1167 = vmatpush1.bf16.msra.mxu0 %v702
  %1168 = vmatprep.subr.bf16.mxu0 %v699
  %1169 = vmatpush1.bf16.msra.mxu0 %v698
  %1170 = vmatprep.subr.bf16.mxu0 %v695
  %1171 = vmatpush1.bf16.msra.mxu0 %v694
  %1172 = vmatprep.subr.bf16.mxu0 %v691
  %1173 = vmatpush1.bf16.msra.mxu0 %v690
  %1174 = vmatprep.subr.bf16.mxu0 0
  %1175 = vmatpush2.bf16.msra.mxu0 0
  %1176 = vmatprep.subr.bf16.mxu0 0
  %1177 = vmatpush2.bf16.msra.mxu0 0
  %1178 = vmatprep.subr.bf16.mxu0 0
  %1179 = vmatpush2.bf16.msra.mxu0 0
  %1180 = vmatprep.subr.bf16.mxu0 0
  %1181 = vmatpush2.bf16.msra.mxu0 0
  %1182 = vmatprep.subr.bf16.mxu0 0
  %1183 = vmatpush2.bf16.msra.mxu0 0
  %1184 = vmatprep.subr.bf16.mxu0 0
  %1185 = vmatpush2.bf16.msra.mxu0 0
  %1186 = vmatprep.subr.bf16.mxu0 0
  %1187 = vmatpush2.bf16.msra.mxu0 0
  %1188 = vmatprep.subr.bf16.mxu0 0
  %1189 = vmatpush2.bf16.msra.mxu0 0
  %1190 = vmatprep.mubr.bf16.mxu0 0
  %1191 = vmatmul.mubr.bf16.gmra.mxu0 %v1116
  %v1192 = vpop.f32.mrf.mxu0
  %v1193 = vadd.f32 0.0, %v1192
  %v1194 = vpop.f32.mrf.mxu0
  %v1195 = vadd.f32 0.0, %v1194
  %v1196 = vpop.f32.mrf.mxu0
  %v1197 = vpop.f32.mrf.mxu0
  %1198 = vdwg.mxu0
  %v1199 = vadd.f32 %v1111, %v1152
  %v1200 = vadd.f32 %v1112, %v1154
  %v1201 = vadd.f32 %v1113, %v1193
  %v1202 = vadd.f32 %v1114, %v1195
  %v1203 = vxor.u32 %v1199, 2147483648
  %v1204 = vmul.f32 %v1203, 1.442695
  %v1205 = vpow.pop %v1204
  %v1206 = vadd.f32 %v1205, 1.0
  %v1207 = vrcp.pop %v1206
  %v1208 = vmul.f32 1.0, %v1207
  %v1209 = vxor.u32 %v1200, 2147483648
  %v1210 = vmul.f32 %v1209, 1.442695
  %v1211 = vpow.pop %v1210
  %v1212 = vadd.f32 %v1211, 1.0
  %v1213 = vrcp.pop %v1212
  %v1214 = vmul.f32 1.0, %v1213
  %v1215 = vtanh.pop %v1201
  %v1216 = vxor.u32 %v1202, 2147483648
  %v1217 = vmul.f32 %v1216, 1.442695
  %v1218 = vpow.pop %v1217
  %v1219 = vadd.f32 %v1218, 1.0
  %v1220 = vrcp.pop %v1219
  %v1221 = vmul.f32 1.0, %v1220
  %v1222 = vld [vmem:[#allocation3] sm:$0xff]
  %v1223 = vmul.f32 %v1214, %v1222
  %v1224 = vmul.f32 %v1208, %v1215
  %v1225 = vadd.f32 %v1223, %v1224
  %v1226 = vtanh.pop %v1225
  %v1227 = vmul.f32 %v1221, %v1226
  %1228 = vst [vmem:[#allocation3] sm:$0xff] %v1225
  %1229 = vst [vmem:[#allocation2] sm:$0xff] %v1227
  %s1230 = scalar_lea.vmem %s7, 24
  %1231 = vst [vmem:[%s1230] sm:$0xff] %v1227
  %s1232 = scalar_lea.vmem [#allocation4], 128
  %v1233 = vld [vmem:[%s1232] sm:$0xff]
  %v1234 = vld [vmem:[%s1232 + $0x8] sm:$0xff]
  %v1235 = vld [vmem:[%s1232 + $0x10] sm:$0xff]
  %v1236 = vld [vmem:[%s1232 + $0x18] sm:$0xff]
  %v1237 = vld [vmem:[#allocation2] sm:$0xff]
  %v1238 = vpack.c.bf16 %v1237, %v1237
  %1239 = vmatprep.subr.bf16.mxu0 %v717
  %1240 = vmatpush1.bf16.msra.mxu0 %v716
  %1241 = vmatprep.subr.bf16.mxu0 %v713
  %1242 = vmatpush1.bf16.msra.mxu0 %v712
  %1243 = vmatprep.subr.bf16.mxu0 %v709
  %1244 = vmatpush1.bf16.msra.mxu0 %v708
  %1245 = vmatprep.subr.bf16.mxu0 %v705
  %1246 = vmatpush1.bf16.msra.mxu0 %v704
  %1247 = vmatprep.subr.bf16.mxu0 %v701
  %1248 = vmatpush1.bf16.msra.mxu0 %v700
  %1249 = vmatprep.subr.bf16.mxu0 %v697
  %1250 = vmatpush1.bf16.msra.mxu0 %v696
  %1251 = vmatprep.subr.bf16.mxu0 %v693
  %1252 = vmatpush1.bf16.msra.mxu0 %v692
  %1253 = vmatprep.subr.bf16.mxu0 %v689
  %1254 = vmatpush1.bf16.msra.mxu0 %v688
  %1255 = vmatprep.subr.bf16.mxu0 0
  %1256 = vmatpush2.bf16.msra.mxu0 0
  %1257 = vmatprep.subr.bf16.mxu0 0
  %1258 = vmatpush2.bf16.msra.mxu0 0
  %1259 = vmatprep.subr.bf16.mxu0 0
  %1260 = vmatpush2.bf16.msra.mxu0 0
  %1261 = vmatprep.subr.bf16.mxu0 0
  %1262 = vmatpush2.bf16.msra.mxu0 0
  %1263 = vmatprep.subr.bf16.mxu0 0
  %1264 = vmatpush2.bf16.msra.mxu0 0
  %1265 = vmatprep.subr.bf16.mxu0 0
  %1266 = vmatpush2.bf16.msra.mxu0 0
  %1267 = vmatprep.subr.bf16.mxu0 0
  %1268 = vmatpush2.bf16.msra.mxu0 0
  %1269 = vmatprep.subr.bf16.mxu0 0
  %1270 = vmatpush2.bf16.msra.mxu0 0
  %1271 = vmatprep.mubr.bf16.mxu0 0
  %1272 = vmatmul.mubr.bf16.gmra.mxu0 %v1238
  %v1273 = vpop.f32.mrf.mxu0
  %v1274 = vadd.f32 0.0, %v1273
  %v1275 = vpop.f32.mrf.mxu0
  %v1276 = vadd.f32 0.0, %v1275
  %v1277 = vpop.f32.mrf.mxu0
  %v1278 = vpop.f32.mrf.mxu0
  %1279 = vdwg.mxu0
  %1280 = vmatprep.subr.bf16.mxu0 %v719
  %1281 = vmatpush1.bf16.msra.mxu0 %v718
  %1282 = vmatprep.subr.bf16.mxu0 %v715
  %1283 = vmatpush1.bf16.msra.mxu0 %v714
  %1284 = vmatprep.subr.bf16.mxu0 %v711
  %1285 = vmatpush1.bf16.msra.mxu0 %v710
  %1286 = vmatprep.subr.bf16.mxu0 %v707
  %1287 = vmatpush1.bf16.msra.mxu0 %v706
  %1288 = vmatprep.subr.bf16.mxu0 %v703
  %1289 = vmatpush1.bf16.msra.mxu0 %v702
  %1290 = vmatprep.subr.bf16.mxu0 %v699
  %1291 = vmatpush1.bf16.msra.mxu0 %v698
  %1292 = vmatprep.subr.bf16.mxu0 %v695
  %1293 = vmatpush1.bf16.msra.mxu0 %v694
  %1294 = vmatprep.subr.bf16.mxu0 %v691
  %1295 = vmatpush1.bf16.msra.mxu0 %v690
  %1296 = vmatprep.subr.bf16.mxu0 0
  %1297 = vmatpush2.bf16.msra.mxu0 0
  %1298 = vmatprep.subr.bf16.mxu0 0
  %1299 = vmatpush2.bf16.msra.mxu0 0
  %1300 = vmatprep.subr.bf16.mxu0 0
  %1301 = vmatpush2.bf16.msra.mxu0 0
  %1302 = vmatprep.subr.bf16.mxu0 0
  %1303 = vmatpush2.bf16.msra.mxu0 0
  %1304 = vmatprep.subr.bf16.mxu0 0
  %1305 = vmatpush2.bf16.msra.mxu0 0
  %1306 = vmatprep.subr.bf16.mxu0 0
  %1307 = vmatpush2.bf16.msra.mxu0 0
  %1308 = vmatprep.subr.bf16.mxu0 0
  %1309 = vmatpush2.bf16.msra.mxu0 0
  %1310 = vmatprep.subr.bf16.mxu0 0
  %1311 = vmatpush2.bf16.msra.mxu0 0
  %1312 = vmatprep.mubr.bf16.mxu0 0
  %1313 = vmatmul.mubr.bf16.gmra.mxu0 %v1238
  %v1314 = vpop.f32.mrf.mxu0
  %v1315 = vadd.f32 0.0, %v1314
  %v1316 = vpop.f32.mrf.mxu0
  %v1317 = vadd.f32 0.0, %v1316
  %v1318 = vpop.f32.mrf.mxu0
  %v1319 = vpop.f32.mrf.mxu0
  %1320 = vdwg.mxu0
  %v1321 = vadd.f32 %v1233, %v1274
  %v1322 = vadd.f32 %v1234, %v1276
  %v1323 = vadd.f32 %v1235, %v1315
  %v1324 = vadd.f32 %v1236, %v1317
  %v1325 = vxor.u32 %v1321, 2147483648
  %v1326 = vmul.f32 %v1325, 1.442695
  %v1327 = vpow.pop %v1326
  %v1328 = vadd.f32 %v1327, 1.0
  %v1329 = vrcp.pop %v1328
  %v1330 = vmul.f32 1.0, %v1329
  %v1331 = vxor.u32 %v1322, 2147483648
  %v1332 = vmul.f32 %v1331, 1.442695
  %v1333 = vpow.pop %v1332
  %v1334 = vadd.f32 %v1333, 1.0
  %v1335 = vrcp.pop %v1334
  %v1336 = vmul.f32 1.0, %v1335
  %v1337 = vtanh.pop %v1323
  %v1338 = vxor.u32 %v1324, 2147483648
  %v1339 = vmul.f32 %v1338, 1.442695
  %v1340 = vpow.pop %v1339
  %v1341 = vadd.f32 %v1340, 1.0
  %v1342 = vrcp.pop %v1341
  %v1343 = vmul.f32 1.0, %v1342
  %v1344 = vld [vmem:[#allocation3] sm:$0xff]
  %v1345 = vmul.f32 %v1336, %v1344
  %v1346 = vmul.f32 %v1330, %v1337
  %v1347 = vadd.f32 %v1345, %v1346
  %v1348 = vtanh.pop %v1347
  %v1349 = vmul.f32 %v1343, %v1348
  %1350 = vst [vmem:[#allocation3] sm:$0xff] %v1347
  %1351 = vst [vmem:[#allocation2] sm:$0xff] %v1349
  %s1352 = scalar_lea.vmem %s7, 32
  %1353 = vst [vmem:[%s1352] sm:$0xff] %v1349
  %s1354 = scalar_lea.vmem [#allocation4], 160
  %v1355 = vld [vmem:[%s1354] sm:$0xff]
  %v1356 = vld [vmem:[%s1354 + $0x8] sm:$0xff]
  %v1357 = vld [vmem:[%s1354 + $0x10] sm:$0xff]
  %v1358 = vld [vmem:[%s1354 + $0x18] sm:$0xff]
  %v1359 = vld [vmem:[#allocation2] sm:$0xff]
  %v1360 = vpack.c.bf16 %v1359, %v1359
  %1361 = vmatprep.subr.bf16.mxu0 %v717
  %1362 = vmatpush1.bf16.msra.mxu0 %v716
  %1363 = vmatprep.subr.bf16.mxu0 %v713
  %1364 = vmatpush1.bf16.msra.mxu0 %v712
  %1365 = vmatprep.subr.bf16.mxu0 %v709
  %1366 = vmatpush1.bf16.msra.mxu0 %v708
  %1367 = vmatprep.subr.bf16.mxu0 %v705
  %1368 = vmatpush1.bf16.msra.mxu0 %v704
  %1369 = vmatprep.subr.bf16.mxu0 %v701
  %1370 = vmatpush1.bf16.msra.mxu0 %v700
  %1371 = vmatprep.subr.bf16.mxu0 %v697
  %1372 = vmatpush1.bf16.msra.mxu0 %v696
  %1373 = vmatprep.subr.bf16.mxu0 %v693
  %1374 = vmatpush1.bf16.msra.mxu0 %v692
  %1375 = vmatprep.subr.bf16.mxu0 %v689
  %1376 = vmatpush1.bf16.msra.mxu0 %v688
  %1377 = vmatprep.subr.bf16.mxu0 0
  %1378 = vmatpush2.bf16.msra.mxu0 0
  %1379 = vmatprep.subr.bf16.mxu0 0
  %1380 = vmatpush2.bf16.msra.mxu0 0
  %1381 = vmatprep.subr.bf16.mxu0 0
  %1382 = vmatpush2.bf16.msra.mxu0 0
  %1383 = vmatprep.subr.bf16.mxu0 0
  %1384 = vmatpush2.bf16.msra.mxu0 0
  %1385 = vmatprep.subr.bf16.mxu0 0
  %1386 = vmatpush2.bf16.msra.mxu0 0
  %1387 = vmatprep.subr.bf16.mxu0 0
  %1388 = vmatpush2.bf16.msra.mxu0 0
  %1389 = vmatprep.subr.bf16.mxu0 0
  %1390 = vmatpush2.bf16.msra.mxu0 0
  %1391 = vmatprep.subr.bf16.mxu0 0
  %1392 = vmatpush2.bf16.msra.mxu0 0
  %1393 = vmatprep.mubr.bf16.mxu0 0
  %1394 = vmatmul.mubr.bf16.gmra.mxu0 %v1360
  %v1395 = vpop.f32.mrf.mxu0
  %v1396 = vadd.f32 0.0, %v1395
  %v1397 = vpop.f32.mrf.mxu0
  %v1398 = vadd.f32 0.0, %v1397
  %v1399 = vpop.f32.mrf.mxu0
  %v1400 = vpop.f32.mrf.mxu0
  %1401 = vdwg.mxu0
  %1402 = vmatprep.subr.bf16.mxu0 %v719
  %1403 = vmatpush1.bf16.msra.mxu0 %v718
  %1404 = vmatprep.subr.bf16.mxu0 %v715
  %1405 = vmatpush1.bf16.msra.mxu0 %v714
  %1406 = vmatprep.subr.bf16.mxu0 %v711
  %1407 = vmatpush1.bf16.msra.mxu0 %v710
  %1408 = vmatprep.subr.bf16.mxu0 %v707
  %1409 = vmatpush1.bf16.msra.mxu0 %v706
  %1410 = vmatprep.subr.bf16.mxu0 %v703
  %1411 = vmatpush1.bf16.msra.mxu0 %v702
  %1412 = vmatprep.subr.bf16.mxu0 %v699
  %1413 = vmatpush1.bf16.msra.mxu0 %v698
  %1414 = vmatprep.subr.bf16.mxu0 %v695
  %1415 = vmatpush1.bf16.msra.mxu0 %v694
  %1416 = vmatprep.subr.bf16.mxu0 %v691
  %1417 = vmatpush1.bf16.msra.mxu0 %v690
  %1418 = vmatprep.subr.bf16.mxu0 0
  %1419 = vmatpush2.bf16.msra.mxu0 0
  %1420 = vmatprep.subr.bf16.mxu0 0
  %1421 = vmatpush2.bf16.msra.mxu0 0
  %1422 = vmatprep.subr.bf16.mxu0 0
  %1423 = vmatpush2.bf16.msra.mxu0 0
  %1424 = vmatprep.subr.bf16.mxu0 0
  %1425 = vmatpush2.bf16.msra.mxu0 0
  %1426 = vmatprep.subr.bf16.mxu0 0
  %1427 = vmatpush2.bf16.msra.mxu0 0
  %1428 = vmatprep.subr.bf16.mxu0 0
  %1429 = vmatpush2.bf16.msra.mxu0 0
  %1430 = vmatprep.subr.bf16.mxu0 0
  %1431 = vmatpush2.bf16.msra.mxu0 0
  %1432 = vmatprep.subr.bf16.mxu0 0
  %1433 = vmatpush2.bf16.msra.mxu0 0
  %1434 = vmatprep.mubr.bf16.mxu0 0
  %1435 = vmatmul.mubr.bf16.gmra.mxu0 %v1360
  %v1436 = vpop.f32.mrf.mxu0
  %v1437 = vadd.f32 0.0, %v1436
  %v1438 = vpop.f32.mrf.mxu0
  %v1439 = vadd.f32 0.0, %v1438
  %v1440 = vpop.f32.mrf.mxu0
  %v1441 = vpop.f32.mrf.mxu0
  %1442 = vdwg.mxu0
  %v1443 = vadd.f32 %v1355, %v1396
  %v1444 = vadd.f32 %v1356, %v1398
  %v1445 = vadd.f32 %v1357, %v1437
  %v1446 = vadd.f32 %v1358, %v1439
  %v1447 = vxor.u32 %v1443, 2147483648
  %v1448 = vmul.f32 %v1447, 1.442695
  %v1449 = vpow.pop %v1448
  %v1450 = vadd.f32 %v1449, 1.0
  %v1451 = vrcp.pop %v1450
  %v1452 = vmul.f32 1.0, %v1451
  %v1453 = vxor.u32 %v1444, 2147483648
  %v1454 = vmul.f32 %v1453, 1.442695
  %v1455 = vpow.pop %v1454
  %v1456 = vadd.f32 %v1455, 1.0
  %v1457 = vrcp.pop %v1456
  %v1458 = vmul.f32 1.0, %v1457
  %v1459 = vtanh.pop %v1445
  %v1460 = vxor.u32 %v1446, 2147483648
  %v1461 = vmul.f32 %v1460, 1.442695
  %v1462 = vpow.pop %v1461
  %v1463 = vadd.f32 %v1462, 1.0
  %v1464 = vrcp.pop %v1463
  %v1465 = vmul.f32 1.0, %v1464
  %v1466 = vld [vmem:[#allocation3] sm:$0xff]
  %v1467 = vmul.f32 %v1458, %v1466
  %v1468 = vmul.f32 %v1452, %v1459
  %v1469 = vadd.f32 %v1467, %v1468
  %v1470 = vtanh.pop %v1469
  %v1471 = vmul.f32 %v1465, %v1470
  %1472 = vst [vmem:[#allocation3] sm:$0xff] %v1469
  %1473 = vst [vmem:[#allocation2] sm:$0xff] %v1471
  %s1474 = scalar_lea.vmem %s7, 40
  %1475 = vst [vmem:[%s1474] sm:$0xff] %v1471
  %s1476 = scalar_lea.vmem [#allocation4], 192
  %v1477 = vld [vmem:[%s1476] sm:$0xff]
  %v1478 = vld [vmem:[%s1476 + $0x8] sm:$0xff]
  %v1479 = vld [vmem:[%s1476 + $0x10] sm:$0xff]
  %v1480 = vld [vmem:[%s1476 + $0x18] sm:$0xff]
  %v1481 = vld [vmem:[#allocation2] sm:$0xff]
  %v1482 = vpack.c.bf16 %v1481, %v1481
  %1483 = vmatprep.subr.bf16.mxu0 %v717
  %1484 = vmatpush1.bf16.msra.mxu0 %v716
  %1485 = vmatprep.subr.bf16.mxu0 %v713
  %1486 = vmatpush1.bf16.msra.mxu0 %v712
  %1487 = vmatprep.subr.bf16.mxu0 %v709
  %1488 = vmatpush1.bf16.msra.mxu0 %v708
  %1489 = vmatprep.subr.bf16.mxu0 %v705
  %1490 = vmatpush1.bf16.msra.mxu0 %v704
  %1491 = vmatprep.subr.bf16.mxu0 %v701
  %1492 = vmatpush1.bf16.msra.mxu0 %v700
  %1493 = vmatprep.subr.bf16.mxu0 %v697
  %1494 = vmatpush1.bf16.msra.mxu0 %v696
  %1495 = vmatprep.subr.bf16.mxu0 %v693
  %1496 = vmatpush1.bf16.msra.mxu0 %v692
  %1497 = vmatprep.subr.bf16.mxu0 %v689
  %1498 = vmatpush1.bf16.msra.mxu0 %v688
  %1499 = vmatprep.subr.bf16.mxu0 0
  %1500 = vmatpush2.bf16.msra.mxu0 0
  %1501 = vmatprep.subr.bf16.mxu0 0
  %1502 = vmatpush2.bf16.msra.mxu0 0
  %1503 = vmatprep.subr.bf16.mxu0 0
  %1504 = vmatpush2.bf16.msra.mxu0 0
  %1505 = vmatprep.subr.bf16.mxu0 0
  %1506 = vmatpush2.bf16.msra.mxu0 0
  %1507 = vmatprep.subr.bf16.mxu0 0
  %1508 = vmatpush2.bf16.msra.mxu0 0
  %1509 = vmatprep.subr.bf16.mxu0 0
  %1510 = vmatpush2.bf16.msra.mxu0 0
  %1511 = vmatprep.subr.bf16.mxu0 0
  %1512 = vmatpush2.bf16.msra.mxu0 0
  %1513 = vmatprep.subr.bf16.mxu0 0
  %1514 = vmatpush2.bf16.msra.mxu0 0
  %1515 = vmatprep.mubr.bf16.mxu0 0
  %1516 = vmatmul.mubr.bf16.gmra.mxu0 %v1482
  %v1517 = vpop.f32.mrf.mxu0
  %v1518 = vadd.f32 0.0, %v1517
  %v1519 = vpop.f32.mrf.mxu0
  %v1520 = vadd.f32 0.0, %v1519
  %v1521 = vpop.f32.mrf.mxu0
  %v1522 = vpop.f32.mrf.mxu0
  %1523 = vdwg.mxu0
  %1524 = vmatprep.subr.bf16.mxu0 %v719
  %1525 = vmatpush1.bf16.msra.mxu0 %v718
  %1526 = vmatprep.subr.bf16.mxu0 %v715
  %1527 = vmatpush1.bf16.msra.mxu0 %v714
  %1528 = vmatprep.subr.bf16.mxu0 %v711
  %1529 = vmatpush1.bf16.msra.mxu0 %v710
  %1530 = vmatprep.subr.bf16.mxu0 %v707
  %1531 = vmatpush1.bf16.msra.mxu0 %v706
  %1532 = vmatprep.subr.bf16.mxu0 %v703
  %1533 = vmatpush1.bf16.msra.mxu0 %v702
  %1534 = vmatprep.subr.bf16.mxu0 %v699
  %1535 = vmatpush1.bf16.msra.mxu0 %v698
  %1536 = vmatprep.subr.bf16.mxu0 %v695
  %1537 = vmatpush1.bf16.msra.mxu0 %v694
  %1538 = vmatprep.subr.bf16.mxu0 %v691
  %1539 = vmatpush1.bf16.msra.mxu0 %v690
  %1540 = vmatprep.subr.bf16.mxu0 0
  %1541 = vmatpush2.bf16.msra.mxu0 0
  %1542 = vmatprep.subr.bf16.mxu0 0
  %1543 = vmatpush2.bf16.msra.mxu0 0
  %1544 = vmatprep.subr.bf16.mxu0 0
  %1545 = vmatpush2.bf16.msra.mxu0 0
  %1546 = vmatprep.subr.bf16.mxu0 0
  %1547 = vmatpush2.bf16.msra.mxu0 0
  %1548 = vmatprep.subr.bf16.mxu0 0
  %1549 = vmatpush2.bf16.msra.mxu0 0
  %1550 = vmatprep.subr.bf16.mxu0 0
  %1551 = vmatpush2.bf16.msra.mxu0 0
  %1552 = vmatprep.subr.bf16.mxu0 0
  %1553 = vmatpush2.bf16.msra.mxu0 0
  %1554 = vmatprep.subr.bf16.mxu0 0
  %1555 = vmatpush2.bf16.msra.mxu0 0
  %1556 = vmatprep.mubr.bf16.mxu0 0
  %1557 = vmatmul.mubr.bf16.gmra.mxu0 %v1482
  %v1558 = vpop.f32.mrf.mxu0
  %v1559 = vadd.f32 0.0, %v1558
  %v1560 = vpop.f32.mrf.mxu0
  %v1561 = vadd.f32 0.0, %v1560
  %v1562 = vpop.f32.mrf.mxu0
  %v1563 = vpop.f32.mrf.mxu0
  %1564 = vdwg.mxu0
  %v1565 = vadd.f32 %v1477, %v1518
  %v1566 = vadd.f32 %v1478, %v1520
  %v1567 = vadd.f32 %v1479, %v1559
  %v1568 = vadd.f32 %v1480, %v1561
  %v1569 = vxor.u32 %v1565, 2147483648
  %v1570 = vmul.f32 %v1569, 1.442695
  %v1571 = vpow.pop %v1570
  %v1572 = vadd.f32 %v1571, 1.0
  %v1573 = vrcp.pop %v1572
  %v1574 = vmul.f32 1.0, %v1573
  %v1575 = vxor.u32 %v1566, 2147483648
  %v1576 = vmul.f32 %v1575, 1.442695
  %v1577 = vpow.pop %v1576
  %v1578 = vadd.f32 %v1577, 1.0
  %v1579 = vrcp.pop %v1578
  %v1580 = vmul.f32 1.0, %v1579
  %v1581 = vtanh.pop %v1567
  %v1582 = vxor.u32 %v1568, 2147483648
  %v1583 = vmul.f32 %v1582, 1.442695
  %v1584 = vpow.pop %v1583
  %v1585 = vadd.f32 %v1584, 1.0
  %v1586 = vrcp.pop %v1585
  %v1587 = vmul.f32 1.0, %v1586
  %v1588 = vld [vmem:[#allocation3] sm:$0xff]
  %v1589 = vmul.f32 %v1580, %v1588
  %v1590 = vmul.f32 %v1574, %v1581
  %v1591 = vadd.f32 %v1589, %v1590
  %v1592 = vtanh.pop %v1591
  %v1593 = vmul.f32 %v1587, %v1592
  %1594 = vst [vmem:[#allocation3] sm:$0xff] %v1591
  %1595 = vst [vmem:[#allocation2] sm:$0xff] %v1593
  %s1596 = scalar_lea.vmem %s7, 48
  %1597 = vst [vmem:[%s1596] sm:$0xff] %v1593
  %s1598 = scalar_lea.vmem [#allocation4], 224
  %v1599 = vld [vmem:[%s1598] sm:$0xff]
  %v1600 = vld [vmem:[%s1598 + $0x8] sm:$0xff]
  %v1601 = vld [vmem:[%s1598 + $0x10] sm:$0xff]
  %v1602 = vld [vmem:[%s1598 + $0x18] sm:$0xff]
  %v1603 = vld [vmem:[#allocation2] sm:$0xff]
  %v1604 = vpack.c.bf16 %v1603, %v1603
  %1605 = vmatprep.subr.bf16.mxu0 %v717
  %1606 = vmatpush1.bf16.msra.mxu0 %v716
  %1607 = vmatprep.subr.bf16.mxu0 %v713
  %1608 = vmatpush1.bf16.msra.mxu0 %v712
  %1609 = vmatprep.subr.bf16.mxu0 %v709
  %1610 = vmatpush1.bf16.msra.mxu0 %v708
  %1611 = vmatprep.subr.bf16.mxu0 %v705
  %1612 = vmatpush1.bf16.msra.mxu0 %v704
  %1613 = vmatprep.subr.bf16.mxu0 %v701
  %1614 = vmatpush1.bf16.msra.mxu0 %v700
  %1615 = vmatprep.subr.bf16.mxu0 %v697
  %1616 = vmatpush1.bf16.msra.mxu0 %v696
  %1617 = vmatprep.subr.bf16.mxu0 %v693
  %1618 = vmatpush1.bf16.msra.mxu0 %v692
  %1619 = vmatprep.subr.bf16.mxu0 %v689
  %1620 = vmatpush1.bf16.msra.mxu0 %v688
  %1621 = vmatprep.subr.bf16.mxu0 0
  %1622 = vmatpush2.bf16.msra.mxu0 0
  %1623 = vmatprep.subr.bf16.mxu0 0
  %1624 = vmatpush2.bf16.msra.mxu0 0
  %1625 = vmatprep.subr.bf16.mxu0 0
  %1626 = vmatpush2.bf16.msra.mxu0 0
  %1627 = vmatprep.subr.bf16.mxu0 0
  %1628 = vmatpush2.bf16.msra.mxu0 0
  %1629 = vmatprep.subr.bf16.mxu0 0
  %1630 = vmatpush2.bf16.msra.mxu0 0
  %1631 = vmatprep.subr.bf16.mxu0 0
  %1632 = vmatpush2.bf16.msra.mxu0 0
  %1633 = vmatprep.subr.bf16.mxu0 0
  %1634 = vmatpush2.bf16.msra.mxu0 0
  %1635 = vmatprep.subr.bf16.mxu0 0
  %1636 = vmatpush2.bf16.msra.mxu0 0
  %1637 = vmatprep.mubr.bf16.mxu0 0
  %1638 = vmatmul.mubr.bf16.gmra.mxu0 %v1604
  %v1639 = vpop.f32.mrf.mxu0
  %v1640 = vadd.f32 0.0, %v1639
  %v1641 = vpop.f32.mrf.mxu0
  %v1642 = vadd.f32 0.0, %v1641
  %v1643 = vpop.f32.mrf.mxu0
  %v1644 = vpop.f32.mrf.mxu0
  %1645 = vdwg.mxu0
  %1646 = vmatprep.subr.bf16.mxu0 %v719
  %1647 = vmatpush1.bf16.msra.mxu0 %v718
  %1648 = vmatprep.subr.bf16.mxu0 %v715
  %1649 = vmatpush1.bf16.msra.mxu0 %v714
  %1650 = vmatprep.subr.bf16.mxu0 %v711
  %1651 = vmatpush1.bf16.msra.mxu0 %v710
  %1652 = vmatprep.subr.bf16.mxu0 %v707
  %1653 = vmatpush1.bf16.msra.mxu0 %v706
  %1654 = vmatprep.subr.bf16.mxu0 %v703
  %1655 = vmatpush1.bf16.msra.mxu0 %v702
  %1656 = vmatprep.subr.bf16.mxu0 %v699
  %1657 = vmatpush1.bf16.msra.mxu0 %v698
  %1658 = vmatprep.subr.bf16.mxu0 %v695
  %1659 = vmatpush1.bf16.msra.mxu0 %v694
  %1660 = vmatprep.subr.bf16.mxu0 %v691
  %1661 = vmatpush1.bf16.msra.mxu0 %v690
  %1662 = vmatprep.subr.bf16.mxu0 0
  %1663 = vmatpush2.bf16.msra.mxu0 0
  %1664 = vmatprep.subr.bf16.mxu0 0
  %1665 = vmatpush2.bf16.msra.mxu0 0
  %1666 = vmatprep.subr.bf16.mxu0 0
  %1667 = vmatpush2.bf16.msra.mxu0 0
  %1668 = vmatprep.subr.bf16.mxu0 0
  %1669 = vmatpush2.bf16.msra.mxu0 0
  %1670 = vmatprep.subr.bf16.mxu0 0
  %1671 = vmatpush2.bf16.msra.mxu0 0
  %1672 = vmatprep.subr.bf16.mxu0 0
  %1673 = vmatpush2.bf16.msra.mxu0 0
  %1674 = vmatprep.subr.bf16.mxu0 0
  %1675 = vmatpush2.bf16.msra.mxu0 0
  %1676 = vmatprep.subr.bf16.mxu0 0
  %1677 = vmatpush2.bf16.msra.mxu0 0
  %1678 = vmatprep.mubr.bf16.mxu0 0
  %1679 = vmatmul.mubr.bf16.gmra.mxu0 %v1604
  %v1680 = vpop.f32.mrf.mxu0
  %v1681 = vadd.f32 0.0, %v1680
  %v1682 = vpop.f32.mrf.mxu0
  %v1683 = vadd.f32 0.0, %v1682
  %v1684 = vpop.f32.mrf.mxu0
  %v1685 = vpop.f32.mrf.mxu0
  %1686 = vdwg.mxu0
  %v1687 = vadd.f32 %v1599, %v1640
  %v1688 = vadd.f32 %v1600, %v1642
  %v1689 = vadd.f32 %v1601, %v1681
  %v1690 = vadd.f32 %v1602, %v1683
  %v1691 = vxor.u32 %v1687, 2147483648
  %v1692 = vmul.f32 %v1691, 1.442695
  %v1693 = vpow.pop %v1692
  %v1694 = vadd.f32 %v1693, 1.0
  %v1695 = vrcp.pop %v1694
  %v1696 = vmul.f32 1.0, %v1695
  %v1697 = vxor.u32 %v1688, 2147483648
  %v1698 = vmul.f32 %v1697, 1.442695
  %v1699 = vpow.pop %v1698
  %v1700 = vadd.f32 %v1699, 1.0
  %v1701 = vrcp.pop %v1700
  %v1702 = vmul.f32 1.0, %v1701
  %v1703 = vtanh.pop %v1689
  %v1704 = vxor.u32 %v1690, 2147483648
  %v1705 = vmul.f32 %v1704, 1.442695
  %v1706 = vpow.pop %v1705
  %v1707 = vadd.f32 %v1706, 1.0
  %v1708 = vrcp.pop %v1707
  %v1709 = vmul.f32 1.0, %v1708
  %v1710 = vld [vmem:[#allocation3] sm:$0xff]
  %v1711 = vmul.f32 %v1702, %v1710
  %v1712 = vmul.f32 %v1696, %v1703
  %v1713 = vadd.f32 %v1711, %v1712
  %v1714 = vtanh.pop %v1713
  %v1715 = vmul.f32 %v1709, %v1714
  %1716 = vst [vmem:[#allocation3] sm:$0xff] %v1713
  %1717 = vst [vmem:[#allocation2] sm:$0xff] %v1715
  %s1718 = scalar_lea.vmem %s7, 56
  %1719 = vst [vmem:[%s1718] sm:$0xff] %v1715
  %s1720 = scalar_lea.vmem [#allocation4], 256
  %v1721 = vld [vmem:[%s1720] sm:$0xff]
  %v1722 = vld [vmem:[%s1720 + $0x8] sm:$0xff]
  %v1723 = vld [vmem:[%s1720 + $0x10] sm:$0xff]
  %v1724 = vld [vmem:[%s1720 + $0x18] sm:$0xff]
  %v1725 = vld [vmem:[#allocation2] sm:$0xff]
  %v1726 = vpack.c.bf16 %v1725, %v1725
  %1727 = vmatprep.subr.bf16.mxu0 %v717
  %1728 = vmatpush1.bf16.msra.mxu0 %v716
  %1729 = vmatprep.subr.bf16.mxu0 %v713
  %1730 = vmatpush1.bf16.msra.mxu0 %v712
  %1731 = vmatprep.subr.bf16.mxu0 %v709
  %1732 = vmatpush1.bf16.msra.mxu0 %v708
  %1733 = vmatprep.subr.bf16.mxu0 %v705
  %1734 = vmatpush1.bf16.msra.mxu0 %v704
  %1735 = vmatprep.subr.bf16.mxu0 %v701
  %1736 = vmatpush1.bf16.msra.mxu0 %v700
  %1737 = vmatprep.subr.bf16.mxu0 %v697
  %1738 = vmatpush1.bf16.msra.mxu0 %v696
  %1739 = vmatprep.subr.bf16.mxu0 %v693
  %1740 = vmatpush1.bf16.msra.mxu0 %v692
  %1741 = vmatprep.subr.bf16.mxu0 %v689
  %1742 = vmatpush1.bf16.msra.mxu0 %v688
  %1743 = vmatprep.subr.bf16.mxu0 0
  %1744 = vmatpush2.bf16.msra.mxu0 0
  %1745 = vmatprep.subr.bf16.mxu0 0
  %1746 = vmatpush2.bf16.msra.mxu0 0
  %1747 = vmatprep.subr.bf16.mxu0 0
  %1748 = vmatpush2.bf16.msra.mxu0 0
  %1749 = vmatprep.subr.bf16.mxu0 0
  %1750 = vmatpush2.bf16.msra.mxu0 0
  %1751 = vmatprep.subr.bf16.mxu0 0
  %1752 = vmatpush2.bf16.msra.mxu0 0
  %1753 = vmatprep.subr.bf16.mxu0 0
  %1754 = vmatpush2.bf16.msra.mxu0 0
  %1755 = vmatprep.subr.bf16.mxu0 0
  %1756 = vmatpush2.bf16.msra.mxu0 0
  %1757 = vmatprep.subr.bf16.mxu0 0
  %1758 = vmatpush2.bf16.msra.mxu0 0
  %1759 = vmatprep.mubr.bf16.mxu0 0
  %1760 = vmatmul.mubr.bf16.gmra.mxu0 %v1726
  %v1761 = vpop.f32.mrf.mxu0
  %v1762 = vadd.f32 0.0, %v1761
  %v1763 = vpop.f32.mrf.mxu0
  %v1764 = vadd.f32 0.0, %v1763
  %v1765 = vpop.f32.mrf.mxu0
  %v1766 = vpop.f32.mrf.mxu0
  %1767 = vdwg.mxu0
  %1768 = vmatprep.subr.bf16.mxu0 %v719
  %1769 = vmatpush1.bf16.msra.mxu0 %v718
  %1770 = vmatprep.subr.bf16.mxu0 %v715
  %1771 = vmatpush1.bf16.msra.mxu0 %v714
  %1772 = vmatprep.subr.bf16.mxu0 %v711
  %1773 = vmatpush1.bf16.msra.mxu0 %v710
  %1774 = vmatprep.subr.bf16.mxu0 %v707
  %1775 = vmatpush1.bf16.msra.mxu0 %v706
  %1776 = vmatprep.subr.bf16.mxu0 %v703
  %1777 = vmatpush1.bf16.msra.mxu0 %v702
  %1778 = vmatprep.subr.bf16.mxu0 %v699
  %1779 = vmatpush1.bf16.msra.mxu0 %v698
  %1780 = vmatprep.subr.bf16.mxu0 %v695
  %1781 = vmatpush1.bf16.msra.mxu0 %v694
  %1782 = vmatprep.subr.bf16.mxu0 %v691
  %1783 = vmatpush1.bf16.msra.mxu0 %v690
  %1784 = vmatprep.subr.bf16.mxu0 0
  %1785 = vmatpush2.bf16.msra.mxu0 0
  %1786 = vmatprep.subr.bf16.mxu0 0
  %1787 = vmatpush2.bf16.msra.mxu0 0
  %1788 = vmatprep.subr.bf16.mxu0 0
  %1789 = vmatpush2.bf16.msra.mxu0 0
  %1790 = vmatprep.subr.bf16.mxu0 0
  %1791 = vmatpush2.bf16.msra.mxu0 0
  %1792 = vmatprep.subr.bf16.mxu0 0
  %1793 = vmatpush2.bf16.msra.mxu0 0
  %1794 = vmatprep.subr.bf16.mxu0 0
  %1795 = vmatpush2.bf16.msra.mxu0 0
  %1796 = vmatprep.subr.bf16.mxu0 0
  %1797 = vmatpush2.bf16.msra.mxu0 0
  %1798 = vmatprep.subr.bf16.mxu0 0
  %1799 = vmatpush2.bf16.msra.mxu0 0
  %1800 = vmatprep.mubr.bf16.mxu0 0
  %1801 = vmatmul.mubr.bf16.gmra.mxu0 %v1726
  %v1802 = vpop.f32.mrf.mxu0
  %v1803 = vadd.f32 0.0, %v1802
  %v1804 = vpop.f32.mrf.mxu0
  %v1805 = vadd.f32 0.0, %v1804
  %v1806 = vpop.f32.mrf.mxu0
  %v1807 = vpop.f32.mrf.mxu0
  %1808 = vdwg.mxu0
  %v1809 = vadd.f32 %v1721, %v1762
  %v1810 = vadd.f32 %v1722, %v1764
  %v1811 = vadd.f32 %v1723, %v1803
  %v1812 = vadd.f32 %v1724, %v1805
  %v1813 = vxor.u32 %v1809, 2147483648
  %v1814 = vmul.f32 %v1813, 1.442695
  %v1815 = vpow.pop %v1814
  %v1816 = vadd.f32 %v1815, 1.0
  %v1817 = vrcp.pop %v1816
  %v1818 = vmul.f32 1.0, %v1817
  %v1819 = vxor.u32 %v1810, 2147483648
  %v1820 = vmul.f32 %v1819, 1.442695
  %v1821 = vpow.pop %v1820
  %v1822 = vadd.f32 %v1821, 1.0
  %v1823 = vrcp.pop %v1822
  %v1824 = vmul.f32 1.0, %v1823
  %v1825 = vtanh.pop %v1811
  %v1826 = vxor.u32 %v1812, 2147483648
  %v1827 = vmul.f32 %v1826, 1.442695
  %v1828 = vpow.pop %v1827
  %v1829 = vadd.f32 %v1828, 1.0
  %v1830 = vrcp.pop %v1829
  %v1831 = vmul.f32 1.0, %v1830
  %v1832 = vld [vmem:[#allocation3] sm:$0xff]
  %v1833 = vmul.f32 %v1824, %v1832
  %v1834 = vmul.f32 %v1818, %v1825
  %v1835 = vadd.f32 %v1833, %v1834
  %v1836 = vtanh.pop %v1835
  %v1837 = vmul.f32 %v1831, %v1836
  %1838 = vst [vmem:[#allocation3] sm:$0xff] %v1835
  %1839 = vst [vmem:[#allocation2] sm:$0xff] %v1837
  %s1840 = scalar_lea.vmem %s7, 64
  %1841 = vst [vmem:[%s1840] sm:$0xff] %v1837
  %s1842 = scalar_lea.vmem [#allocation4], 288
  %v1843 = vld [vmem:[%s1842] sm:$0xff]
  %v1844 = vld [vmem:[%s1842 + $0x8] sm:$0xff]
  %v1845 = vld [vmem:[%s1842 + $0x10] sm:$0xff]
  %v1846 = vld [vmem:[%s1842 + $0x18] sm:$0xff]
  %v1847 = vld [vmem:[#allocation2] sm:$0xff]
  %v1848 = vpack.c.bf16 %v1847, %v1847
  %1849 = vmatprep.subr.bf16.mxu0 %v717
  %1850 = vmatpush1.bf16.msra.mxu0 %v716
  %1851 = vmatprep.subr.bf16.mxu0 %v713
  %1852 = vmatpush1.bf16.msra.mxu0 %v712
  %1853 = vmatprep.subr.bf16.mxu0 %v709
  %1854 = vmatpush1.bf16.msra.mxu0 %v708
  %1855 = vmatprep.subr.bf16.mxu0 %v705
  %1856 = vmatpush1.bf16.msra.mxu0 %v704
  %1857 = vmatprep.subr.bf16.mxu0 %v701
  %1858 = vmatpush1.bf16.msra.mxu0 %v700
  %1859 = vmatprep.subr.bf16.mxu0 %v697
  %1860 = vmatpush1.bf16.msra.mxu0 %v696
  %1861 = vmatprep.subr.bf16.mxu0 %v693
  %1862 = vmatpush1.bf16.msra.mxu0 %v692
  %1863 = vmatprep.subr.bf16.mxu0 %v689
  %1864 = vmatpush1.bf16.msra.mxu0 %v688
  %1865 = vmatprep.subr.bf16.mxu0 0
  %1866 = vmatpush2.bf16.msra.mxu0 0
  %1867 = vmatprep.subr.bf16.mxu0 0
  %1868 = vmatpush2.bf16.msra.mxu0 0
  %1869 = vmatprep.subr.bf16.mxu0 0
  %1870 = vmatpush2.bf16.msra.mxu0 0
  %1871 = vmatprep.subr.bf16.mxu0 0
  %1872 = vmatpush2.bf16.msra.mxu0 0
  %1873 = vmatprep.subr.bf16.mxu0 0
  %1874 = vmatpush2.bf16.msra.mxu0 0
  %1875 = vmatprep.subr.bf16.mxu0 0
  %1876 = vmatpush2.bf16.msra.mxu0 0
  %1877 = vmatprep.subr.bf16.mxu0 0
  %1878 = vmatpush2.bf16.msra.mxu0 0
  %1879 = vmatprep.subr.bf16.mxu0 0
  %1880 = vmatpush2.bf16.msra.mxu0 0
  %1881 = vmatprep.mubr.bf16.mxu0 0
  %1882 = vmatmul.mubr.bf16.gmra.mxu0 %v1848
  %v1883 = vpop.f32.mrf.mxu0
  %v1884 = vadd.f32 0.0, %v1883
  %v1885 = vpop.f32.mrf.mxu0
  %v1886 = vadd.f32 0.0, %v1885
  %v1887 = vpop.f32.mrf.mxu0
  %v1888 = vpop.f32.mrf.mxu0
  %1889 = vdwg.mxu0
  %1890 = vmatprep.subr.bf16.mxu0 %v719
  %1891 = vmatpush1.bf16.msra.mxu0 %v718
  %1892 = vmatprep.subr.bf16.mxu0 %v715
  %1893 = vmatpush1.bf16.msra.mxu0 %v714
  %1894 = vmatprep.subr.bf16.mxu0 %v711
  %1895 = vmatpush1.bf16.msra.mxu0 %v710
  %1896 = vmatprep.subr.bf16.mxu0 %v707
  %1897 = vmatpush1.bf16.msra.mxu0 %v706
  %1898 = vmatprep.subr.bf16.mxu0 %v703
  %1899 = vmatpush1.bf16.msra.mxu0 %v702
  %1900 = vmatprep.subr.bf16.mxu0 %v699
  %1901 = vmatpush1.bf16.msra.mxu0 %v698
  %1902 = vmatprep.subr.bf16.mxu0 %v695
  %1903 = vmatpush1.bf16.msra.mxu0 %v694
  %1904 = vmatprep.subr.bf16.mxu0 %v691
  %1905 = vmatpush1.bf16.msra.mxu0 %v690
  %1906 = vmatprep.subr.bf16.mxu0 0
  %1907 = vmatpush2.bf16.msra.mxu0 0
  %1908 = vmatprep.subr.bf16.mxu0 0
  %1909 = vmatpush2.bf16.msra.mxu0 0
  %1910 = vmatprep.subr.bf16.mxu0 0
  %1911 = vmatpush2.bf16.msra.mxu0 0
  %1912 = vmatprep.subr.bf16.mxu0 0
  %1913 = vmatpush2.bf16.msra.mxu0 0
  %1914 = vmatprep.subr.bf16.mxu0 0
  %1915 = vmatpush2.bf16.msra.mxu0 0
  %1916 = vmatprep.subr.bf16.mxu0 0
  %1917 = vmatpush2.bf16.msra.mxu0 0
  %1918 = vmatprep.subr.bf16.mxu0 0
  %1919 = vmatpush2.bf16.msra.mxu0 0
  %1920 = vmatprep.subr.bf16.mxu0 0
  %1921 = vmatpush2.bf16.msra.mxu0 0
  %1922 = vmatprep.mubr.bf16.mxu0 0
  %1923 = vmatmul.mubr.bf16.gmra.mxu0 %v1848
  %v1924 = vpop.f32.mrf.mxu0
  %v1925 = vadd.f32 0.0, %v1924
  %v1926 = vpop.f32.mrf.mxu0
  %v1927 = vadd.f32 0.0, %v1926
  %v1928 = vpop.f32.mrf.mxu0
  %v1929 = vpop.f32.mrf.mxu0
  %1930 = vdwg.mxu0
  %v1931 = vadd.f32 %v1843, %v1884
  %v1932 = vadd.f32 %v1844, %v1886
  %v1933 = vadd.f32 %v1845, %v1925
  %v1934 = vadd.f32 %v1846, %v1927
  %v1935 = vxor.u32 %v1931, 2147483648
  %v1936 = vmul.f32 %v1935, 1.442695
  %v1937 = vpow.pop %v1936
  %v1938 = vadd.f32 %v1937, 1.0
  %v1939 = vrcp.pop %v1938
  %v1940 = vmul.f32 1.0, %v1939
  %v1941 = vxor.u32 %v1932, 2147483648
  %v1942 = vmul.f32 %v1941, 1.442695
  %v1943 = vpow.pop %v1942
  %v1944 = vadd.f32 %v1943, 1.0
  %v1945 = vrcp.pop %v1944
  %v1946 = vmul.f32 1.0, %v1945
  %v1947 = vtanh.pop %v1933
  %v1948 = vxor.u32 %v1934, 2147483648
  %v1949 = vmul.f32 %v1948, 1.442695
  %v1950 = vpow.pop %v1949
  %v1951 = vadd.f32 %v1950, 1.0
  %v1952 = vrcp.pop %v1951
  %v1953 = vmul.f32 1.0, %v1952
  %v1954 = vld [vmem:[#allocation3] sm:$0xff]
  %v1955 = vmul.f32 %v1946, %v1954
  %v1956 = vmul.f32 %v1940, %v1947
  %v1957 = vadd.f32 %v1955, %v1956
  %v1958 = vtanh.pop %v1957
  %v1959 = vmul.f32 %v1953, %v1958
  %1960 = vst [vmem:[#allocation3] sm:$0xff] %v1957
  %1961 = vst [vmem:[#allocation2] sm:$0xff] %v1959
  %s1962 = scalar_lea.vmem %s7, 72
  %1963 = vst [vmem:[%s1962] sm:$0xff] %v1959
  %s1964 = scalar_lea.vmem [#allocation4], 320
  %v1965 = vld [vmem:[%s1964] sm:$0xff]
  %v1966 = vld [vmem:[%s1964 + $0x8] sm:$0xff]
  %v1967 = vld [vmem:[%s1964 + $0x10] sm:$0xff]
  %v1968 = vld [vmem:[%s1964 + $0x18] sm:$0xff]
  %v1969 = vld [vmem:[#allocation2] sm:$0xff]
  %v1970 = vpack.c.bf16 %v1969, %v1969
  %1971 = vmatprep.subr.bf16.mxu0 %v717
  %1972 = vmatpush1.bf16.msra.mxu0 %v716
  %1973 = vmatprep.subr.bf16.mxu0 %v713
  %1974 = vmatpush1.bf16.msra.mxu0 %v712
  %1975 = vmatprep.subr.bf16.mxu0 %v709
  %1976 = vmatpush1.bf16.msra.mxu0 %v708
  %1977 = vmatprep.subr.bf16.mxu0 %v705
  %1978 = vmatpush1.bf16.msra.mxu0 %v704
  %1979 = vmatprep.subr.bf16.mxu0 %v701
  %1980 = vmatpush1.bf16.msra.mxu0 %v700
  %1981 = vmatprep.subr.bf16.mxu0 %v697
  %1982 = vmatpush1.bf16.msra.mxu0 %v696
  %1983 = vmatprep.subr.bf16.mxu0 %v693
  %1984 = vmatpush1.bf16.msra.mxu0 %v692
  %1985 = vmatprep.subr.bf16.mxu0 %v689
  %1986 = vmatpush1.bf16.msra.mxu0 %v688
  %1987 = vmatprep.subr.bf16.mxu0 0
  %1988 = vmatpush2.bf16.msra.mxu0 0
  %1989 = vmatprep.subr.bf16.mxu0 0
  %1990 = vmatpush2.bf16.msra.mxu0 0
  %1991 = vmatprep.subr.bf16.mxu0 0
  %1992 = vmatpush2.bf16.msra.mxu0 0
  %1993 = vmatprep.subr.bf16.mxu0 0
  %1994 = vmatpush2.bf16.msra.mxu0 0
  %1995 = vmatprep.subr.bf16.mxu0 0
  %1996 = vmatpush2.bf16.msra.mxu0 0
  %1997 = vmatprep.subr.bf16.mxu0 0
  %1998 = vmatpush2.bf16.msra.mxu0 0
  %1999 = vmatprep.subr.bf16.mxu0 0
  %2000 = vmatpush2.bf16.msra.mxu0 0
  %2001 = vmatprep.subr.bf16.mxu0 0
  %2002 = vmatpush2.bf16.msra.mxu0 0
  %2003 = vmatprep.mubr.bf16.mxu0 0
  %2004 = vmatmul.mubr.bf16.gmra.mxu0 %v1970
  %v2005 = vpop.f32.mrf.mxu0
  %v2006 = vadd.f32 0.0, %v2005
  %v2007 = vpop.f32.mrf.mxu0
  %v2008 = vadd.f32 0.0, %v2007
  %v2009 = vpop.f32.mrf.mxu0
  %v2010 = vpop.f32.mrf.mxu0
  %2011 = vdwg.mxu0
  %2012 = vmatprep.subr.bf16.mxu0 %v719
  %2013 = vmatpush1.bf16.msra.mxu0 %v718
  %2014 = vmatprep.subr.bf16.mxu0 %v715
  %2015 = vmatpush1.bf16.msra.mxu0 %v714
  %2016 = vmatprep.subr.bf16.mxu0 %v711
  %2017 = vmatpush1.bf16.msra.mxu0 %v710
  %2018 = vmatprep.subr.bf16.mxu0 %v707
  %2019 = vmatpush1.bf16.msra.mxu0 %v706
  %2020 = vmatprep.subr.bf16.mxu0 %v703
  %2021 = vmatpush1.bf16.msra.mxu0 %v702
  %2022 = vmatprep.subr.bf16.mxu0 %v699
  %2023 = vmatpush1.bf16.msra.mxu0 %v698
  %2024 = vmatprep.subr.bf16.mxu0 %v695
  %2025 = vmatpush1.bf16.msra.mxu0 %v694
  %2026 = vmatprep.subr.bf16.mxu0 %v691
  %2027 = vmatpush1.bf16.msra.mxu0 %v690
  %2028 = vmatprep.subr.bf16.mxu0 0
  %2029 = vmatpush2.bf16.msra.mxu0 0
  %2030 = vmatprep.subr.bf16.mxu0 0
  %2031 = vmatpush2.bf16.msra.mxu0 0
  %2032 = vmatprep.subr.bf16.mxu0 0
  %2033 = vmatpush2.bf16.msra.mxu0 0
  %2034 = vmatprep.subr.bf16.mxu0 0
  %2035 = vmatpush2.bf16.msra.mxu0 0
  %2036 = vmatprep.subr.bf16.mxu0 0
  %2037 = vmatpush2.bf16.msra.mxu0 0
  %2038 = vmatprep.subr.bf16.mxu0 0
  %2039 = vmatpush2.bf16.msra.mxu0 0
  %2040 = vmatprep.subr.bf16.mxu0 0
  %2041 = vmatpush2.bf16.msra.mxu0 0
  %2042 = vmatprep.subr.bf16.mxu0 0
  %2043 = vmatpush2.bf16.msra.mxu0 0
  %2044 = vmatprep.mubr.bf16.mxu0 0
  %2045 = vmatmul.mubr.bf16.gmra.mxu0 %v1970
  %v2046 = vpop.f32.mrf.mxu0
  %v2047 = vadd.f32 0.0, %v2046
  %v2048 = vpop.f32.mrf.mxu0
  %v2049 = vadd.f32 0.0, %v2048
  %v2050 = vpop.f32.mrf.mxu0
  %v2051 = vpop.f32.mrf.mxu0
  %2052 = vdwg.mxu0
  %v2053 = vadd.f32 %v1965, %v2006
  %v2054 = vadd.f32 %v1966, %v2008
  %v2055 = vadd.f32 %v1967, %v2047
  %v2056 = vadd.f32 %v1968, %v2049
  %v2057 = vxor.u32 %v2053, 2147483648
  %v2058 = vmul.f32 %v2057, 1.442695
  %v2059 = vpow.pop %v2058
  %v2060 = vadd.f32 %v2059, 1.0
  %v2061 = vrcp.pop %v2060
  %v2062 = vmul.f32 1.0, %v2061
  %v2063 = vxor.u32 %v2054, 2147483648
  %v2064 = vmul.f32 %v2063, 1.442695
  %v2065 = vpow.pop %v2064
  %v2066 = vadd.f32 %v2065, 1.0
  %v2067 = vrcp.pop %v2066
  %v2068 = vmul.f32 1.0, %v2067
  %v2069 = vtanh.pop %v2055
  %v2070 = vxor.u32 %v2056, 2147483648
  %v2071 = vmul.f32 %v2070, 1.442695
  %v2072 = vpow.pop %v2071
  %v2073 = vadd.f32 %v2072, 1.0
  %v2074 = vrcp.pop %v2073
  %v2075 = vmul.f32 1.0, %v2074
  %v2076 = vld [vmem:[#allocation3] sm:$0xff]
  %v2077 = vmul.f32 %v2068, %v2076
  %v2078 = vmul.f32 %v2062, %v2069
  %v2079 = vadd.f32 %v2077, %v2078
  %v2080 = vtanh.pop %v2079
  %v2081 = vmul.f32 %v2075, %v2080
  %2082 = vst [vmem:[#allocation3] sm:$0xff] %v2079
  %2083 = vst [vmem:[#allocation2] sm:$0xff] %v2081
  %s2084 = scalar_lea.vmem %s7, 80
  %2085 = vst [vmem:[%s2084] sm:$0xff] %v2081
  %s2086 = scalar_lea.vmem [#allocation4], 352
  %v2087 = vld [vmem:[%s2086] sm:$0xff]
  %v2088 = vld [vmem:[%s2086 + $0x8] sm:$0xff]
  %v2089 = vld [vmem:[%s2086 + $0x10] sm:$0xff]
  %v2090 = vld [vmem:[%s2086 + $0x18] sm:$0xff]
  %v2091 = vld [vmem:[#allocation2] sm:$0xff]
  %v2092 = vpack.c.bf16 %v2091, %v2091
  %2093 = vmatprep.subr.bf16.mxu0 %v717
  %2094 = vmatpush1.bf16.msra.mxu0 %v716
  %2095 = vmatprep.subr.bf16.mxu0 %v713
  %2096 = vmatpush1.bf16.msra.mxu0 %v712
  %2097 = vmatprep.subr.bf16.mxu0 %v709
  %2098 = vmatpush1.bf16.msra.mxu0 %v708
  %2099 = vmatprep.subr.bf16.mxu0 %v705
  %2100 = vmatpush1.bf16.msra.mxu0 %v704
  %2101 = vmatprep.subr.bf16.mxu0 %v701
  %2102 = vmatpush1.bf16.msra.mxu0 %v700
  %2103 = vmatprep.subr.bf16.mxu0 %v697
  %2104 = vmatpush1.bf16.msra.mxu0 %v696
  %2105 = vmatprep.subr.bf16.mxu0 %v693
  %2106 = vmatpush1.bf16.msra.mxu0 %v692
  %2107 = vmatprep.subr.bf16.mxu0 %v689
  %2108 = vmatpush1.bf16.msra.mxu0 %v688
  %2109 = vmatprep.subr.bf16.mxu0 0
  %2110 = vmatpush2.bf16.msra.mxu0 0
  %2111 = vmatprep.subr.bf16.mxu0 0
  %2112 = vmatpush2.bf16.msra.mxu0 0
  %2113 = vmatprep.subr.bf16.mxu0 0
  %2114 = vmatpush2.bf16.msra.mxu0 0
  %2115 = vmatprep.subr.bf16.mxu0 0
  %2116 = vmatpush2.bf16.msra.mxu0 0
  %2117 = vmatprep.subr.bf16.mxu0 0
  %2118 = vmatpush2.bf16.msra.mxu0 0
  %2119 = vmatprep.subr.bf16.mxu0 0
  %2120 = vmatpush2.bf16.msra.mxu0 0
  %2121 = vmatprep.subr.bf16.mxu0 0
  %2122 = vmatpush2.bf16.msra.mxu0 0
  %2123 = vmatprep.subr.bf16.mxu0 0
  %2124 = vmatpush2.bf16.msra.mxu0 0
  %2125 = vmatprep.mubr.bf16.mxu0 0
  %2126 = vmatmul.mubr.bf16.gmra.mxu0 %v2092
  %v2127 = vpop.f32.mrf.mxu0
  %v2128 = vadd.f32 0.0, %v2127
  %v2129 = vpop.f32.mrf.mxu0
  %v2130 = vadd.f32 0.0, %v2129
  %v2131 = vpop.f32.mrf.mxu0
  %v2132 = vpop.f32.mrf.mxu0
  %2133 = vdwg.mxu0
  %2134 = vmatprep.subr.bf16.mxu0 %v719
  %2135 = vmatpush1.bf16.msra.mxu0 %v718
  %2136 = vmatprep.subr.bf16.mxu0 %v715
  %2137 = vmatpush1.bf16.msra.mxu0 %v714
  %2138 = vmatprep.subr.bf16.mxu0 %v711
  %2139 = vmatpush1.bf16.msra.mxu0 %v710
  %2140 = vmatprep.subr.bf16.mxu0 %v707
  %2141 = vmatpush1.bf16.msra.mxu0 %v706
  %2142 = vmatprep.subr.bf16.mxu0 %v703
  %2143 = vmatpush1.bf16.msra.mxu0 %v702
  %2144 = vmatprep.subr.bf16.mxu0 %v699
  %2145 = vmatpush1.bf16.msra.mxu0 %v698
  %2146 = vmatprep.subr.bf16.mxu0 %v695
  %2147 = vmatpush1.bf16.msra.mxu0 %v694
  %2148 = vmatprep.subr.bf16.mxu0 %v691
  %2149 = vmatpush1.bf16.msra.mxu0 %v690
  %2150 = vmatprep.subr.bf16.mxu0 0
  %2151 = vmatpush2.bf16.msra.mxu0 0
  %2152 = vmatprep.subr.bf16.mxu0 0
  %2153 = vmatpush2.bf16.msra.mxu0 0
  %2154 = vmatprep.subr.bf16.mxu0 0
  %2155 = vmatpush2.bf16.msra.mxu0 0
  %2156 = vmatprep.subr.bf16.mxu0 0
  %2157 = vmatpush2.bf16.msra.mxu0 0
  %2158 = vmatprep.subr.bf16.mxu0 0
  %2159 = vmatpush2.bf16.msra.mxu0 0
  %2160 = vmatprep.subr.bf16.mxu0 0
  %2161 = vmatpush2.bf16.msra.mxu0 0
  %2162 = vmatprep.subr.bf16.mxu0 0
  %2163 = vmatpush2.bf16.msra.mxu0 0
  %2164 = vmatprep.subr.bf16.mxu0 0
  %2165 = vmatpush2.bf16.msra.mxu0 0
  %2166 = vmatprep.mubr.bf16.mxu0 0
  %2167 = vmatmul.mubr.bf16.gmra.mxu0 %v2092
  %v2168 = vpop.f32.mrf.mxu0
  %v2169 = vadd.f32 0.0, %v2168
  %v2170 = vpop.f32.mrf.mxu0
  %v2171 = vadd.f32 0.0, %v2170
  %v2172 = vpop.f32.mrf.mxu0
  %v2173 = vpop.f32.mrf.mxu0
  %2174 = vdwg.mxu0
  %v2175 = vadd.f32 %v2087, %v2128
  %v2176 = vadd.f32 %v2088, %v2130
  %v2177 = vadd.f32 %v2089, %v2169
  %v2178 = vadd.f32 %v2090, %v2171
  %v2179 = vxor.u32 %v2175, 2147483648
  %v2180 = vmul.f32 %v2179, 1.442695
  %v2181 = vpow.pop %v2180
  %v2182 = vadd.f32 %v2181, 1.0
  %v2183 = vrcp.pop %v2182
  %v2184 = vmul.f32 1.0, %v2183
  %v2185 = vxor.u32 %v2176, 2147483648
  %v2186 = vmul.f32 %v2185, 1.442695
  %v2187 = vpow.pop %v2186
  %v2188 = vadd.f32 %v2187, 1.0
  %v2189 = vrcp.pop %v2188
  %v2190 = vmul.f32 1.0, %v2189
  %v2191 = vtanh.pop %v2177
  %v2192 = vxor.u32 %v2178, 2147483648
  %v2193 = vmul.f32 %v2192, 1.442695
  %v2194 = vpow.pop %v2193
  %v2195 = vadd.f32 %v2194, 1.0
  %v2196 = vrcp.pop %v2195
  %v2197 = vmul.f32 1.0, %v2196
  %v2198 = vld [vmem:[#allocation3] sm:$0xff]
  %v2199 = vmul.f32 %v2190, %v2198
  %v2200 = vmul.f32 %v2184, %v2191
  %v2201 = vadd.f32 %v2199, %v2200
  %v2202 = vtanh.pop %v2201
  %v2203 = vmul.f32 %v2197, %v2202
  %2204 = vst [vmem:[#allocation3] sm:$0xff] %v2201
  %2205 = vst [vmem:[#allocation2] sm:$0xff] %v2203
  %s2206 = scalar_lea.vmem %s7, 88
  %2207 = vst [vmem:[%s2206] sm:$0xff] %v2203
  %s2208 = scalar_lea.vmem [#allocation4], 384
  %v2209 = vld [vmem:[%s2208] sm:$0xff]
  %v2210 = vld [vmem:[%s2208 + $0x8] sm:$0xff]
  %v2211 = vld [vmem:[%s2208 + $0x10] sm:$0xff]
  %v2212 = vld [vmem:[%s2208 + $0x18] sm:$0xff]
  %v2213 = vld [vmem:[#allocation2] sm:$0xff]
  %v2214 = vpack.c.bf16 %v2213, %v2213
  %2215 = vmatprep.subr.bf16.mxu0 %v717
  %2216 = vmatpush1.bf16.msra.mxu0 %v716
  %2217 = vmatprep.subr.bf16.mxu0 %v713
  %2218 = vmatpush1.bf16.msra.mxu0 %v712
  %2219 = vmatprep.subr.bf16.mxu0 %v709
  %2220 = vmatpush1.bf16.msra.mxu0 %v708
  %2221 = vmatprep.subr.bf16.mxu0 %v705
  %2222 = vmatpush1.bf16.msra.mxu0 %v704
  %2223 = vmatprep.subr.bf16.mxu0 %v701
  %2224 = vmatpush1.bf16.msra.mxu0 %v700
  %2225 = vmatprep.subr.bf16.mxu0 %v697
  %2226 = vmatpush1.bf16.msra.mxu0 %v696
  %2227 = vmatprep.subr.bf16.mxu0 %v693
  %2228 = vmatpush1.bf16.msra.mxu0 %v692
  %2229 = vmatprep.subr.bf16.mxu0 %v689
  %2230 = vmatpush1.bf16.msra.mxu0 %v688
  %2231 = vmatprep.subr.bf16.mxu0 0
  %2232 = vmatpush2.bf16.msra.mxu0 0
  %2233 = vmatprep.subr.bf16.mxu0 0
  %2234 = vmatpush2.bf16.msra.mxu0 0
  %2235 = vmatprep.subr.bf16.mxu0 0
  %2236 = vmatpush2.bf16.msra.mxu0 0
  %2237 = vmatprep.subr.bf16.mxu0 0
  %2238 = vmatpush2.bf16.msra.mxu0 0
  %2239 = vmatprep.subr.bf16.mxu0 0
  %2240 = vmatpush2.bf16.msra.mxu0 0
  %2241 = vmatprep.subr.bf16.mxu0 0
  %2242 = vmatpush2.bf16.msra.mxu0 0
  %2243 = vmatprep.subr.bf16.mxu0 0
  %2244 = vmatpush2.bf16.msra.mxu0 0
  %2245 = vmatprep.subr.bf16.mxu0 0
  %2246 = vmatpush2.bf16.msra.mxu0 0
  %2247 = vmatprep.mubr.bf16.mxu0 0
  %2248 = vmatmul.mubr.bf16.gmra.mxu0 %v2214
  %v2249 = vpop.f32.mrf.mxu0
  %v2250 = vadd.f32 0.0, %v2249
  %v2251 = vpop.f32.mrf.mxu0
  %v2252 = vadd.f32 0.0, %v2251
  %v2253 = vpop.f32.mrf.mxu0
  %v2254 = vpop.f32.mrf.mxu0
  %2255 = vdwg.mxu0
  %2256 = vmatprep.subr.bf16.mxu0 %v719
  %2257 = vmatpush1.bf16.msra.mxu0 %v718
  %2258 = vmatprep.subr.bf16.mxu0 %v715
  %2259 = vmatpush1.bf16.msra.mxu0 %v714
  %2260 = vmatprep.subr.bf16.mxu0 %v711
  %2261 = vmatpush1.bf16.msra.mxu0 %v710
  %2262 = vmatprep.subr.bf16.mxu0 %v707
  %2263 = vmatpush1.bf16.msra.mxu0 %v706
  %2264 = vmatprep.subr.bf16.mxu0 %v703
  %2265 = vmatpush1.bf16.msra.mxu0 %v702
  %2266 = vmatprep.subr.bf16.mxu0 %v699
  %2267 = vmatpush1.bf16.msra.mxu0 %v698
  %2268 = vmatprep.subr.bf16.mxu0 %v695
  %2269 = vmatpush1.bf16.msra.mxu0 %v694
  %2270 = vmatprep.subr.bf16.mxu0 %v691
  %2271 = vmatpush1.bf16.msra.mxu0 %v690
  %2272 = vmatprep.subr.bf16.mxu0 0
  %2273 = vmatpush2.bf16.msra.mxu0 0
  %2274 = vmatprep.subr.bf16.mxu0 0
  %2275 = vmatpush2.bf16.msra.mxu0 0
  %2276 = vmatprep.subr.bf16.mxu0 0
  %2277 = vmatpush2.bf16.msra.mxu0 0
  %2278 = vmatprep.subr.bf16.mxu0 0
  %2279 = vmatpush2.bf16.msra.mxu0 0
  %2280 = vmatprep.subr.bf16.mxu0 0
  %2281 = vmatpush2.bf16.msra.mxu0 0
  %2282 = vmatprep.subr.bf16.mxu0 0
  %2283 = vmatpush2.bf16.msra.mxu0 0
  %2284 = vmatprep.subr.bf16.mxu0 0
  %2285 = vmatpush2.bf16.msra.mxu0 0
  %2286 = vmatprep.subr.bf16.mxu0 0
  %2287 = vmatpush2.bf16.msra.mxu0 0
  %2288 = vmatprep.mubr.bf16.mxu0 0
  %2289 = vmatmul.mubr.bf16.gmra.mxu0 %v2214
  %v2290 = vpop.f32.mrf.mxu0
  %v2291 = vadd.f32 0.0, %v2290
  %v2292 = vpop.f32.mrf.mxu0
  %v2293 = vadd.f32 0.0, %v2292
  %v2294 = vpop.f32.mrf.mxu0
  %v2295 = vpop.f32.mrf.mxu0
  %2296 = vdwg.mxu0
  %v2297 = vadd.f32 %v2209, %v2250
  %v2298 = vadd.f32 %v2210, %v2252
  %v2299 = vadd.f32 %v2211, %v2291
  %v2300 = vadd.f32 %v2212, %v2293
  %v2301 = vxor.u32 %v2297, 2147483648
  %v2302 = vmul.f32 %v2301, 1.442695
  %v2303 = vpow.pop %v2302
  %v2304 = vadd.f32 %v2303, 1.0
  %v2305 = vrcp.pop %v2304
  %v2306 = vmul.f32 1.0, %v2305
  %v2307 = vxor.u32 %v2298, 2147483648
  %v2308 = vmul.f32 %v2307, 1.442695
  %v2309 = vpow.pop %v2308
  %v2310 = vadd.f32 %v2309, 1.0
  %v2311 = vrcp.pop %v2310
  %v2312 = vmul.f32 1.0, %v2311
  %v2313 = vtanh.pop %v2299
  %v2314 = vxor.u32 %v2300, 2147483648
  %v2315 = vmul.f32 %v2314, 1.442695
  %v2316 = vpow.pop %v2315
  %v2317 = vadd.f32 %v2316, 1.0
  %v2318 = vrcp.pop %v2317
  %v2319 = vmul.f32 1.0, %v2318
  %v2320 = vld [vmem:[#allocation3] sm:$0xff]
  %v2321 = vmul.f32 %v2312, %v2320
  %v2322 = vmul.f32 %v2306, %v2313
  %v2323 = vadd.f32 %v2321, %v2322
  %v2324 = vtanh.pop %v2323
  %v2325 = vmul.f32 %v2319, %v2324
  %2326 = vst [vmem:[#allocation3] sm:$0xff] %v2323
  %2327 = vst [vmem:[#allocation2] sm:$0xff] %v2325
  %s2328 = scalar_lea.vmem %s7, 96
  %2329 = vst [vmem:[%s2328] sm:$0xff] %v2325
  // Predicated region
  $region34: #{yz_lstm_forward.2} parent=0 // pred_check
    _
  $region35: #{yz_lstm_forward.2} parent=0 // pred_check_branch
    %2331 = sbr.rel (0) target = $region37
  $region36: #{yz_lstm_forward.2} parent=0 // pred_region
    _
  $region37: #{yz_lstm_forward.2} parent=0 // pred_fallthru
    _
  // Predicated region
  $region38: #{yz_lstm_forward.2} parent=0 // pred_check
    _
  $region39: #{yz_lstm_forward.2} parent=0 // pred_check_branch
    %2333 = sbr.rel (0) target = $region41
  $region40: #{yz_lstm_forward.2} parent=0 // pred_region
    _
  $region41: #{yz_lstm_forward.2} parent=0 // pred_fallthru
    _

</llo_original>
